<compile_context>
chip_gen: v5e
topology: v5e:2x2
jax: 0.10.0
libtpu: 0.0.40
codegen_flags: <defaults>
</compile_context>

<pallas_src>
import functools

import jax
import jax.numpy as jnp
from jax.experimental import pallas as pl
from jax.experimental.pallas import tpu as pltpu


def _round_up(n, m):
    return ((n + m - 1) // m) * m


def _pad_last(a, target):
    pad = target - a.shape[-1]
    if pad == 0:
        return a
    return jnp.pad(a, [(0, 0)] * (a.ndim - 1) + [(0, pad)])


def _vmem_capacity_bytes():
    """Physical VMEM of the local TPU; conservative 64 MiB (v7x) fallback."""
    try:
        info = pltpu.get_tpu_info()
        cap = int(getattr(info, "vmem_capacity_bytes", 0))
        if cap > 0:
            return cap
    except Exception:
        pass
    return 64 * 2 ** 20


def _fast_sigmoid(x):
    # One EUP op (tanh) + cheap VPU ops instead of exp + divide.
    return 0.5 * jnp.tanh(0.5 * x) + 0.5


def lstm_recurrence_kernel(gx_ref, u_ref, b_ref, v_ref,
                           hseq_ref, hfin_ref, cfin_ref,
                           h_sc, c_sc, *,
                           hidden, t_block, seq_len, mask_tail, matmul_dtype):
    """One grid step == `t_block` LSTM time steps for one batch tile.

    gx_ref  : (BB, T, 4H)  x@W for this (batch tile, time block), matmul_dtype
    u_ref   : (H, 4H)      recurrent weights (resident, matmul_dtype)
    b_ref   : (1, 4H)      f32 bias (added in-kernel so gx can stay bf16)
    v_ref   : (8, H)       f32 peepholes; rows [V_i, V_f, V_o, 0, ...]
    hseq_ref: (BB, T, H)   per-step hidden outputs
    hfin/cfin: (BB, H)     final hidden / cell state (written on last block)
    h_sc/c_sc: (BB, H) f32 VMEM scratch carrying the recurrence
    """
    t_idx = pl.program_id(1)
    H = hidden
    BB = h_sc.shape[0]

    @pl.when(t_idx == 0)
    def _():
        h_sc[...] = jnp.zeros_like(h_sc)
        c_sc[...] = jnp.zeros_like(c_sc)

    # Grid-invariant loads and sublane broadcasts hoisted out of the loop.
    u = u_ref[...]
    bias = jnp.broadcast_to(b_ref[...], (BB, 4 * H))
    vi = jnp.broadcast_to(v_ref[0:1, :], (BB, H))
    vf = jnp.broadcast_to(v_ref[1:2, :], (BB, H))
    vo = jnp.broadcast_to(v_ref[2:3, :], (BB, H))

    h = h_sc[...]
    c = c_sc[...]

    t_base = t_idx * t_block
    # Bounded static unroll (t_block <= 32, default 16): amortizes per-step
    # overhead without the unbounded t_block == S unroll of the old version.
    # TODO(synk): switch to a rolled lax.fori_loop over a time-major gates_x
    # block if vreg spills show up for t_block=32 at very large hidden sizes.
    for tt in range(t_block):
        gx = gx_ref[:, tt, :].astype(jnp.float32)
        gates = gx + bias + jnp.dot(h.astype(matmul_dtype), u,
                                    preferred_element_type=jnp.float32)

        # Gate order [i | f | g | o]; H is a multiple of 128 -> lane-aligned.
        i_g = gates[:, 0 * H:1 * H]
        f_g = gates[:, 1 * H:2 * H]
        g_g = gates[:, 2 * H:3 * H]
        o_g = gates[:, 3 * H:4 * H]

        i_t = _fast_sigmoid(i_g + vi * c)        # peephole on *old* cell
        f_t = _fast_sigmoid(f_g + vf * c)
        g_t = jnp.tanh(g_g)
        c_new = f_t * c + i_t * g_t
        o_t = _fast_sigmoid(o_g + vo * c_new)    # peephole on *new* cell
        h_new = o_t * jnp.tanh(c_new)

        if mask_tail:
            valid = (t_base + tt) < seq_len      # freeze carries on padding
            h = jnp.where(valid, h_new, h)
            c = jnp.where(valid, c_new, c)
        else:
            h = h_new
            c = c_new

        hseq_ref[:, tt, :] = h.astype(hseq_ref.dtype)

    h_sc[...] = h
    c_sc[...] = c

    @pl.when(t_idx == pl.num_programs(1) - 1)
    def _():
        hfin_ref[...] = h.astype(hfin_ref.dtype)
        cfin_ref[...] = c.astype(cfin_ref.dtype)


def lstm_pallas(x, W, b, U, V_i, V_f, V_o, *,
                batch_block=None, t_block=None, matmul_dtype=jnp.bfloat16):
    """x: (batch, seq, input_size). Returns (hidden_sequence, (h_T, c_T)).

    Weight layout (transposed vs torch.nn.Linear):
      W: (input_size, 4*hidden), b: (4*hidden,), U: (hidden, 4*hidden)
    Gate order along the 4H axis is [i | f | g | o] (== torch .chunk(4, 1)).
    """
    B, S, IN = x.shape
    H = U.shape[0]

    Hp = _round_up(H, 128)                 # lane-dense hidden/gate dimension
    out_dtype = x.dtype
    out_bytes = jnp.dtype(out_dtype).itemsize
    mm_bytes = jnp.dtype(matmul_dtype).itemsize

    # ---- time block: multiple of 8, <= 32; S padded up to a multiple ------
    if t_block is None:
        t_block = 8 if S <= 8 else 16
    t_block = max(8, min(32, _round_up(t_block, 8)))
    S_pad = _round_up(S, t_block)

    # ---- VMEM-aware batch-tile selection -----------------------------------
    vmem_cap = _vmem_capacity_bytes()
    budget = int(vmem_cap * 0.70)          # leave compiler headroom
    fixed = (2 * Hp * 4 * Hp * mm_bytes    # resident U (counted double-buffered)
             + 2 * 8 * 4 * Hp * 4          # bias block (padded to 8 sublanes)
             + 2 * 8 * Hp * 4)             # packed peepholes
    per_row = (2 * t_block * 4 * Hp * mm_bytes   # gates_x tiles (dbl-buffered)
               + 2 * t_block * Hp * out_bytes    # hseq tiles
               + 2 * 2 * Hp * out_bytes          # h_T / c_T
               + 2 * Hp * 4)                     # h/c f32 carries
    max_rows = max(((budget - fixed) // per_row) // 8 * 8, 8)

    if batch_block is None:
        B8 = _round_up(B, 8)
        if B8 <= 8:
            target = 8
        else:
            # Prefer (at least) two batch tiles so v7x's two TensorCores each
            # get a shard of the "parallel" batch axis; cap tiles at 256 rows
            # (MXU M is saturated well before that).
            target = min(_round_up((B8 + 1) // 2, 8), 256)
        batch_block = min(target, max_rows)
    batch_block = max(8, _round_up(batch_block, 8))
    Bp = _round_up(B, batch_block)

    # ---- pad parameters so the hidden/gate lane dimension is dense ---------
    # Padded hidden units get zero weights/bias -> their c/h stay exactly 0
    # and (zero U rows) never influence the real units.
    Wp = _pad_last(W.reshape(IN, 4, H), Hp).reshape(IN, 4 * Hp)
    bp = _pad_last(b.reshape(4, H), Hp).reshape(1, 4 * Hp).astype(jnp.float32)
    Up = jnp.pad(U, ((0, Hp - H), (0, 0)))
    Up = _pad_last(Up.reshape(Hp, 4, H), Hp).reshape(Hp, 4 * Hp)
    vpack = jnp.zeros((8, Hp), jnp.float32)
    vpack = vpack.at[0, :H].set(V_i).at[1, :H].set(V_f).at[2, :H].set(V_o)
    xp = jnp.pad(x, ((0, Bp - B), (0, S_pad - S), (0, 0)))

    # ---- hoisted input projection: one large MXU-friendly matmul -----------
    # Stored in matmul_dtype (bf16 default): this is the dominant HBM stream
    # into the kernel. The f32 bias is added once inside the kernel instead.
    gates_x = jnp.einsum(
        'bsi,ig->bsg',
        xp.astype(matmul_dtype), Wp.astype(matmul_dtype),
        preferred_element_type=jnp.float32).astype(matmul_dtype)

    Um = Up.astype(matmul_dtype)

    grid = (Bp // batch_block, S_pad // t_block)

    kernel = functools.partial(
        lstm_recurrence_kernel, hidden=Hp, t_block=t_block, seq_len=S,
        mask_tail=(S_pad != S), matmul_dtype=matmul_dtype)

    vmem_est = fixed + batch_block * per_row
    vmem_limit = int(min(max(vmem_est * 3 // 2, 32 * 2 ** 20),
                         int(vmem_cap * 0.85)))

    hseq_p, hfin_p, cfin_p = pl.pallas_call(
        kernel,
        out_shape=(
            jax.ShapeDtypeStruct((Bp, S_pad, Hp), out_dtype),
            jax.ShapeDtypeStruct((Bp, Hp), out_dtype),
            jax.ShapeDtypeStruct((Bp, Hp), out_dtype),
        ),
        grid_spec=pltpu.PrefetchScalarGridSpec(
            num_scalar_prefetch=0,
            grid=grid,
            in_specs=[
                pl.BlockSpec((batch_block, t_block, 4 * Hp),
                             lambda bi, ti: (bi, ti, 0)),             # gates_x
                # TODO(synk): single-buffer U via pipeline_mode=pl.Buffered(1)
                # once verified on the target jax version; vmem_est currently
                # counts it double-buffered to stay conservative.
                pl.BlockSpec((Hp, 4 * Hp), lambda bi, ti: (0, 0)),    # U
                pl.BlockSpec((1, 4 * Hp), lambda bi, ti: (0, 0)),     # bias
                pl.BlockSpec((8, Hp), lambda bi, ti: (0, 0)),         # peepholes
            ],
            out_specs=(
                pl.BlockSpec((batch_block, t_block, Hp),
                             lambda bi, ti: (bi, ti, 0)),             # hidden seq
                pl.BlockSpec((batch_block, Hp), lambda bi, ti: (bi, 0)),  # h_T
                pl.BlockSpec((batch_block, Hp), lambda bi, ti: (bi, 0)),  # c_T
            ),
            scratch_shapes=[
                pltpu.VMEM((batch_block, Hp), jnp.float32),   # h carry
                pltpu.VMEM((batch_block, Hp), jnp.float32),   # c carry
            ],
        ),
        compiler_params=pltpu.CompilerParams(
            # batch tiles are independent (v7x megacore); time is sequential.
            dimension_semantics=("parallel", "arbitrary"),
            vmem_limit_bytes=vmem_limit,
        ),
    )(gates_x, Um, bp, vpack)

    # Strip the padding (outputs are already batch-major, no transposes).
    hidden_sequence = hseq_p[:B, :S, :H]
    h_T = hfin_p[:B, :H]
    c_T = cfin_p[:B, :H]
    return hidden_sequence, (h_T, c_T)


def lstm_ref(x, W, b, U, V_i, V_f, V_o):
    """Pure-JAX float32 reference mirroring the PyTorch forward exactly."""
    B, S, _ = x.shape
    H = U.shape[0]
    h = jnp.zeros((B, H), x.dtype)
    c = jnp.zeros((B, H), x.dtype)
    hs = []
    for t in range(S):
        gates = x[:, t, :] @ W + b + h @ U
        i_g, f_g, g_g, o_g = jnp.split(gates, 4, axis=1)
        i_t = jax.nn.sigmoid(i_g + V_i * c)
        f_t = jax.nn.sigmoid(f_g + V_f * c)
        g_t = jnp.tanh(g_g)
        c = f_t * c + i_t * g_t
        o_t = jax.nn.sigmoid(o_g + V_o * c)
        h = o_t * jnp.tanh(c)
        hs.append(h)
    return jnp.stack(hs, axis=1), (h, c)


if __name__ == "__main__":
    batch, seq, input_size, hidden_size = 2, 8, 16, 32

    key = jax.random.PRNGKey(0)
    kx, kw, kb, ku, ki, kf, ko, kx2 = jax.random.split(key, 8)

    x = jax.random.normal(kx, (batch, seq, input_size), jnp.float32)

    # Deterministic parameter init (shapes follow the module __init__).
    scale_w = 1.0 / jnp.sqrt(input_size)
    scale_u = 1.0 / jnp.sqrt(hidden_size)
    W = jax.random.uniform(kw, (input_size, 4 * hidden_size), jnp.float32,
                           -scale_w, scale_w)
    b = jax.random.uniform(kb, (4 * hidden_size,), jnp.float32,
                           -scale_w, scale_w)
    U = jax.random.uniform(ku, (hidden_size, 4 * hidden_size), jnp.float32,
                           -scale_u, scale_u)
    # The module inits peephole weights to 0; use small nonzero deterministic
    # values so the peephole path is actually exercised.
    V_i = 0.1 * jax.random.normal(ki, (hidden_size,), jnp.float32)
    V_f = 0.1 * jax.random.normal(kf, (hidden_size,), jnp.float32)
    V_o = 0.1 * jax.random.normal(ko, (hidden_size,), jnp.float32)

    hseq_r, (h_r, c_r) = lstm_ref(x, W, b, U, V_i, V_f, V_o)

    # 1) float32 matmul path: tight match against the reference.
    f32_fn = jax.jit(functools.partial(lstm_pallas, matmul_dtype=jnp.float32))
    hseq, (h_T, c_T) = f32_fn(x, W, b, U, V_i, V_f, V_o)
    jax.block_until_ready((hseq, h_T, c_T))
    assert hseq.shape == (batch, seq, hidden_size)
    assert h_T.shape == (batch, hidden_size)
    assert c_T.shape == (batch, hidden_size)
    assert jnp.allclose(hseq, hseq_r, atol=1e-4, rtol=1e-4)
    assert jnp.allclose(h_T, h_r, atol=1e-4, rtol=1e-4)
    assert jnp.allclose(c_T, c_r, atol=1e-4, rtol=1e-4)

    # 2) default fast path: bf16 MXU operands + bf16 gates_x stream
    #    (gate math / carries stay f32); tolerance reflects bf16 rounding.
    bf16_fn = jax.jit(functools.partial(lstm_pallas, matmul_dtype=jnp.bfloat16))
    hseq_b, (h_b, c_b) = bf16_fn(x, W, b, U, V_i, V_f, V_o)
    jax.block_until_ready((hseq_b, h_b, c_b))
    assert jnp.allclose(hseq_b, hseq_r, atol=5e-2, rtol=5e-2)
    assert jnp.allclose(h_b, h_r, atol=5e-2, rtol=5e-2)
    assert jnp.allclose(c_b, c_r, atol=5e-2, rtol=5e-2)

    # 3) ragged shapes (batch=3, seq=5): exercises batch/seq padding and the
    #    frozen-carry tail masking.
    x2 = jax.random.normal(kx2, (3, 5, input_size), jnp.float32)
    hseq2_r, (h2_r, c2_r) = lstm_ref(x2, W, b, U, V_i, V_f, V_o)
    hseq2, (h2, c2) = f32_fn(x2, W, b, U, V_i, V_f, V_o)
    jax.block_until_ready((hseq2, h2, c2))
    assert hseq2.shape == (3, 5, hidden_size)
    assert jnp.allclose(hseq2, hseq2_r, atol=1e-4, rtol=1e-4)
    assert jnp.allclose(h2, h2_r, atol=1e-4, rtol=1e-4)
    assert jnp.allclose(c2, c2_r, atol=1e-4, rtol=1e-4)

    print("KERNEL_OK")
</pallas_src>

<mosaic_0001>
module attributes {stable_mosaic.version = 11 : i64} {
  func.func @lstm_recurrence_kernel(%arg0: i32, %arg1: i32, %arg2: memref<8x8x512xf32, #tpu.memory_space<vmem>>, %arg3: memref<128x512xf32, #tpu.memory_space<vmem>>, %arg4: memref<1x512xf32, #tpu.memory_space<vmem>>, %arg5: memref<8x128xf32, #tpu.memory_space<vmem>>, %arg6: memref<8x8x128xf32, #tpu.memory_space<vmem>>, %arg7: memref<8x128xf32, #tpu.memory_space<vmem>>, %arg8: memref<8x128xf32, #tpu.memory_space<vmem>>, %arg9: memref<8x128xf32, #tpu.memory_space<vmem>>, %arg10: memref<8x128xf32, #tpu.memory_space<vmem>>) attributes {dimension_semantics = [#tpu.dimension_semantics<parallel>, #tpu.dimension_semantics<arbitrary>], iteration_bounds = array<i64: 1, 1>, scalar_prefetch = 0 : i64, scratch_operands = 2 : i64, tpu.core_type = #tpu.core_type<tc>, window_params = [{transform_indices = @transform_0, window_bounds = array<i64: 8, 8, 512>}, {pipeline_mode = #tpu.pipeline_mode<synchronous>, transform_indices = @transform_1, window_bounds = array<i64: 128, 512>}, {pipeline_mode = #tpu.pipeline_mode<synchronous>, transform_indices = @transform_2, window_bounds = array<i64: 1, 512>}, {pipeline_mode = #tpu.pipeline_mode<synchronous>, transform_indices = @transform_3, window_bounds = array<i64: 8, 128>}, {transform_indices = @transform_4, window_bounds = array<i64: 8, 8, 128>}, {transform_indices = @transform_5, window_bounds = array<i64: 8, 128>}, {transform_indices = @transform_6, window_bounds = array<i64: 8, 128>}]} {
    %c0_i32 = arith.constant 0 : i32
    %0 = arith.cmpi eq, %arg1, %c0_i32 : i32
    %1 = arith.extui %0 : i1 to i32
    %c0_i32_0 = arith.constant 0 : i32
    %2 = arith.cmpi ne, %1, %c0_i32_0 : i32
    scf.if %2 {
      %cst_140 = arith.constant 0.000000e+00 : f32
      %383 = vector.broadcast %cst_140 : f32 to vector<8x128xf32>
      %c0_141 = arith.constant 0 : index
      %c0_142 = arith.constant 0 : index
      %384 = vector.load %arg9[%c0_141, %c0_142] : memref<8x128xf32, #tpu.memory_space<vmem>>, vector<8x128xf32>
      tpu.vector_store %arg9[%c0_141, %c0_142], %383 {strides = array<i32>} : memref<8x128xf32, #tpu.memory_space<vmem>>, vector<8x128xf32>,
      %cst_143 = arith.constant 0.000000e+00 : f32
      %385 = vector.broadcast %cst_143 : f32 to vector<8x128xf32>
      %c0_144 = arith.constant 0 : index
      %c0_145 = arith.constant 0 : index
      %386 = vector.load %arg10[%c0_144, %c0_145] : memref<8x128xf32, #tpu.memory_space<vmem>>, vector<8x128xf32>
      tpu.vector_store %arg10[%c0_144, %c0_145], %385 {strides = array<i32>} : memref<8x128xf32, #tpu.memory_space<vmem>>, vector<8x128xf32>,
    } else {
    }
    %c0 = arith.constant 0 : index
    %c0_1 = arith.constant 0 : index
    %3 = vector.load %arg3[%c0, %c0_1] : memref<128x512xf32, #tpu.memory_space<vmem>>, vector<128x512xf32>
    %c0_2 = arith.constant 0 : index
    %c0_3 = arith.constant 0 : index
    %4 = vector.load %arg4[%c0_2, %c0_3] : memref<1x512xf32, #tpu.memory_space<vmem>>, vector<1x512xf32>
    %5 = vector.shape_cast %4 : vector<1x512xf32> to vector<1x512xf32>
    %6 = vector.broadcast %5 : vector<1x512xf32> to vector<8x512xf32>
    %c0_4 = arith.constant 0 : index
    %c0_5 = arith.constant 0 : index
    %7 = vector.load %arg5[%c0_4, %c0_5] : memref<8x128xf32, #tpu.memory_space<vmem>>, vector<1x128xf32>
    %8 = vector.shape_cast %7 : vector<1x128xf32> to vector<1x128xf32>
    %9 = vector.broadcast %8 : vector<1x128xf32> to vector<8x128xf32>
    %c1 = arith.constant 1 : index
    %c0_6 = arith.constant 0 : index
    %10 = vector.load %arg5[%c1, %c0_6] : memref<8x128xf32, #tpu.memory_space<vmem>>, vector<1x128xf32>
    %11 = vector.shape_cast %10 : vector<1x128xf32> to vector<1x128xf32>
    %12 = vector.broadcast %11 : vector<1x128xf32> to vector<8x128xf32>
    %c2 = arith.constant 2 : index
    %c0_7 = arith.constant 0 : index
    %13 = vector.load %arg5[%c2, %c0_7] : memref<8x128xf32, #tpu.memory_space<vmem>>, vector<1x128xf32>
    %14 = vector.shape_cast %13 : vector<1x128xf32> to vector<1x128xf32>
    %15 = vector.broadcast %14 : vector<1x128xf32> to vector<8x128xf32>
    %c0_8 = arith.constant 0 : index
    %c0_9 = arith.constant 0 : index
    %16 = vector.load %arg9[%c0_8, %c0_9] : memref<8x128xf32, #tpu.memory_space<vmem>>, vector<8x128xf32>
    %c0_10 = arith.constant 0 : index
    %c0_11 = arith.constant 0 : index
    %17 = vector.load %arg10[%c0_10, %c0_11] : memref<8x128xf32, #tpu.memory_space<vmem>>, vector<8x128xf32>
    %c0_12 = arith.constant 0 : index
    %c0_13 = arith.constant 0 : index
    %c0_14 = arith.constant 0 : index
    %18 = vector.load %arg2[%c0_12, %c0_13, %c0_14] : memref<8x8x512xf32, #tpu.memory_space<vmem>>, vector<8x1x512xf32>
    %19 = vector.shape_cast %18 : vector<8x1x512xf32> to vector<8x512xf32>
    %20 = arith.addf %19, %6 : vector<8x512xf32>
    %cst = arith.constant dense<0.000000e+00> : vector<8x512xf32>
    %21 = tpu.matmul %16, %3, %cst {dimension_numbers = #tpu.dot_dimension_numbers<[1], [0], [0], [1], [0, 0, 1, 1], [], []>} : vector<8x128xf32>, vector<128x512xf32>, vector<8x512xf32> -> vector<8x512xf32>
    %22 = arith.addf %20, %21 : vector<8x512xf32>
    %23 = vector.extract_strided_slice %22 {offsets = [0, 0], sizes = [8, 128], strides = [1, 1]} : vector<8x512xf32> to vector<8x128xf32>
    %24 = vector.extract_strided_slice %22 {offsets = [0, 128], sizes = [8, 128], strides = [1, 1]} : vector<8x512xf32> to vector<8x128xf32>
    %25 = vector.extract_strided_slice %22 {offsets = [0, 256], sizes = [8, 128], strides = [1, 1]} : vector<8x512xf32> to vector<8x128xf32>
    %26 = vector.extract_strided_slice %22 {offsets = [0, 384], sizes = [8, 128], strides = [1, 1]} : vector<8x512xf32> to vector<8x128xf32>
    %27 = arith.mulf %9, %17 : vector<8x128xf32>
    %28 = arith.addf %23, %27 : vector<8x128xf32>
    %cst_15 = arith.constant 5.000000e-01 : f32
    %29 = vector.broadcast %cst_15 : f32 to vector<8x128xf32>
    %30 = arith.mulf %29, %28 : vector<8x128xf32>
    %31 = math.tanh %30 : vector<8x128xf32>
    %cst_16 = arith.constant 5.000000e-01 : f32
    %32 = vector.broadcast %cst_16 : f32 to vector<8x128xf32>
    %33 = arith.mulf %32, %31 : vector<8x128xf32>
    %cst_17 = arith.constant 5.000000e-01 : f32
    %34 = vector.broadcast %cst_17 : f32 to vector<8x128xf32>
    %35 = arith.addf %33, %34 : vector<8x128xf32>
    %36 = arith.mulf %12, %17 : vector<8x128xf32>
    %37 = arith.addf %24, %36 : vector<8x128xf32>
    %cst_18 = arith.constant 5.000000e-01 : f32
    %38 = vector.broadcast %cst_18 : f32 to vector<8x128xf32>
    %39 = arith.mulf %38, %37 : vector<8x128xf32>
    %40 = math.tanh %39 : vector<8x128xf32>
    %cst_19 = arith.constant 5.000000e-01 : f32
    %41 = vector.broadcast %cst_19 : f32 to vector<8x128xf32>
    %42 = arith.mulf %41, %40 : vector<8x128xf32>
    %cst_20 = arith.constant 5.000000e-01 : f32
    %43 = vector.broadcast %cst_20 : f32 to vector<8x128xf32>
    %44 = arith.addf %42, %43 : vector<8x128xf32>
    %45 = math.tanh %25 : vector<8x128xf32>
    %46 = arith.mulf %44, %17 : vector<8x128xf32>
    %47 = arith.mulf %35, %45 : vector<8x128xf32>
    %48 = arith.addf %46, %47 : vector<8x128xf32>
    %49 = arith.mulf %15, %48 : vector<8x128xf32>
    %50 = arith.addf %26, %49 : vector<8x128xf32>
    %cst_21 = arith.constant 5.000000e-01 : f32
    %51 = vector.broadcast %cst_21 : f32 to vector<8x128xf32>
    %52 = arith.mulf %51, %50 : vector<8x128xf32>
    %53 = math.tanh %52 : vector<8x128xf32>
    %cst_22 = arith.constant 5.000000e-01 : f32
    %54 = vector.broadcast %cst_22 : f32 to vector<8x128xf32>
    %55 = arith.mulf %54, %53 : vector<8x128xf32>
    %cst_23 = arith.constant 5.000000e-01 : f32
    %56 = vector.broadcast %cst_23 : f32 to vector<8x128xf32>
    %57 = arith.addf %55, %56 : vector<8x128xf32>
    %58 = math.tanh %48 : vector<8x128xf32>
    %59 = arith.mulf %57, %58 : vector<8x128xf32>
    %c0_24 = arith.constant 0 : index
    %c0_25 = arith.constant 0 : index
    %c0_26 = arith.constant 0 : index
    %60 = vector.load %arg6[%c0_24, %c0_25, %c0_26] : memref<8x8x128xf32, #tpu.memory_space<vmem>>, vector<8x1x128xf32>
    %61 = vector.shape_cast %60 : vector<8x1x128xf32> to vector<8x128xf32>
    %62 = vector.shape_cast %59 : vector<8x128xf32> to vector<8x1x128xf32>
    tpu.vector_store %arg6[%c0_24, %c0_25, %c0_26], %62 {strides = array<i32>} : memref<8x8x128xf32, #tpu.memory_space<vmem>>, vector<8x1x128xf32>,
    %c0_27 = arith.constant 0 : index
    %c1_28 = arith.constant 1 : index
    %c0_29 = arith.constant 0 : index
    %63 = vector.load %arg2[%c0_27, %c1_28, %c0_29] : memref<8x8x512xf32, #tpu.memory_space<vmem>>, vector<8x1x512xf32>
    %64 = vector.shape_cast %63 : vector<8x1x512xf32> to vector<8x512xf32>
    %65 = arith.addf %64, %6 : vector<8x512xf32>
    %cst_30 = arith.constant dense<0.000000e+00> : vector<8x512xf32>
    %66 = tpu.matmul %59, %3, %cst_30 {dimension_numbers = #tpu.dot_dimension_numbers<[1], [0], [0], [1], [0, 0, 1, 1], [], []>} : vector<8x128xf32>, vector<128x512xf32>, vector<8x512xf32> -> vector<8x512xf32>
    %67 = arith.addf %65, %66 : vector<8x512xf32>
    %68 = vector.extract_strided_slice %67 {offsets = [0, 0], sizes = [8, 128], strides = [1, 1]} : vector<8x512xf32> to vector<8x128xf32>
    %69 = vector.extract_strided_slice %67 {offsets = [0, 128], sizes = [8, 128], strides = [1, 1]} : vector<8x512xf32> to vector<8x128xf32>
    %70 = vector.extract_strided_slice %67 {offsets = [0, 256], sizes = [8, 128], strides = [1, 1]} : vector<8x512xf32> to vector<8x128xf32>
    %71 = vector.extract_strided_slice %67 {offsets = [0, 384], sizes = [8, 128], strides = [1, 1]} : vector<8x512xf32> to vector<8x128xf32>
    %72 = arith.mulf %9, %48 : vector<8x128xf32>
    %73 = arith.addf %68, %72 : vector<8x128xf32>
    %cst_31 = arith.constant 5.000000e-01 : f32
    %74 = vector.broadcast %cst_31 : f32 to vector<8x128xf32>
    %75 = arith.mulf %74, %73 : vector<8x128xf32>
    %76 = math.tanh %75 : vector<8x128xf32>
    %cst_32 = arith.constant 5.000000e-01 : f32
    %77 = vector.broadcast %cst_32 : f32 to vector<8x128xf32>
    %78 = arith.mulf %77, %76 : vector<8x128xf32>
    %cst_33 = arith.constant 5.000000e-01 : f32
    %79 = vector.broadcast %cst_33 : f32 to vector<8x128xf32>
    %80 = arith.addf %78, %79 : vector<8x128xf32>
    %81 = arith.mulf %12, %48 : vector<8x128xf32>
    %82 = arith.addf %69, %81 : vector<8x128xf32>
    %cst_34 = arith.constant 5.000000e-01 : f32
    %83 = vector.broadcast %cst_34 : f32 to vector<8x128xf32>
    %84 = arith.mulf %83, %82 : vector<8x128xf32>
    %85 = math.tanh %84 : vector<8x128xf32>
    %cst_35 = arith.constant 5.000000e-01 : f32
    %86 = vector.broadcast %cst_35 : f32 to vector<8x128xf32>
    %87 = arith.mulf %86, %85 : vector<8x128xf32>
    %cst_36 = arith.constant 5.000000e-01 : f32
    %88 = vector.broadcast %cst_36 : f32 to vector<8x128xf32>
    %89 = arith.addf %87, %88 : vector<8x128xf32>
    %90 = math.tanh %70 : vector<8x128xf32>
    %91 = arith.mulf %89, %48 : vector<8x128xf32>
    %92 = arith.mulf %80, %90 : vector<8x128xf32>
    %93 = arith.addf %91, %92 : vector<8x128xf32>
    %94 = arith.mulf %15, %93 : vector<8x128xf32>
    %95 = arith.addf %71, %94 : vector<8x128xf32>
    %cst_37 = arith.constant 5.000000e-01 : f32
    %96 = vector.broadcast %cst_37 : f32 to vector<8x128xf32>
    %97 = arith.mulf %96, %95 : vector<8x128xf32>
    %98 = math.tanh %97 : vector<8x128xf32>
    %cst_38 = arith.constant 5.000000e-01 : f32
    %99 = vector.broadcast %cst_38 : f32 to vector<8x128xf32>
    %100 = arith.mulf %99, %98 : vector<8x128xf32>
    %cst_39 = arith.constant 5.000000e-01 : f32
    %101 = vector.broadcast %cst_39 : f32 to vector<8x128xf32>
    %102 = arith.addf %100, %101 : vector<8x128xf32>
    %103 = math.tanh %93 : vector<8x128xf32>
    %104 = arith.mulf %102, %103 : vector<8x128xf32>
    %c0_40 = arith.constant 0 : index
    %c1_41 = arith.constant 1 : index
    %c0_42 = arith.constant 0 : index
    %105 = vector.load %arg6[%c0_40, %c1_41, %c0_42] : memref<8x8x128xf32, #tpu.memory_space<vmem>>, vector<8x1x128xf32>
    %106 = vector.shape_cast %105 : vector<8x1x128xf32> to vector<8x128xf32>
    %107 = vector.shape_cast %104 : vector<8x128xf32> to vector<8x1x128xf32>
    tpu.vector_store %arg6[%c0_40, %c1_41, %c0_42], %107 {strides = array<i32>} : memref<8x8x128xf32, #tpu.memory_space<vmem>>, vector<8x1x128xf32>,
    %c0_43 = arith.constant 0 : index
    %c2_44 = arith.constant 2 : index
    %c0_45 = arith.constant 0 : index
    %108 = vector.load %arg2[%c0_43, %c2_44, %c0_45] : memref<8x8x512xf32, #tpu.memory_space<vmem>>, vector<8x1x512xf32>
    %109 = vector.shape_cast %108 : vector<8x1x512xf32> to vector<8x512xf32>
    %110 = arith.addf %109, %6 : vector<8x512xf32>
    %cst_46 = arith.constant dense<0.000000e+00> : vector<8x512xf32>
    %111 = tpu.matmul %104, %3, %cst_46 {dimension_numbers = #tpu.dot_dimension_numbers<[1], [0], [0], [1], [0, 0, 1, 1], [], []>} : vector<8x128xf32>, vector<128x512xf32>, vector<8x512xf32> -> vector<8x512xf32>
    %112 = arith.addf %110, %111 : vector<8x512xf32>
    %113 = vector.extract_strided_slice %112 {offsets = [0, 0], sizes = [8, 128], strides = [1, 1]} : vector<8x512xf32> to vector<8x128xf32>
    %114 = vector.extract_strided_slice %112 {offsets = [0, 128], sizes = [8, 128], strides = [1, 1]} : vector<8x512xf32> to vector<8x128xf32>
    %115 = vector.extract_strided_slice %112 {offsets = [0, 256], sizes = [8, 128], strides = [1, 1]} : vector<8x512xf32> to vector<8x128xf32>
    %116 = vector.extract_strided_slice %112 {offsets = [0, 384], sizes = [8, 128], strides = [1, 1]} : vector<8x512xf32> to vector<8x128xf32>
    %117 = arith.mulf %9, %93 : vector<8x128xf32>
    %118 = arith.addf %113, %117 : vector<8x128xf32>
    %cst_47 = arith.constant 5.000000e-01 : f32
    %119 = vector.broadcast %cst_47 : f32 to vector<8x128xf32>
    %120 = arith.mulf %119, %118 : vector<8x128xf32>
    %121 = math.tanh %120 : vector<8x128xf32>
    %cst_48 = arith.constant 5.000000e-01 : f32
    %122 = vector.broadcast %cst_48 : f32 to vector<8x128xf32>
    %123 = arith.mulf %122, %121 : vector<8x128xf32>
    %cst_49 = arith.constant 5.000000e-01 : f32
    %124 = vector.broadcast %cst_49 : f32 to vector<8x128xf32>
    %125 = arith.addf %123, %124 : vector<8x128xf32>
    %126 = arith.mulf %12, %93 : vector<8x128xf32>
    %127 = arith.addf %114, %126 : vector<8x128xf32>
    %cst_50 = arith.constant 5.000000e-01 : f32
    %128 = vector.broadcast %cst_50 : f32 to vector<8x128xf32>
    %129 = arith.mulf %128, %127 : vector<8x128xf32>
    %130 = math.tanh %129 : vector<8x128xf32>
    %cst_51 = arith.constant 5.000000e-01 : f32
    %131 = vector.broadcast %cst_51 : f32 to vector<8x128xf32>
    %132 = arith.mulf %131, %130 : vector<8x128xf32>
    %cst_52 = arith.constant 5.000000e-01 : f32
    %133 = vector.broadcast %cst_52 : f32 to vector<8x128xf32>
    %134 = arith.addf %132, %133 : vector<8x128xf32>
    %135 = math.tanh %115 : vector<8x128xf32>
    %136 = arith.mulf %134, %93 : vector<8x128xf32>
    %137 = arith.mulf %125, %135 : vector<8x128xf32>
    %138 = arith.addf %136, %137 : vector<8x128xf32>
    %139 = arith.mulf %15, %138 : vector<8x128xf32>
    %140 = arith.addf %116, %139 : vector<8x128xf32>
    %cst_53 = arith.constant 5.000000e-01 : f32
    %141 = vector.broadcast %cst_53 : f32 to vector<8x128xf32>
    %142 = arith.mulf %141, %140 : vector<8x128xf32>
    %143 = math.tanh %142 : vector<8x128xf32>
    %cst_54 = arith.constant 5.000000e-01 : f32
    %144 = vector.broadcast %cst_54 : f32 to vector<8x128xf32>
    %145 = arith.mulf %144, %143 : vector<8x128xf32>
    %cst_55 = arith.constant 5.000000e-01 : f32
    %146 = vector.broadcast %cst_55 : f32 to vector<8x128xf32>
    %147 = arith.addf %145, %146 : vector<8x128xf32>
    %148 = math.tanh %138 : vector<8x128xf32>
    %149 = arith.mulf %147, %148 : vector<8x128xf32>
    %c0_56 = arith.constant 0 : index
    %c2_57 = arith.constant 2 : index
    %c0_58 = arith.constant 0 : index
    %150 = vector.load %arg6[%c0_56, %c2_57, %c0_58] : memref<8x8x128xf32, #tpu.memory_space<vmem>>, vector<8x1x128xf32>
    %151 = vector.shape_cast %150 : vector<8x1x128xf32> to vector<8x128xf32>
    %152 = vector.shape_cast %149 : vector<8x128xf32> to vector<8x1x128xf32>
    tpu.vector_store %arg6[%c0_56, %c2_57, %c0_58], %152 {strides = array<i32>} : memref<8x8x128xf32, #tpu.memory_space<vmem>>, vector<8x1x128xf32>,
    %c0_59 = arith.constant 0 : index
    %c3 = arith.constant 3 : index
    %c0_60 = arith.constant 0 : index
    %153 = vector.load %arg2[%c0_59, %c3, %c0_60] : memref<8x8x512xf32, #tpu.memory_space<vmem>>, vector<8x1x512xf32>
    %154 = vector.shape_cast %153 : vector<8x1x512xf32> to vector<8x512xf32>
    %155 = arith.addf %154, %6 : vector<8x512xf32>
    %cst_61 = arith.constant dense<0.000000e+00> : vector<8x512xf32>
    %156 = tpu.matmul %149, %3, %cst_61 {dimension_numbers = #tpu.dot_dimension_numbers<[1], [0], [0], [1], [0, 0, 1, 1], [], []>} : vector<8x128xf32>, vector<128x512xf32>, vector<8x512xf32> -> vector<8x512xf32>
    %157 = arith.addf %155, %156 : vector<8x512xf32>
    %158 = vector.extract_strided_slice %157 {offsets = [0, 0], sizes = [8, 128], strides = [1, 1]} : vector<8x512xf32> to vector<8x128xf32>
    %159 = vector.extract_strided_slice %157 {offsets = [0, 128], sizes = [8, 128], strides = [1, 1]} : vector<8x512xf32> to vector<8x128xf32>
    %160 = vector.extract_strided_slice %157 {offsets = [0, 256], sizes = [8, 128], strides = [1, 1]} : vector<8x512xf32> to vector<8x128xf32>
    %161 = vector.extract_strided_slice %157 {offsets = [0, 384], sizes = [8, 128], strides = [1, 1]} : vector<8x512xf32> to vector<8x128xf32>
    %162 = arith.mulf %9, %138 : vector<8x128xf32>
    %163 = arith.addf %158, %162 : vector<8x128xf32>
    %cst_62 = arith.constant 5.000000e-01 : f32
    %164 = vector.broadcast %cst_62 : f32 to vector<8x128xf32>
    %165 = arith.mulf %164, %163 : vector<8x128xf32>
    %166 = math.tanh %165 : vector<8x128xf32>
    %cst_63 = arith.constant 5.000000e-01 : f32
    %167 = vector.broadcast %cst_63 : f32 to vector<8x128xf32>
    %168 = arith.mulf %167, %166 : vector<8x128xf32>
    %cst_64 = arith.constant 5.000000e-01 : f32
    %169 = vector.broadcast %cst_64 : f32 to vector<8x128xf32>
    %170 = arith.addf %168, %169 : vector<8x128xf32>
    %171 = arith.mulf %12, %138 : vector<8x128xf32>
    %172 = arith.addf %159, %171 : vector<8x128xf32>
    %cst_65 = arith.constant 5.000000e-01 : f32
    %173 = vector.broadcast %cst_65 : f32 to vector<8x128xf32>
    %174 = arith.mulf %173, %172 : vector<8x128xf32>
    %175 = math.tanh %174 : vector<8x128xf32>
    %cst_66 = arith.constant 5.000000e-01 : f32
    %176 = vector.broadcast %cst_66 : f32 to vector<8x128xf32>
    %177 = arith.mulf %176, %175 : vector<8x128xf32>
    %cst_67 = arith.constant 5.000000e-01 : f32
    %178 = vector.broadcast %cst_67 : f32 to vector<8x128xf32>
    %179 = arith.addf %177, %178 : vector<8x128xf32>
    %180 = math.tanh %160 : vector<8x128xf32>
    %181 = arith.mulf %179, %138 : vector<8x128xf32>
    %182 = arith.mulf %170, %180 : vector<8x128xf32>
    %183 = arith.addf %181, %182 : vector<8x128xf32>
    %184 = arith.mulf %15, %183 : vector<8x128xf32>
    %185 = arith.addf %161, %184 : vector<8x128xf32>
    %cst_68 = arith.constant 5.000000e-01 : f32
    %186 = vector.broadcast %cst_68 : f32 to vector<8x128xf32>
    %187 = arith.mulf %186, %185 : vector<8x128xf32>
    %188 = math.tanh %187 : vector<8x128xf32>
    %cst_69 = arith.constant 5.000000e-01 : f32
    %189 = vector.broadcast %cst_69 : f32 to vector<8x128xf32>
    %190 = arith.mulf %189, %188 : vector<8x128xf32>
    %cst_70 = arith.constant 5.000000e-01 : f32
    %191 = vector.broadcast %cst_70 : f32 to vector<8x128xf32>
    %192 = arith.addf %190, %191 : vector<8x128xf32>
    %193 = math.tanh %183 : vector<8x128xf32>
    %194 = arith.mulf %192, %193 : vector<8x128xf32>
    %c0_71 = arith.constant 0 : index
    %c3_72 = arith.constant 3 : index
    %c0_73 = arith.constant 0 : index
    %195 = vector.load %arg6[%c0_71, %c3_72, %c0_73] : memref<8x8x128xf32, #tpu.memory_space<vmem>>, vector<8x1x128xf32>
    %196 = vector.shape_cast %195 : vector<8x1x128xf32> to vector<8x128xf32>
    %197 = vector.shape_cast %194 : vector<8x128xf32> to vector<8x1x128xf32>
    tpu.vector_store %arg6[%c0_71, %c3_72, %c0_73], %197 {strides = array<i32>} : memref<8x8x128xf32, #tpu.memory_space<vmem>>, vector<8x1x128xf32>,
    %c0_74 = arith.constant 0 : index
    %c4 = arith.constant 4 : index
    %c0_75 = arith.constant 0 : index
    %198 = vector.load %arg2[%c0_74, %c4, %c0_75] : memref<8x8x512xf32, #tpu.memory_space<vmem>>, vector<8x1x512xf32>
    %199 = vector.shape_cast %198 : vector<8x1x512xf32> to vector<8x512xf32>
    %200 = arith.addf %199, %6 : vector<8x512xf32>
    %cst_76 = arith.constant dense<0.000000e+00> : vector<8x512xf32>
    %201 = tpu.matmul %194, %3, %cst_76 {dimension_numbers = #tpu.dot_dimension_numbers<[1], [0], [0], [1], [0, 0, 1, 1], [], []>} : vector<8x128xf32>, vector<128x512xf32>, vector<8x512xf32> -> vector<8x512xf32>
    %202 = arith.addf %200, %201 : vector<8x512xf32>
    %203 = vector.extract_strided_slice %202 {offsets = [0, 0], sizes = [8, 128], strides = [1, 1]} : vector<8x512xf32> to vector<8x128xf32>
    %204 = vector.extract_strided_slice %202 {offsets = [0, 128], sizes = [8, 128], strides = [1, 1]} : vector<8x512xf32> to vector<8x128xf32>
    %205 = vector.extract_strided_slice %202 {offsets = [0, 256], sizes = [8, 128], strides = [1, 1]} : vector<8x512xf32> to vector<8x128xf32>
    %206 = vector.extract_strided_slice %202 {offsets = [0, 384], sizes = [8, 128], strides = [1, 1]} : vector<8x512xf32> to vector<8x128xf32>
    %207 = arith.mulf %9, %183 : vector<8x128xf32>
    %208 = arith.addf %203, %207 : vector<8x128xf32>
    %cst_77 = arith.constant 5.000000e-01 : f32
    %209 = vector.broadcast %cst_77 : f32 to vector<8x128xf32>
    %210 = arith.mulf %209, %208 : vector<8x128xf32>
    %211 = math.tanh %210 : vector<8x128xf32>
    %cst_78 = arith.constant 5.000000e-01 : f32
    %212 = vector.broadcast %cst_78 : f32 to vector<8x128xf32>
    %213 = arith.mulf %212, %211 : vector<8x128xf32>
    %cst_79 = arith.constant 5.000000e-01 : f32
    %214 = vector.broadcast %cst_79 : f32 to vector<8x128xf32>
    %215 = arith.addf %213, %214 : vector<8x128xf32>
    %216 = arith.mulf %12, %183 : vector<8x128xf32>
    %217 = arith.addf %204, %216 : vector<8x128xf32>
    %cst_80 = arith.constant 5.000000e-01 : f32
    %218 = vector.broadcast %cst_80 : f32 to vector<8x128xf32>
    %219 = arith.mulf %218, %217 : vector<8x128xf32>
    %220 = math.tanh %219 : vector<8x128xf32>
    %cst_81 = arith.constant 5.000000e-01 : f32
    %221 = vector.broadcast %cst_81 : f32 to vector<8x128xf32>
    %222 = arith.mulf %221, %220 : vector<8x128xf32>
    %cst_82 = arith.constant 5.000000e-01 : f32
    %223 = vector.broadcast %cst_82 : f32 to vector<8x128xf32>
    %224 = arith.addf %222, %223 : vector<8x128xf32>
    %225 = math.tanh %205 : vector<8x128xf32>
    %226 = arith.mulf %224, %183 : vector<8x128xf32>
    %227 = arith.mulf %215, %225 : vector<8x128xf32>
    %228 = arith.addf %226, %227 : vector<8x128xf32>
    %229 = arith.mulf %15, %228 : vector<8x128xf32>
    %230 = arith.addf %206, %229 : vector<8x128xf32>
    %cst_83 = arith.constant 5.000000e-01 : f32
    %231 = vector.broadcast %cst_83 : f32 to vector<8x128xf32>
    %232 = arith.mulf %231, %230 : vector<8x128xf32>
    %233 = math.tanh %232 : vector<8x128xf32>
    %cst_84 = arith.constant 5.000000e-01 : f32
    %234 = vector.broadcast %cst_84 : f32 to vector<8x128xf32>
    %235 = arith.mulf %234, %233 : vector<8x128xf32>
    %cst_85 = arith.constant 5.000000e-01 : f32
    %236 = vector.broadcast %cst_85 : f32 to vector<8x128xf32>
    %237 = arith.addf %235, %236 : vector<8x128xf32>
    %238 = math.tanh %228 : vector<8x128xf32>
    %239 = arith.mulf %237, %238 : vector<8x128xf32>
    %c0_86 = arith.constant 0 : index
    %c4_87 = arith.constant 4 : index
    %c0_88 = arith.constant 0 : index
    %240 = vector.load %arg6[%c0_86, %c4_87, %c0_88] : memref<8x8x128xf32, #tpu.memory_space<vmem>>, vector<8x1x128xf32>
    %241 = vector.shape_cast %240 : vector<8x1x128xf32> to vector<8x128xf32>
    %242 = vector.shape_cast %239 : vector<8x128xf32> to vector<8x1x128xf32>
    tpu.vector_store %arg6[%c0_86, %c4_87, %c0_88], %242 {strides = array<i32>} : memref<8x8x128xf32, #tpu.memory_space<vmem>>, vector<8x1x128xf32>,
    %c0_89 = arith.constant 0 : index
    %c5 = arith.constant 5 : index
    %c0_90 = arith.constant 0 : index
    %243 = vector.load %arg2[%c0_89, %c5, %c0_90] : memref<8x8x512xf32, #tpu.memory_space<vmem>>, vector<8x1x512xf32>
    %244 = vector.shape_cast %243 : vector<8x1x512xf32> to vector<8x512xf32>
    %245 = arith.addf %244, %6 : vector<8x512xf32>
    %cst_91 = arith.constant dense<0.000000e+00> : vector<8x512xf32>
    %246 = tpu.matmul %239, %3, %cst_91 {dimension_numbers = #tpu.dot_dimension_numbers<[1], [0], [0], [1], [0, 0, 1, 1], [], []>} : vector<8x128xf32>, vector<128x512xf32>, vector<8x512xf32> -> vector<8x512xf32>
    %247 = arith.addf %245, %246 : vector<8x512xf32>
    %248 = vector.extract_strided_slice %247 {offsets = [0, 0], sizes = [8, 128], strides = [1, 1]} : vector<8x512xf32> to vector<8x128xf32>
    %249 = vector.extract_strided_slice %247 {offsets = [0, 128], sizes = [8, 128], strides = [1, 1]} : vector<8x512xf32> to vector<8x128xf32>
    %250 = vector.extract_strided_slice %247 {offsets = [0, 256], sizes = [8, 128], strides = [1, 1]} : vector<8x512xf32> to vector<8x128xf32>
    %251 = vector.extract_strided_slice %247 {offsets = [0, 384], sizes = [8, 128], strides = [1, 1]} : vector<8x512xf32> to vector<8x128xf32>
    %252 = arith.mulf %9, %228 : vector<8x128xf32>
    %253 = arith.addf %248, %252 : vector<8x128xf32>
    %cst_92 = arith.constant 5.000000e-01 : f32
    %254 = vector.broadcast %cst_92 : f32 to vector<8x128xf32>
    %255 = arith.mulf %254, %253 : vector<8x128xf32>
    %256 = math.tanh %255 : vector<8x128xf32>
    %cst_93 = arith.constant 5.000000e-01 : f32
    %257 = vector.broadcast %cst_93 : f32 to vector<8x128xf32>
    %258 = arith.mulf %257, %256 : vector<8x128xf32>
    %cst_94 = arith.constant 5.000000e-01 : f32
    %259 = vector.broadcast %cst_94 : f32 to vector<8x128xf32>
    %260 = arith.addf %258, %259 : vector<8x128xf32>
    %261 = arith.mulf %12, %228 : vector<8x128xf32>
    %262 = arith.addf %249, %261 : vector<8x128xf32>
    %cst_95 = arith.constant 5.000000e-01 : f32
    %263 = vector.broadcast %cst_95 : f32 to vector<8x128xf32>
    %264 = arith.mulf %263, %262 : vector<8x128xf32>
    %265 = math.tanh %264 : vector<8x128xf32>
    %cst_96 = arith.constant 5.000000e-01 : f32
    %266 = vector.broadcast %cst_96 : f32 to vector<8x128xf32>
    %267 = arith.mulf %266, %265 : vector<8x128xf32>
    %cst_97 = arith.constant 5.000000e-01 : f32
    %268 = vector.broadcast %cst_97 : f32 to vector<8x128xf32>
    %269 = arith.addf %267, %268 : vector<8x128xf32>
    %270 = math.tanh %250 : vector<8x128xf32>
    %271 = arith.mulf %269, %228 : vector<8x128xf32>
    %272 = arith.mulf %260, %270 : vector<8x128xf32>
    %273 = arith.addf %271, %272 : vector<8x128xf32>
    %274 = arith.mulf %15, %273 : vector<8x128xf32>
    %275 = arith.addf %251, %274 : vector<8x128xf32>
    %cst_98 = arith.constant 5.000000e-01 : f32
    %276 = vector.broadcast %cst_98 : f32 to vector<8x128xf32>
    %277 = arith.mulf %276, %275 : vector<8x128xf32>
    %278 = math.tanh %277 : vector<8x128xf32>
    %cst_99 = arith.constant 5.000000e-01 : f32
    %279 = vector.broadcast %cst_99 : f32 to vector<8x128xf32>
    %280 = arith.mulf %279, %278 : vector<8x128xf32>
    %cst_100 = arith.constant 5.000000e-01 : f32
    %281 = vector.broadcast %cst_100 : f32 to vector<8x128xf32>
    %282 = arith.addf %280, %281 : vector<8x128xf32>
    %283 = math.tanh %273 : vector<8x128xf32>
    %284 = arith.mulf %282, %283 : vector<8x128xf32>
    %c0_101 = arith.constant 0 : index
    %c5_102 = arith.constant 5 : index
    %c0_103 = arith.constant 0 : index
    %285 = vector.load %arg6[%c0_101, %c5_102, %c0_103] : memref<8x8x128xf32, #tpu.memory_space<vmem>>, vector<8x1x128xf32>
    %286 = vector.shape_cast %285 : vector<8x1x128xf32> to vector<8x128xf32>
    %287 = vector.shape_cast %284 : vector<8x128xf32> to vector<8x1x128xf32>
    tpu.vector_store %arg6[%c0_101, %c5_102, %c0_103], %287 {strides = array<i32>} : memref<8x8x128xf32, #tpu.memory_space<vmem>>, vector<8x1x128xf32>,
    %c0_104 = arith.constant 0 : index
    %c6 = arith.constant 6 : index
    %c0_105 = arith.constant 0 : index
    %288 = vector.load %arg2[%c0_104, %c6, %c0_105] : memref<8x8x512xf32, #tpu.memory_space<vmem>>, vector<8x1x512xf32>
    %289 = vector.shape_cast %288 : vector<8x1x512xf32> to vector<8x512xf32>
    %290 = arith.addf %289, %6 : vector<8x512xf32>
    %cst_106 = arith.constant dense<0.000000e+00> : vector<8x512xf32>
    %291 = tpu.matmul %284, %3, %cst_106 {dimension_numbers = #tpu.dot_dimension_numbers<[1], [0], [0], [1], [0, 0, 1, 1], [], []>} : vector<8x128xf32>, vector<128x512xf32>, vector<8x512xf32> -> vector<8x512xf32>
    %292 = arith.addf %290, %291 : vector<8x512xf32>
    %293 = vector.extract_strided_slice %292 {offsets = [0, 0], sizes = [8, 128], strides = [1, 1]} : vector<8x512xf32> to vector<8x128xf32>
    %294 = vector.extract_strided_slice %292 {offsets = [0, 128], sizes = [8, 128], strides = [1, 1]} : vector<8x512xf32> to vector<8x128xf32>
    %295 = vector.extract_strided_slice %292 {offsets = [0, 256], sizes = [8, 128], strides = [1, 1]} : vector<8x512xf32> to vector<8x128xf32>
    %296 = vector.extract_strided_slice %292 {offsets = [0, 384], sizes = [8, 128], strides = [1, 1]} : vector<8x512xf32> to vector<8x128xf32>
    %297 = arith.mulf %9, %273 : vector<8x128xf32>
    %298 = arith.addf %293, %297 : vector<8x128xf32>
    %cst_107 = arith.constant 5.000000e-01 : f32
    %299 = vector.broadcast %cst_107 : f32 to vector<8x128xf32>
    %300 = arith.mulf %299, %298 : vector<8x128xf32>
    %301 = math.tanh %300 : vector<8x128xf32>
    %cst_108 = arith.constant 5.000000e-01 : f32
    %302 = vector.broadcast %cst_108 : f32 to vector<8x128xf32>
    %303 = arith.mulf %302, %301 : vector<8x128xf32>
    %cst_109 = arith.constant 5.000000e-01 : f32
    %304 = vector.broadcast %cst_109 : f32 to vector<8x128xf32>
    %305 = arith.addf %303, %304 : vector<8x128xf32>
    %306 = arith.mulf %12, %273 : vector<8x128xf32>
    %307 = arith.addf %294, %306 : vector<8x128xf32>
    %cst_110 = arith.constant 5.000000e-01 : f32
    %308 = vector.broadcast %cst_110 : f32 to vector<8x128xf32>
    %309 = arith.mulf %308, %307 : vector<8x128xf32>
    %310 = math.tanh %309 : vector<8x128xf32>
    %cst_111 = arith.constant 5.000000e-01 : f32
    %311 = vector.broadcast %cst_111 : f32 to vector<8x128xf32>
    %312 = arith.mulf %311, %310 : vector<8x128xf32>
    %cst_112 = arith.constant 5.000000e-01 : f32
    %313 = vector.broadcast %cst_112 : f32 to vector<8x128xf32>
    %314 = arith.addf %312, %313 : vector<8x128xf32>
    %315 = math.tanh %295 : vector<8x128xf32>
    %316 = arith.mulf %314, %273 : vector<8x128xf32>
    %317 = arith.mulf %305, %315 : vector<8x128xf32>
    %318 = arith.addf %316, %317 : vector<8x128xf32>
    %319 = arith.mulf %15, %318 : vector<8x128xf32>
    %320 = arith.addf %296, %319 : vector<8x128xf32>
    %cst_113 = arith.constant 5.000000e-01 : f32
    %321 = vector.broadcast %cst_113 : f32 to vector<8x128xf32>
    %322 = arith.mulf %321, %320 : vector<8x128xf32>
    %323 = math.tanh %322 : vector<8x128xf32>
    %cst_114 = arith.constant 5.000000e-01 : f32
    %324 = vector.broadcast %cst_114 : f32 to vector<8x128xf32>
    %325 = arith.mulf %324, %323 : vector<8x128xf32>
    %cst_115 = arith.constant 5.000000e-01 : f32
    %326 = vector.broadcast %cst_115 : f32 to vector<8x128xf32>
    %327 = arith.addf %325, %326 : vector<8x128xf32>
    %328 = math.tanh %318 : vector<8x128xf32>
    %329 = arith.mulf %327, %328 : vector<8x128xf32>
    %c0_116 = arith.constant 0 : index
    %c6_117 = arith.constant 6 : index
    %c0_118 = arith.constant 0 : index
    %330 = vector.load %arg6[%c0_116, %c6_117, %c0_118] : memref<8x8x128xf32, #tpu.memory_space<vmem>>, vector<8x1x128xf32>
    %331 = vector.shape_cast %330 : vector<8x1x128xf32> to vector<8x128xf32>
    %332 = vector.shape_cast %329 : vector<8x128xf32> to vector<8x1x128xf32>
    tpu.vector_store %arg6[%c0_116, %c6_117, %c0_118], %332 {strides = array<i32>} : memref<8x8x128xf32, #tpu.memory_space<vmem>>, vector<8x1x128xf32>,
    %c0_119 = arith.constant 0 : index
    %c7 = arith.constant 7 : index
    %c0_120 = arith.constant 0 : index
    %333 = vector.load %arg2[%c0_119, %c7, %c0_120] : memref<8x8x512xf32, #tpu.memory_space<vmem>>, vector<8x1x512xf32>
    %334 = vector.shape_cast %333 : vector<8x1x512xf32> to vector<8x512xf32>
    %335 = arith.addf %334, %6 : vector<8x512xf32>
    %cst_121 = arith.constant dense<0.000000e+00> : vector<8x512xf32>
    %336 = tpu.matmul %329, %3, %cst_121 {dimension_numbers = #tpu.dot_dimension_numbers<[1], [0], [0], [1], [0, 0, 1, 1], [], []>} : vector<8x128xf32>, vector<128x512xf32>, vector<8x512xf32> -> vector<8x512xf32>
    %337 = arith.addf %335, %336 : vector<8x512xf32>
    %338 = vector.extract_strided_slice %337 {offsets = [0, 0], sizes = [8, 128], strides = [1, 1]} : vector<8x512xf32> to vector<8x128xf32>
    %339 = vector.extract_strided_slice %337 {offsets = [0, 128], sizes = [8, 128], strides = [1, 1]} : vector<8x512xf32> to vector<8x128xf32>
    %340 = vector.extract_strided_slice %337 {offsets = [0, 256], sizes = [8, 128], strides = [1, 1]} : vector<8x512xf32> to vector<8x128xf32>
    %341 = vector.extract_strided_slice %337 {offsets = [0, 384], sizes = [8, 128], strides = [1, 1]} : vector<8x512xf32> to vector<8x128xf32>
    %342 = arith.mulf %9, %318 : vector<8x128xf32>
    %343 = arith.addf %338, %342 : vector<8x128xf32>
    %cst_122 = arith.constant 5.000000e-01 : f32
    %344 = vector.broadcast %cst_122 : f32 to vector<8x128xf32>
    %345 = arith.mulf %344, %343 : vector<8x128xf32>
    %346 = math.tanh %345 : vector<8x128xf32>
    %cst_123 = arith.constant 5.000000e-01 : f32
    %347 = vector.broadcast %cst_123 : f32 to vector<8x128xf32>
    %348 = arith.mulf %347, %346 : vector<8x128xf32>
    %cst_124 = arith.constant 5.000000e-01 : f32
    %349 = vector.broadcast %cst_124 : f32 to vector<8x128xf32>
    %350 = arith.addf %348, %349 : vector<8x128xf32>
    %351 = arith.mulf %12, %318 : vector<8x128xf32>
    %352 = arith.addf %339, %351 : vector<8x128xf32>
    %cst_125 = arith.constant 5.000000e-01 : f32
    %353 = vector.broadcast %cst_125 : f32 to vector<8x128xf32>
    %354 = arith.mulf %353, %352 : vector<8x128xf32>
    %355 = math.tanh %354 : vector<8x128xf32>
    %cst_126 = arith.constant 5.000000e-01 : f32
    %356 = vector.broadcast %cst_126 : f32 to vector<8x128xf32>
    %357 = arith.mulf %356, %355 : vector<8x128xf32>
    %cst_127 = arith.constant 5.000000e-01 : f32
    %358 = vector.broadcast %cst_127 : f32 to vector<8x128xf32>
    %359 = arith.addf %357, %358 : vector<8x128xf32>
    %360 = math.tanh %340 : vector<8x128xf32>
    %361 = arith.mulf %359, %318 : vector<8x128xf32>
    %362 = arith.mulf %350, %360 : vector<8x128xf32>
    %363 = arith.addf %361, %362 : vector<8x128xf32>
    %364 = arith.mulf %15, %363 : vector<8x128xf32>
    %365 = arith.addf %341, %364 : vector<8x128xf32>
    %cst_128 = arith.constant 5.000000e-01 : f32
    %366 = vector.broadcast %cst_128 : f32 to vector<8x128xf32>
    %367 = arith.mulf %366, %365 : vector<8x128xf32>
    %368 = math.tanh %367 : vector<8x128xf32>
    %cst_129 = arith.constant 5.000000e-01 : f32
    %369 = vector.broadcast %cst_129 : f32 to vector<8x128xf32>
    %370 = arith.mulf %369, %368 : vector<8x128xf32>
    %cst_130 = arith.constant 5.000000e-01 : f32
    %371 = vector.broadcast %cst_130 : f32 to vector<8x128xf32>
    %372 = arith.addf %370, %371 : vector<8x128xf32>
    %373 = math.tanh %363 : vector<8x128xf32>
    %374 = arith.mulf %372, %373 : vector<8x128xf32>
    %c0_131 = arith.constant 0 : index
    %c7_132 = arith.constant 7 : index
    %c0_133 = arith.constant 0 : index
    %375 = vector.load %arg6[%c0_131, %c7_132, %c0_133] : memref<8x8x128xf32, #tpu.memory_space<vmem>>, vector<8x1x128xf32>
    %376 = vector.shape_cast %375 : vector<8x1x128xf32> to vector<8x128xf32>
    %377 = vector.shape_cast %374 : vector<8x128xf32> to vector<8x1x128xf32>
    tpu.vector_store %arg6[%c0_131, %c7_132, %c0_133], %377 {strides = array<i32>} : memref<8x8x128xf32, #tpu.memory_space<vmem>>, vector<8x1x128xf32>,
    %c0_134 = arith.constant 0 : index
    %c0_135 = arith.constant 0 : index
    %378 = vector.load %arg9[%c0_134, %c0_135] : memref<8x128xf32, #tpu.memory_space<vmem>>, vector<8x128xf32>
    tpu.vector_store %arg9[%c0_134, %c0_135], %374 {strides = array<i32>} : memref<8x128xf32, #tpu.memory_space<vmem>>, vector<8x128xf32>,
    %c0_136 = arith.constant 0 : index
    %c0_137 = arith.constant 0 : index
    %379 = vector.load %arg10[%c0_136, %c0_137] : memref<8x128xf32, #tpu.memory_space<vmem>>, vector<8x128xf32>
    tpu.vector_store %arg10[%c0_136, %c0_137], %363 {strides = array<i32>} : memref<8x128xf32, #tpu.memory_space<vmem>>, vector<8x128xf32>,
    %c0_i32_138 = arith.constant 0 : i32
    %380 = arith.cmpi eq, %arg1, %c0_i32_138 : i32
    %381 = arith.extui %380 : i1 to i32
    %c0_i32_139 = arith.constant 0 : i32
    %382 = arith.cmpi ne, %381, %c0_i32_139 : i32
    scf.if %382 {
      %c0_140 = arith.constant 0 : index
      %c0_141 = arith.constant 0 : index
      %383 = vector.load %arg7[%c0_140, %c0_141] : memref<8x128xf32, #tpu.memory_space<vmem>>, vector<8x128xf32>
      tpu.vector_store %arg7[%c0_140, %c0_141], %374 {strides = array<i32>} : memref<8x128xf32, #tpu.memory_space<vmem>>, vector<8x128xf32>,
      %c0_142 = arith.constant 0 : index
      %c0_143 = arith.constant 0 : index
      %384 = vector.load %arg8[%c0_142, %c0_143] : memref<8x128xf32, #tpu.memory_space<vmem>>, vector<8x128xf32>
      tpu.vector_store %arg8[%c0_142, %c0_143], %363 {strides = array<i32>} : memref<8x128xf32, #tpu.memory_space<vmem>>, vector<8x128xf32>,
    } else {
    }
    return
  }
  func.func @transform_0(%arg0: i32, %arg1: i32) -> (i32, i32, i32) {
    %c0_i32 = arith.constant 0 : i32
    %c0_i32_0 = arith.constant 0 : i32
    return %arg0, %arg1, %c0_i32 : i32, i32, i32
  }
  func.func @transform_1(%arg0: i32, %arg1: i32) -> (i32, i32) {
    %c0_i32 = arith.constant 0 : i32
    %c0_i32_0 = arith.constant 0 : i32
    %c0_i32_1 = arith.constant 0 : i32
    return %c0_i32, %c0_i32_0 : i32, i32
  }
  func.func @transform_2(%arg0: i32, %arg1: i32) -> (i32, i32) {
    %c0_i32 = arith.constant 0 : i32
    %c0_i32_0 = arith.constant 0 : i32
    %c0_i32_1 = arith.constant 0 : i32
    return %c0_i32, %c0_i32_0 : i32, i32
  }
  func.func @transform_3(%arg0: i32, %arg1: i32) -> (i32, i32) {
    %c0_i32 = arith.constant 0 : i32
    %c0_i32_0 = arith.constant 0 : i32
    %c0_i32_1 = arith.constant 0 : i32
    return %c0_i32, %c0_i32_0 : i32, i32
  }
  func.func @transform_4(%arg0: i32, %arg1: i32) -> (i32, i32, i32) {
    %c0_i32 = arith.constant 0 : i32
    %c0_i32_0 = arith.constant 0 : i32
    return %arg0, %arg1, %c0_i32 : i32, i32, i32
  }
  func.func @transform_5(%arg0: i32, %arg1: i32) -> (i32, i32) {
    %c0_i32 = arith.constant 0 : i32
    %c0_i32_0 = arith.constant 0 : i32
    return %arg0, %c0_i32 : i32, i32
  }
  func.func @transform_6(%arg0: i32, %arg1: i32) -> (i32, i32) {
    %c0_i32 = arith.constant 0 : i32
    %c0_i32_0 = arith.constant 0 : i32
    return %arg0, %c0_i32 : i32, i32
  }
}

</mosaic_0001>

<llo_original>
// kernel: lstm_pallas.1
$region0: #{lstm_pallas.1}
  #allocation0 [shape = 'u32[]', space=smem, size = 0x4, offset = 0x4, fixed_abs, tag = 'smem constant byte address 0x4 - core index']
  #allocation1 [shape = 'u32[72,128]{1,0:T(1,128)}', space=vmem, size = 0x9000, scoped, tag = 'internal scratch']
  #allocation2 [shape = 'f32[8,128]{1,0:T(8,128)}', space=vmem, size = 0x1000, scoped, tag = 'scratch operand']
  #allocation3 [shape = 'f32[8,128]{1,0:T(8,128)}', space=vmem, size = 0x1000, scoped, tag = 'scratch operand']
  %s0 = inlined_call_operand.vmem [shape: f32[8,8,512], index: 0, kind: input, shape index: {}]
  %s1 = inlined_call_operand.vmem [shape: f32[128,512], index: 1, kind: input, shape index: {}]
  %s2 = inlined_call_operand.vmem [shape: f32[1,512], index: 2, kind: input, shape index: {}]
  %s3 = inlined_call_operand.vmem [shape: f32[8,128], index: 3, kind: input, shape index: {}]
  %s4 = inlined_call_operand.vmem [shape: f32[8,8,128], index: 4, kind: output, shape index: {0}]
  %s5 = inlined_call_operand.vmem [shape: f32[8,128], index: 5, kind: output, shape index: {1}]
  %s6 = inlined_call_operand.vmem [shape: f32[8,128], index: 6, kind: output, shape index: {2}]
  %7 = xla_tuple %s4, %s5, %s6
  %s8 = sld [smem:[#allocation0]]
  $region50: #{lstm_pallas.1} parent=0
    _
  %s10 = ssub.s32 1, %s8
  %s11 = scalar_select 0, %s10, %s8
  // Predicated region
  $region2: #{lstm_pallas.1} parent=0 // pred_check
    _
  $region3: #{lstm_pallas.1} parent=0 // pred_check_branch
    %13 = sbr.rel (0) target = $region5
  $region4: #{lstm_pallas.1} parent=0 // pred_region
    _
  $region5: #{lstm_pallas.1} parent=0 // pred_fallthru
    _
  // Predicated region
  $region6: #{lstm_pallas.1} parent=0 // pred_check
    _
  $region7: #{lstm_pallas.1} parent=0 // pred_check_branch
    %15 = sbr.rel (0) target = $region9
  $region8: #{lstm_pallas.1} parent=0 // pred_region
    _
  $region9: #{lstm_pallas.1} parent=0 // pred_fallthru
    _
  // Predicated region
  $region10: #{lstm_pallas.1} parent=0 // pred_check
    _
  $region11: #{lstm_pallas.1} parent=0 // pred_check_branch
    %17 = sbr.rel (0) target = $region13
  $region12: #{lstm_pallas.1} parent=0 // pred_region
    _
  $region13: #{lstm_pallas.1} parent=0 // pred_fallthru
    _
  // Predicated region
  $region14: #{lstm_pallas.1} parent=0 // pred_check
    _
  $region15: #{lstm_pallas.1} parent=0 // pred_check_branch
    %19 = sbr.rel (0) target = $region17
  $region16: #{lstm_pallas.1} parent=0 // pred_region
    _
  $region17: #{lstm_pallas.1} parent=0 // pred_fallthru
    _
  %p20 = scmp.eq.s32.totalorder 0, 0
  // Predicated region
  $region18: #{lstm_pallas.1} parent=0 // pred_check
    %p21 = pneg %p20
  $region19: #{lstm_pallas.1} parent=0 // pred_check_branch
    %23 = sbr.rel (%p21) target = $region21
  $region20: #{lstm_pallas.1} parent=0 // pred_region
    %24 = vst [vmem:[#allocation2] sm:$0xff] 0.0
    %25 = vst [vmem:[#allocation3] sm:$0xff] 0.0
  $region21: #{lstm_pallas.1} parent=0 // pred_fallthru
    _
  %v26 = vld [vmem:[%s1] sm:$0xff]
  %v27 = vld [vmem:[%s1 + $0x8] sm:$0xff]
  %v28 = vld [vmem:[%s1 + $0x10] sm:$0xff]
  %v29 = vld [vmem:[%s1 + $0x18] sm:$0xff]
  %v30 = vld [vmem:[%s1 + $0x20] sm:$0xff]
  %v31 = vld [vmem:[%s1 + $0x28] sm:$0xff]
  %v32 = vld [vmem:[%s1 + $0x30] sm:$0xff]
  %v33 = vld [vmem:[%s1 + $0x38] sm:$0xff]
  %v34 = vld [vmem:[%s1 + $0x40] sm:$0xff]
  %v35 = vld [vmem:[%s1 + $0x48] sm:$0xff]
  %v36 = vld [vmem:[%s1 + $0x50] sm:$0xff]
  %v37 = vld [vmem:[%s1 + $0x58] sm:$0xff]
  %v38 = vld [vmem:[%s1 + $0x60] sm:$0xff]
  %v39 = vld [vmem:[%s1 + $0x68] sm:$0xff]
  %v40 = vld [vmem:[%s1 + $0x70] sm:$0xff]
  %v41 = vld [vmem:[%s1 + $0x78] sm:$0xff]
  %v42 = vld [vmem:[%s1 + $0x80] sm:$0xff]
  %v43 = vld [vmem:[%s1 + $0x88] sm:$0xff]
  %v44 = vld [vmem:[%s1 + $0x90] sm:$0xff]
  %v45 = vld [vmem:[%s1 + $0x98] sm:$0xff]
  %v46 = vld [vmem:[%s1 + $0xa0] sm:$0xff]
  %v47 = vld [vmem:[%s1 + $0xa8] sm:$0xff]
  %v48 = vld [vmem:[%s1 + $0xb0] sm:$0xff]
  %v49 = vld [vmem:[%s1 + $0xb8] sm:$0xff]
  %v50 = vld [vmem:[%s1 + $0xc0] sm:$0xff]
  %v51 = vld [vmem:[%s1 + $0xc8] sm:$0xff]
  %v52 = vld [vmem:[%s1 + $0xd0] sm:$0xff]
  %v53 = vld [vmem:[%s1 + $0xd8] sm:$0xff]
  %v54 = vld [vmem:[%s1 + $0xe0] sm:$0xff]
  %v55 = vld [vmem:[%s1 + $0xe8] sm:$0xff]
  %v56 = vld [vmem:[%s1 + $0xf0] sm:$0xff]
  %v57 = vld [vmem:[%s1 + $0xf8] sm:$0xff]
  %v58 = vld [vmem:[%s1 + $0x100] sm:$0xff]
  %v59 = vld [vmem:[%s1 + $0x108] sm:$0xff]
  %v60 = vld [vmem:[%s1 + $0x110] sm:$0xff]
  %v61 = vld [vmem:[%s1 + $0x118] sm:$0xff]
  %v62 = vld [vmem:[%s1 + $0x120] sm:$0xff]
  %v63 = vld [vmem:[%s1 + $0x128] sm:$0xff]
  %v64 = vld [vmem:[%s1 + $0x130] sm:$0xff]
  %v65 = vld [vmem:[%s1 + $0x138] sm:$0xff]
  %v66 = vld [vmem:[%s1 + $0x140] sm:$0xff]
  %v67 = vld [vmem:[%s1 + $0x148] sm:$0xff]
  %v68 = vld [vmem:[%s1 + $0x150] sm:$0xff]
  %v69 = vld [vmem:[%s1 + $0x158] sm:$0xff]
  %v70 = vld [vmem:[%s1 + $0x160] sm:$0xff]
  %v71 = vld [vmem:[%s1 + $0x168] sm:$0xff]
  %v72 = vld [vmem:[%s1 + $0x170] sm:$0xff]
  %v73 = vld [vmem:[%s1 + $0x178] sm:$0xff]
  %v74 = vld [vmem:[%s1 + $0x180] sm:$0xff]
  %v75 = vld [vmem:[%s1 + $0x188] sm:$0xff]
  %v76 = vld [vmem:[%s1 + $0x190] sm:$0xff]
  %v77 = vld [vmem:[%s1 + $0x198] sm:$0xff]
  %v78 = vld [vmem:[%s1 + $0x1a0] sm:$0xff]
  %v79 = vld [vmem:[%s1 + $0x1a8] sm:$0xff]
  %v80 = vld [vmem:[%s1 + $0x1b0] sm:$0xff]
  %v81 = vld [vmem:[%s1 + $0x1b8] sm:$0xff]
  %v82 = vld [vmem:[%s1 + $0x1c0] sm:$0xff]
  %v83 = vld [vmem:[%s1 + $0x1c8] sm:$0xff]
  %v84 = vld [vmem:[%s1 + $0x1d0] sm:$0xff]
  %v85 = vld [vmem:[%s1 + $0x1d8] sm:$0xff]
  %v86 = vld [vmem:[%s1 + $0x1e0] sm:$0xff]
  %v87 = vld [vmem:[%s1 + $0x1e8] sm:$0xff]
  %v88 = vld [vmem:[%s1 + $0x1f0] sm:$0xff]
  %v89 = vld [vmem:[%s1 + $0x1f8] sm:$0xff]
  %v90 = vld [vmem:[%s2] sm:$0xf]
  %v92 = vperm.slane %v90, 0
  %v93 = vperm.slane %v90, 1
  %v94 = vperm.slane %v90, 2
  %v95 = vperm.slane %v90, 3
  %v96 = vld [vmem:[%s3] sm:$0x1]
  %v97 = vperm.slane %v96, 0
  %v98 = vld [vmem:[%s3 + $0x1] sm:$0x1]
  %v99 = vperm.slane %v98, 0
  %v100 = vld [vmem:[%s3 + $0x2] sm:$0x1]
  %v101 = vperm.slane %v100, 0
  %v102 = vld [vmem:[#allocation2] sm:$0xff]
  %v103 = vld [vmem:[#allocation3] sm:$0xff]
  %v104 = vld [vmem:[%s0] ss:$8 sm:$0xf]
  %s105 = scalar_lea.vmem %s0, 32
  %v106 = vld [vmem:[%s105] ss:$8 sm:$0xf]
  %s107 = scalar_lea.vmem %s0, 64
  %v108 = vld [vmem:[%s107] ss:$8 sm:$0xf]
  %s109 = scalar_lea.vmem %s0, 96
  %v110 = vld [vmem:[%s109] ss:$8 sm:$0xf]
  %s111 = scalar_lea.vmem %s0, 128
  %v112 = vld [vmem:[%s111] ss:$8 sm:$0xf]
  %s113 = scalar_lea.vmem %s0, 160
  %v114 = vld [vmem:[%s113] ss:$8 sm:$0xf]
  %s115 = scalar_lea.vmem %s0, 192
  %v116 = vld [vmem:[%s115] ss:$8 sm:$0xf]
  %s117 = scalar_lea.vmem %s0, 224
  %v118 = vld [vmem:[%s117] ss:$8 sm:$0xf]
  %v119 = vrot.slane %v93, 7
  %v120 = vrot.slane %v94, 6
  %v121 = vrot.slane %v95, 5
  %vm122 = vcmask 1040384
  %v123 = vsel %vm122, %v92, %v119
  %vm124 = vcmask 1042434
  %v125 = vsel %vm124, %v120, %v121
  %vm126 = vcmask 1041408
  %v127 = vsel %vm126, %v123, %v125
  %vm128 = vcmask 1041409
  %v129 = vsel %vm128, %v92, %v119
  %vm130 = vcmask 1043459
  %v131 = vsel %vm130, %v120, %v121
  %vm132 = vcmask 1042433
  %v133 = vsel %vm132, %v129, %v131
  %v134 = vrot.slane %v133, 1
  %v135 = vsel %vm124, %v92, %v119
  %vm136 = vcmask 1044484
  %v137 = vsel %vm136, %v120, %v121
  %vm138 = vcmask 1043458
  %v139 = vsel %vm138, %v135, %v137
  %v140 = vrot.slane %v139, 2
  %v141 = vsel %vm130, %v92, %v119
  %vm142 = vcmask 1045509
  %v143 = vsel %vm142, %v120, %v121
  %vm144 = vcmask 1044483
  %v145 = vsel %vm144, %v141, %v143
  %v146 = vrot.slane %v145, 3
  %v147 = vsel %vm136, %v92, %v119
  %vm148 = vcmask 1046534
  %v149 = vsel %vm148, %v120, %v121
  %vm150 = vcmask 1045508
  %v151 = vsel %vm150, %v147, %v149
  %v152 = vrot.slane %v151, 4
  %v153 = vsel %vm142, %v92, %v119
  %vm154 = vcmask 1046528
  %v155 = vsel %vm154, %v121, %v120
  %vm156 = vcmask 1046533
  %v157 = vsel %vm156, %v153, %v155
  %v158 = vrot.slane %v157, 5
  %v159 = vsel %vm148, %v92, %v119
  %v160 = vsel %vm122, %v120, %v121
  %vm161 = vcmask 1045504
  %v162 = vsel %vm161, %v160, %v159
  %v163 = vrot.slane %v162, 6
  %v164 = vsel %vm154, %v119, %v92
  %v165 = vsel %vm128, %v120, %v121
  %vm166 = vcmask 1046529
  %v167 = vsel %vm166, %v165, %v164
  %v168 = vrot.slane %v167, 7
  %v177 = vadd.f32 %v104, %v127
  %v178 = vadd.f32 %v106, %v134
  %v179 = vadd.f32 %v108, %v140
  %v180 = vadd.f32 %v110, %v146
  %v181 = vadd.f32 %v112, %v152
  %v182 = vadd.f32 %v114, %v158
  %v183 = vadd.f32 %v116, %v163
  %v184 = vadd.f32 %v118, %v168
  %185 = vmatpush.msra.mxu0 %v86
  %186 = vmatpush.msra.mxu0 %v82
  %187 = vmatpush.msra.mxu0 %v78
  %188 = vmatpush.msra.mxu0 %v74
  %189 = vmatpush.msra.mxu0 %v70
  %190 = vmatpush.msra.mxu0 %v66
  %191 = vmatpush.msra.mxu0 %v62
  %192 = vmatpush.msra.mxu0 %v58
  %193 = vmatpush.msra.mxu0 %v54
  %194 = vmatpush.msra.mxu0 %v50
  %195 = vmatpush.msra.mxu0 %v46
  %196 = vmatpush.msra.mxu0 %v42
  %197 = vmatpush.msra.mxu0 %v38
  %198 = vmatpush.msra.mxu0 %v34
  %199 = vmatpush.msra.mxu0 %v30
  %200 = vmatpush.msra.mxu0 %v26
  %201 = vmatmul.f32.gmra.mxu0 %v102
  %v202 = vpop.f32.mrf.mxu0
  %v203 = vadd.f32 0.0, %v202
  %204 = vdwg.mxu0
  %205 = vmatpush.msra.mxu0 %v87
  %206 = vmatpush.msra.mxu0 %v83
  %207 = vmatpush.msra.mxu0 %v79
  %208 = vmatpush.msra.mxu0 %v75
  %209 = vmatpush.msra.mxu0 %v71
  %210 = vmatpush.msra.mxu0 %v67
  %211 = vmatpush.msra.mxu0 %v63
  %212 = vmatpush.msra.mxu0 %v59
  %213 = vmatpush.msra.mxu0 %v55
  %214 = vmatpush.msra.mxu0 %v51
  %215 = vmatpush.msra.mxu0 %v47
  %216 = vmatpush.msra.mxu0 %v43
  %217 = vmatpush.msra.mxu0 %v39
  %218 = vmatpush.msra.mxu0 %v35
  %219 = vmatpush.msra.mxu0 %v31
  %220 = vmatpush.msra.mxu0 %v27
  %221 = vmatmul.f32.gmra.mxu0 %v102
  %v222 = vpop.f32.mrf.mxu0
  %v223 = vadd.f32 0.0, %v222
  %224 = vdwg.mxu0
  %225 = vmatpush.msra.mxu0 %v88
  %226 = vmatpush.msra.mxu0 %v84
  %227 = vmatpush.msra.mxu0 %v80
  %228 = vmatpush.msra.mxu0 %v76
  %229 = vmatpush.msra.mxu0 %v72
  %230 = vmatpush.msra.mxu0 %v68
  %231 = vmatpush.msra.mxu0 %v64
  %232 = vmatpush.msra.mxu0 %v60
  %233 = vmatpush.msra.mxu0 %v56
  %234 = vmatpush.msra.mxu0 %v52
  %235 = vmatpush.msra.mxu0 %v48
  %236 = vmatpush.msra.mxu0 %v44
  %237 = vmatpush.msra.mxu0 %v40
  %238 = vmatpush.msra.mxu0 %v36
  %239 = vmatpush.msra.mxu0 %v32
  %240 = vmatpush.msra.mxu0 %v28
  %241 = vmatmul.f32.gmra.mxu0 %v102
  %v242 = vpop.f32.mrf.mxu0
  %v243 = vadd.f32 0.0, %v242
  %244 = vdwg.mxu0
  %245 = vmatpush.msra.mxu0 %v89
  %246 = vmatpush.msra.mxu0 %v85
  %247 = vmatpush.msra.mxu0 %v81
  %248 = vmatpush.msra.mxu0 %v77
  %249 = vmatpush.msra.mxu0 %v73
  %250 = vmatpush.msra.mxu0 %v69
  %251 = vmatpush.msra.mxu0 %v65
  %252 = vmatpush.msra.mxu0 %v61
  %253 = vmatpush.msra.mxu0 %v57
  %254 = vmatpush.msra.mxu0 %v53
  %255 = vmatpush.msra.mxu0 %v49
  %256 = vmatpush.msra.mxu0 %v45
  %257 = vmatpush.msra.mxu0 %v41
  %258 = vmatpush.msra.mxu0 %v37
  %259 = vmatpush.msra.mxu0 %v33
  %260 = vmatpush.msra.mxu0 %v29
  %261 = vmatmul.f32.gmra.mxu0 %v102
  %v262 = vpop.f32.mrf.mxu0
  %v263 = vadd.f32 0.0, %v262
  %264 = vdwg.mxu0
  %v269 = vrot.slane %v223, 7
  %v270 = vrot.slane %v243, 6
  %v271 = vrot.slane %v263, 5
  %v272 = vsel %vm122, %v203, %v269
  %v273 = vsel %vm124, %v270, %v271
  %v274 = vsel %vm126, %v272, %v273
  %v275 = vsel %vm128, %v203, %v269
  %v276 = vsel %vm130, %v270, %v271
  %v277 = vsel %vm132, %v275, %v276
  %v278 = vrot.slane %v277, 1
  %v279 = vsel %vm124, %v203, %v269
  %v280 = vsel %vm136, %v270, %v271
  %v281 = vsel %vm138, %v279, %v280
  %v282 = vrot.slane %v281, 2
  %v283 = vsel %vm130, %v203, %v269
  %v284 = vsel %vm142, %v270, %v271
  %v285 = vsel %vm144, %v283, %v284
  %v286 = vrot.slane %v285, 3
  %v287 = vsel %vm136, %v203, %v269
  %v288 = vsel %vm148, %v270, %v271
  %v289 = vsel %vm150, %v287, %v288
  %v290 = vrot.slane %v289, 4
  %v291 = vsel %vm142, %v203, %v269
  %v292 = vsel %vm154, %v271, %v270
  %v293 = vsel %vm156, %v291, %v292
  %v294 = vrot.slane %v293, 5
  %v295 = vsel %vm148, %v203, %v269
  %v296 = vsel %vm122, %v270, %v271
  %v297 = vsel %vm161, %v296, %v295
  %v298 = vrot.slane %v297, 6
  %v299 = vsel %vm154, %v269, %v203
  %v300 = vsel %vm128, %v270, %v271
  %v301 = vsel %vm166, %v300, %v299
  %v302 = vrot.slane %v301, 7
  %v311 = vadd.f32 %v177, %v274
  %v312 = vadd.f32 %v178, %v278
  %v313 = vadd.f32 %v179, %v282
  %v314 = vadd.f32 %v180, %v286
  %v315 = vadd.f32 %v181, %v290
  %v316 = vadd.f32 %v182, %v294
  %v317 = vadd.f32 %v183, %v298
  %v318 = vadd.f32 %v184, %v302
  %v319 = vmul.f32 %v97, %v103
  %v321 = vrot.slane %v319, 1
  %v322 = vrot.slane %v319, 2
  %v323 = vrot.slane %v319, 3
  %v324 = vrot.slane %v319, 4
  %v325 = vrot.slane %v319, 5
  %v326 = vrot.slane %v319, 6
  %v327 = vrot.slane %v319, 7
  %v335 = vadd.f32 %v311, %v319
  %v336 = vadd.f32 %v312, %v321
  %v337 = vadd.f32 %v313, %v322
  %v338 = vadd.f32 %v314, %v323
  %v339 = vadd.f32 %v315, %v324
  %v340 = vadd.f32 %v316, %v325
  %v341 = vadd.f32 %v317, %v326
  %v342 = vadd.f32 %v318, %v327
  %v343 = vmul.f32 %v335, 0.5
  %v344 = vmul.f32 %v336, 0.5
  %v345 = vmul.f32 %v337, 0.5
  %v346 = vmul.f32 %v338, 0.5
  %v347 = vmul.f32 %v339, 0.5
  %v348 = vmul.f32 %v340, 0.5
  %v349 = vmul.f32 %v341, 0.5
  %v350 = vmul.f32 %v342, 0.5
  %v351 = vtanh.pop %v343
  %v352 = vtanh.pop %v344
  %v353 = vtanh.pop %v345
  %v354 = vtanh.pop %v346
  %v355 = vtanh.pop %v347
  %v356 = vtanh.pop %v348
  %v357 = vtanh.pop %v349
  %v358 = vtanh.pop %v350
  %v359 = vmul.f32 %v351, 0.5
  %v360 = vmul.f32 %v352, 0.5
  %v361 = vmul.f32 %v353, 0.5
  %v362 = vmul.f32 %v354, 0.5
  %v363 = vmul.f32 %v355, 0.5
  %v364 = vmul.f32 %v356, 0.5
  %v365 = vmul.f32 %v357, 0.5
  %v366 = vmul.f32 %v358, 0.5
  %v367 = vadd.f32 %v359, 0.5
  %v368 = vadd.f32 %v360, 0.5
  %v369 = vadd.f32 %v361, 0.5
  %v370 = vadd.f32 %v362, 0.5
  %v371 = vadd.f32 %v363, 0.5
  %v372 = vadd.f32 %v364, 0.5
  %v373 = vadd.f32 %v365, 0.5
  %v374 = vadd.f32 %v366, 0.5
  %v375 = vmul.f32 %v99, %v103
  %v384 = vrot.slane %v311, 1
  %v385 = vrot.slane %v312, 1
  %v386 = vrot.slane %v313, 1
  %v387 = vrot.slane %v314, 1
  %v388 = vrot.slane %v315, 1
  %v389 = vrot.slane %v316, 1
  %v390 = vrot.slane %v317, 1
  %v391 = vrot.slane %v318, 1
  %v401 = vrot.slane %v375, 1
  %v402 = vrot.slane %v375, 2
  %v403 = vrot.slane %v375, 3
  %v404 = vrot.slane %v375, 4
  %v405 = vrot.slane %v375, 5
  %v406 = vrot.slane %v375, 6
  %v407 = vrot.slane %v375, 7
  %v415 = vadd.f32 %v384, %v375
  %v416 = vadd.f32 %v385, %v401
  %v417 = vadd.f32 %v386, %v402
  %v418 = vadd.f32 %v387, %v403
  %v419 = vadd.f32 %v388, %v404
  %v420 = vadd.f32 %v389, %v405
  %v421 = vadd.f32 %v390, %v406
  %v422 = vadd.f32 %v391, %v407
  %v423 = vmul.f32 %v415, 0.5
  %v424 = vmul.f32 %v416, 0.5
  %v425 = vmul.f32 %v417, 0.5
  %v426 = vmul.f32 %v418, 0.5
  %v427 = vmul.f32 %v419, 0.5
  %v428 = vmul.f32 %v420, 0.5
  %v429 = vmul.f32 %v421, 0.5
  %v430 = vmul.f32 %v422, 0.5
  %v431 = vtanh.pop %v423
  %v432 = vtanh.pop %v424
  %v433 = vtanh.pop %v425
  %v434 = vtanh.pop %v426
  %v435 = vtanh.pop %v427
  %v436 = vtanh.pop %v428
  %v437 = vtanh.pop %v429
  %v438 = vtanh.pop %v430
  %v439 = vmul.f32 %v431, 0.5
  %v440 = vmul.f32 %v432, 0.5
  %v441 = vmul.f32 %v433, 0.5
  %v442 = vmul.f32 %v434, 0.5
  %v443 = vmul.f32 %v435, 0.5
  %v444 = vmul.f32 %v436, 0.5
  %v445 = vmul.f32 %v437, 0.5
  %v446 = vmul.f32 %v438, 0.5
  %v447 = vadd.f32 %v439, 0.5
  %v448 = vadd.f32 %v440, 0.5
  %v449 = vadd.f32 %v441, 0.5
  %v450 = vadd.f32 %v442, 0.5
  %v451 = vadd.f32 %v443, 0.5
  %v452 = vadd.f32 %v444, 0.5
  %v453 = vadd.f32 %v445, 0.5
  %v454 = vadd.f32 %v446, 0.5
  %v455 = vrot.slane %v311, 2
  %v456 = vrot.slane %v312, 2
  %v457 = vrot.slane %v313, 2
  %v458 = vrot.slane %v314, 2
  %v459 = vrot.slane %v315, 2
  %v460 = vrot.slane %v316, 2
  %v461 = vrot.slane %v317, 2
  %v462 = vrot.slane %v318, 2
  %v471 = vtanh.pop %v455
  %v472 = vtanh.pop %v456
  %v473 = vtanh.pop %v457
  %v474 = vtanh.pop %v458
  %v475 = vtanh.pop %v459
  %v476 = vtanh.pop %v460
  %v477 = vtanh.pop %v461
  %v478 = vtanh.pop %v462
  %v480 = vrot.slane %v103, 1
  %v481 = vrot.slane %v103, 2
  %v482 = vrot.slane %v103, 3
  %v483 = vrot.slane %v103, 4
  %v484 = vrot.slane %v103, 5
  %v485 = vrot.slane %v103, 6
  %v486 = vrot.slane %v103, 7
  %v494 = vmul.f32 %v447, %v103
  %v495 = vmul.f32 %v448, %v480
  %v496 = vmul.f32 %v449, %v481
  %v497 = vmul.f32 %v450, %v482
  %v498 = vmul.f32 %v451, %v483
  %v499 = vmul.f32 %v452, %v484
  %v500 = vmul.f32 %v453, %v485
  %v501 = vmul.f32 %v454, %v486
  %v502 = vmul.f32 %v367, %v471
  %v503 = vmul.f32 %v368, %v472
  %v504 = vmul.f32 %v369, %v473
  %v505 = vmul.f32 %v370, %v474
  %v506 = vmul.f32 %v371, %v475
  %v507 = vmul.f32 %v372, %v476
  %v508 = vmul.f32 %v373, %v477
  %v509 = vmul.f32 %v374, %v478
  %v510 = vadd.f32 %v494, %v502
  %v511 = vadd.f32 %v495, %v503
  %v512 = vadd.f32 %v496, %v504
  %v513 = vadd.f32 %v497, %v505
  %v514 = vadd.f32 %v498, %v506
  %v515 = vadd.f32 %v499, %v507
  %v516 = vadd.f32 %v500, %v508
  %v517 = vadd.f32 %v501, %v509
  %526 = vst [vmem:[#allocation1] ss:$9 sm:$0xff] %v510
  %s527 = scalar_lea.vmem [#allocation1], 1
  %528 = vst [vmem:[%s527] ss:$9 sm:$0xff] %v511
  %s529 = scalar_lea.vmem [#allocation1], 2
  %530 = vst [vmem:[%s529] ss:$9 sm:$0xff] %v512
  %s531 = scalar_lea.vmem [#allocation1], 3
  %532 = vst [vmem:[%s531] ss:$9 sm:$0xff] %v513
  %s533 = scalar_lea.vmem [#allocation1], 4
  %534 = vst [vmem:[%s533] ss:$9 sm:$0xff] %v514
  %s535 = scalar_lea.vmem [#allocation1], 5
  %536 = vst [vmem:[%s535] ss:$9 sm:$0xff] %v515
  %s537 = scalar_lea.vmem [#allocation1], 6
  %538 = vst [vmem:[%s537] ss:$9 sm:$0xff] %v516
  %s539 = scalar_lea.vmem [#allocation1], 7
  %540 = vst [vmem:[%s539] ss:$9 sm:$0xff] %v517
  %v541 = vld [vmem:[#allocation1] sm:$0xff]
  %v543 = vmul.f32 %v101, %v541
  %v544 = vrot.slane %v311, 3
  %v545 = vrot.slane %v312, 3
  %v546 = vrot.slane %v313, 3
  %v547 = vrot.slane %v314, 3
  %v548 = vrot.slane %v315, 3
  %v549 = vrot.slane %v316, 3
  %v550 = vrot.slane %v317, 3
  %v551 = vrot.slane %v318, 3
  %v561 = vrot.slane %v543, 1
  %v562 = vrot.slane %v543, 2
  %v563 = vrot.slane %v543, 3
  %v564 = vrot.slane %v543, 4
  %v565 = vrot.slane %v543, 5
  %v566 = vrot.slane %v543, 6
  %v567 = vrot.slane %v543, 7
  %v575 = vadd.f32 %v544, %v543
  %v576 = vadd.f32 %v545, %v561
  %v577 = vadd.f32 %v546, %v562
  %v578 = vadd.f32 %v547, %v563
  %v579 = vadd.f32 %v548, %v564
  %v580 = vadd.f32 %v549, %v565
  %v581 = vadd.f32 %v550, %v566
  %v582 = vadd.f32 %v551, %v567
  %v583 = vmul.f32 %v575, 0.5
  %v584 = vmul.f32 %v576, 0.5
  %v585 = vmul.f32 %v577, 0.5
  %v586 = vmul.f32 %v578, 0.5
  %v587 = vmul.f32 %v579, 0.5
  %v588 = vmul.f32 %v580, 0.5
  %v589 = vmul.f32 %v581, 0.5
  %v590 = vmul.f32 %v582, 0.5
  %v591 = vtanh.pop %v583
  %v592 = vtanh.pop %v584
  %v593 = vtanh.pop %v585
  %v594 = vtanh.pop %v586
  %v595 = vtanh.pop %v587
  %v596 = vtanh.pop %v588
  %v597 = vtanh.pop %v589
  %v598 = vtanh.pop %v590
  %v599 = vmul.f32 %v591, 0.5
  %v600 = vmul.f32 %v592, 0.5
  %v601 = vmul.f32 %v593, 0.5
  %v602 = vmul.f32 %v594, 0.5
  %v603 = vmul.f32 %v595, 0.5
  %v604 = vmul.f32 %v596, 0.5
  %v605 = vmul.f32 %v597, 0.5
  %v606 = vmul.f32 %v598, 0.5
  %v607 = vadd.f32 %v599, 0.5
  %v608 = vadd.f32 %v600, 0.5
  %v609 = vadd.f32 %v601, 0.5
  %v610 = vadd.f32 %v602, 0.5
  %v611 = vadd.f32 %v603, 0.5
  %v612 = vadd.f32 %v604, 0.5
  %v613 = vadd.f32 %v605, 0.5
  %v614 = vadd.f32 %v606, 0.5
  %v615 = vtanh.pop %v510
  %v616 = vtanh.pop %v511
  %v617 = vtanh.pop %v512
  %v618 = vtanh.pop %v513
  %v619 = vtanh.pop %v514
  %v620 = vtanh.pop %v515
  %v621 = vtanh.pop %v516
  %v622 = vtanh.pop %v517
  %v623 = vmul.f32 %v607, %v615
  %v624 = vmul.f32 %v608, %v616
  %v625 = vmul.f32 %v609, %v617
  %v626 = vmul.f32 %v610, %v618
  %v627 = vmul.f32 %v611, %v619
  %v628 = vmul.f32 %v612, %v620
  %v629 = vmul.f32 %v613, %v621
  %v630 = vmul.f32 %v614, %v622
  %631 = vst [vmem:[%s4] sm:$0x1] %v623
  %632 = vst [vmem:[%s4 + $0x8] sm:$0x1] %v624
  %633 = vst [vmem:[%s4 + $0x10] sm:$0x1] %v625
  %634 = vst [vmem:[%s4 + $0x18] sm:$0x1] %v626
  %635 = vst [vmem:[%s4 + $0x20] sm:$0x1] %v627
  %636 = vst [vmem:[%s4 + $0x28] sm:$0x1] %v628
  %637 = vst [vmem:[%s4 + $0x30] sm:$0x1] %v629
  %638 = vst [vmem:[%s4 + $0x38] sm:$0x1] %v630
  %s639 = scalar_lea.vmem %s0, 1
  %v640 = vld [vmem:[%s639] ss:$8 sm:$0xf]
  %s641 = scalar_lea.vmem %s0, 33
  %v642 = vld [vmem:[%s641] ss:$8 sm:$0xf]
  %s643 = scalar_lea.vmem %s0, 65
  %v644 = vld [vmem:[%s643] ss:$8 sm:$0xf]
  %s645 = scalar_lea.vmem %s0, 97
  %v646 = vld [vmem:[%s645] ss:$8 sm:$0xf]
  %s647 = scalar_lea.vmem %s0, 129
  %v648 = vld [vmem:[%s647] ss:$8 sm:$0xf]
  %s649 = scalar_lea.vmem %s0, 161
  %v650 = vld [vmem:[%s649] ss:$8 sm:$0xf]
  %s651 = scalar_lea.vmem %s0, 193
  %v652 = vld [vmem:[%s651] ss:$8 sm:$0xf]
  %s653 = scalar_lea.vmem %s0, 225
  %v654 = vld [vmem:[%s653] ss:$8 sm:$0xf]
  %v655 = vadd.f32 %v640, %v127
  %v656 = vadd.f32 %v642, %v134
  %v657 = vadd.f32 %v644, %v140
  %v658 = vadd.f32 %v646, %v146
  %v659 = vadd.f32 %v648, %v152
  %v660 = vadd.f32 %v650, %v158
  %v661 = vadd.f32 %v652, %v163
  %v662 = vadd.f32 %v654, %v168
  %671 = vst [vmem:[#allocation1] ss:$9 sm:$0xff] %v623
  %s672 = scalar_lea.vmem [#allocation1], 1
  %673 = vst [vmem:[%s672] ss:$9 sm:$0xff] %v624
  %s674 = scalar_lea.vmem [#allocation1], 2
  %675 = vst [vmem:[%s674] ss:$9 sm:$0xff] %v625
  %s676 = scalar_lea.vmem [#allocation1], 3
  %677 = vst [vmem:[%s676] ss:$9 sm:$0xff] %v626
  %s678 = scalar_lea.vmem [#allocation1], 4
  %679 = vst [vmem:[%s678] ss:$9 sm:$0xff] %v627
  %s680 = scalar_lea.vmem [#allocation1], 5
  %681 = vst [vmem:[%s680] ss:$9 sm:$0xff] %v628
  %s682 = scalar_lea.vmem [#allocation1], 6
  %683 = vst [vmem:[%s682] ss:$9 sm:$0xff] %v629
  %s684 = scalar_lea.vmem [#allocation1], 7
  %685 = vst [vmem:[%s684] ss:$9 sm:$0xff] %v630
  %v686 = vld [vmem:[#allocation1] sm:$0xff]
  %688 = vmatpush.msra.mxu0 %v86
  %689 = vmatpush.msra.mxu0 %v82
  %690 = vmatpush.msra.mxu0 %v78
  %691 = vmatpush.msra.mxu0 %v74
  %692 = vmatpush.msra.mxu0 %v70
  %693 = vmatpush.msra.mxu0 %v66
  %694 = vmatpush.msra.mxu0 %v62
  %695 = vmatpush.msra.mxu0 %v58
  %696 = vmatpush.msra.mxu0 %v54
  %697 = vmatpush.msra.mxu0 %v50
  %698 = vmatpush.msra.mxu0 %v46
  %699 = vmatpush.msra.mxu0 %v42
  %700 = vmatpush.msra.mxu0 %v38
  %701 = vmatpush.msra.mxu0 %v34
  %702 = vmatpush.msra.mxu0 %v30
  %703 = vmatpush.msra.mxu0 %v26
  %704 = vmatmul.f32.gmra.mxu0 %v686
  %v705 = vpop.f32.mrf.mxu0
  %v706 = vadd.f32 0.0, %v705
  %707 = vdwg.mxu0
  %708 = vmatpush.msra.mxu0 %v87
  %709 = vmatpush.msra.mxu0 %v83
  %710 = vmatpush.msra.mxu0 %v79
  %711 = vmatpush.msra.mxu0 %v75
  %712 = vmatpush.msra.mxu0 %v71
  %713 = vmatpush.msra.mxu0 %v67
  %714 = vmatpush.msra.mxu0 %v63
  %715 = vmatpush.msra.mxu0 %v59
  %716 = vmatpush.msra.mxu0 %v55
  %717 = vmatpush.msra.mxu0 %v51
  %718 = vmatpush.msra.mxu0 %v47
  %719 = vmatpush.msra.mxu0 %v43
  %720 = vmatpush.msra.mxu0 %v39
  %721 = vmatpush.msra.mxu0 %v35
  %722 = vmatpush.msra.mxu0 %v31
  %723 = vmatpush.msra.mxu0 %v27
  %724 = vmatmul.f32.gmra.mxu0 %v686
  %v725 = vpop.f32.mrf.mxu0
  %v726 = vadd.f32 0.0, %v725
  %727 = vdwg.mxu0
  %728 = vmatpush.msra.mxu0 %v88
  %729 = vmatpush.msra.mxu0 %v84
  %730 = vmatpush.msra.mxu0 %v80
  %731 = vmatpush.msra.mxu0 %v76
  %732 = vmatpush.msra.mxu0 %v72
  %733 = vmatpush.msra.mxu0 %v68
  %734 = vmatpush.msra.mxu0 %v64
  %735 = vmatpush.msra.mxu0 %v60
  %736 = vmatpush.msra.mxu0 %v56
  %737 = vmatpush.msra.mxu0 %v52
  %738 = vmatpush.msra.mxu0 %v48
  %739 = vmatpush.msra.mxu0 %v44
  %740 = vmatpush.msra.mxu0 %v40
  %741 = vmatpush.msra.mxu0 %v36
  %742 = vmatpush.msra.mxu0 %v32
  %743 = vmatpush.msra.mxu0 %v28
  %744 = vmatmul.f32.gmra.mxu0 %v686
  %v745 = vpop.f32.mrf.mxu0
  %v746 = vadd.f32 0.0, %v745
  %747 = vdwg.mxu0
  %748 = vmatpush.msra.mxu0 %v89
  %749 = vmatpush.msra.mxu0 %v85
  %750 = vmatpush.msra.mxu0 %v81
  %751 = vmatpush.msra.mxu0 %v77
  %752 = vmatpush.msra.mxu0 %v73
  %753 = vmatpush.msra.mxu0 %v69
  %754 = vmatpush.msra.mxu0 %v65
  %755 = vmatpush.msra.mxu0 %v61
  %756 = vmatpush.msra.mxu0 %v57
  %757 = vmatpush.msra.mxu0 %v53
  %758 = vmatpush.msra.mxu0 %v49
  %759 = vmatpush.msra.mxu0 %v45
  %760 = vmatpush.msra.mxu0 %v41
  %761 = vmatpush.msra.mxu0 %v37
  %762 = vmatpush.msra.mxu0 %v33
  %763 = vmatpush.msra.mxu0 %v29
  %764 = vmatmul.f32.gmra.mxu0 %v686
  %v765 = vpop.f32.mrf.mxu0
  %v766 = vadd.f32 0.0, %v765
  %767 = vdwg.mxu0
  %v772 = vrot.slane %v726, 7
  %v773 = vrot.slane %v746, 6
  %v774 = vrot.slane %v766, 5
  %v775 = vsel %vm122, %v706, %v772
  %v776 = vsel %vm124, %v773, %v774
  %v777 = vsel %vm126, %v775, %v776
  %v778 = vsel %vm128, %v706, %v772
  %v779 = vsel %vm130, %v773, %v774
  %v780 = vsel %vm132, %v778, %v779
  %v781 = vrot.slane %v780, 1
  %v782 = vsel %vm124, %v706, %v772
  %v783 = vsel %vm136, %v773, %v774
  %v784 = vsel %vm138, %v782, %v783
  %v785 = vrot.slane %v784, 2
  %v786 = vsel %vm130, %v706, %v772
  %v787 = vsel %vm142, %v773, %v774
  %v788 = vsel %vm144, %v786, %v787
  %v789 = vrot.slane %v788, 3
  %v790 = vsel %vm136, %v706, %v772
  %v791 = vsel %vm148, %v773, %v774
  %v792 = vsel %vm150, %v790, %v791
  %v793 = vrot.slane %v792, 4
  %v794 = vsel %vm142, %v706, %v772
  %v795 = vsel %vm154, %v774, %v773
  %v796 = vsel %vm156, %v794, %v795
  %v797 = vrot.slane %v796, 5
  %v798 = vsel %vm148, %v706, %v772
  %v799 = vsel %vm122, %v773, %v774
  %v800 = vsel %vm161, %v799, %v798
  %v801 = vrot.slane %v800, 6
  %v802 = vsel %vm154, %v772, %v706
  %v803 = vsel %vm128, %v773, %v774
  %v804 = vsel %vm166, %v803, %v802
  %v805 = vrot.slane %v804, 7
  %v814 = vadd.f32 %v655, %v777
  %v815 = vadd.f32 %v656, %v781
  %v816 = vadd.f32 %v657, %v785
  %v817 = vadd.f32 %v658, %v789
  %v818 = vadd.f32 %v659, %v793
  %v819 = vadd.f32 %v660, %v797
  %v820 = vadd.f32 %v661, %v801
  %v821 = vadd.f32 %v662, %v805
  %822 = vst [vmem:[#allocation1] ss:$9 sm:$0xff] %v510
  %s823 = scalar_lea.vmem [#allocation1], 1
  %824 = vst [vmem:[%s823] ss:$9 sm:$0xff] %v511
  %s825 = scalar_lea.vmem [#allocation1], 2
  %826 = vst [vmem:[%s825] ss:$9 sm:$0xff] %v512
  %s827 = scalar_lea.vmem [#allocation1], 3
  %828 = vst [vmem:[%s827] ss:$9 sm:$0xff] %v513
  %s829 = scalar_lea.vmem [#allocation1], 4
  %830 = vst [vmem:[%s829] ss:$9 sm:$0xff] %v514
  %s831 = scalar_lea.vmem [#allocation1], 5
  %832 = vst [vmem:[%s831] ss:$9 sm:$0xff] %v515
  %s833 = scalar_lea.vmem [#allocation1], 6
  %834 = vst [vmem:[%s833] ss:$9 sm:$0xff] %v516
  %s835 = scalar_lea.vmem [#allocation1], 7
  %836 = vst [vmem:[%s835] ss:$9 sm:$0xff] %v517
  %v837 = vld [vmem:[#allocation1] sm:$0xff]
  %v839 = vmul.f32 %v97, %v837
  %v841 = vrot.slane %v839, 1
  %v842 = vrot.slane %v839, 2
  %v843 = vrot.slane %v839, 3
  %v844 = vrot.slane %v839, 4
  %v845 = vrot.slane %v839, 5
  %v846 = vrot.slane %v839, 6
  %v847 = vrot.slane %v839, 7
  %v855 = vadd.f32 %v814, %v839
  %v856 = vadd.f32 %v815, %v841
  %v857 = vadd.f32 %v816, %v842
  %v858 = vadd.f32 %v817, %v843
  %v859 = vadd.f32 %v818, %v844
  %v860 = vadd.f32 %v819, %v845
  %v861 = vadd.f32 %v820, %v846
  %v862 = vadd.f32 %v821, %v847
  %v863 = vmul.f32 %v855, 0.5
  %v864 = vmul.f32 %v856, 0.5
  %v865 = vmul.f32 %v857, 0.5
  %v866 = vmul.f32 %v858, 0.5
  %v867 = vmul.f32 %v859, 0.5
  %v868 = vmul.f32 %v860, 0.5
  %v869 = vmul.f32 %v861, 0.5
  %v870 = vmul.f32 %v862, 0.5
  %v871 = vtanh.pop %v863
  %v872 = vtanh.pop %v864
  %v873 = vtanh.pop %v865
  %v874 = vtanh.pop %v866
  %v875 = vtanh.pop %v867
  %v876 = vtanh.pop %v868
  %v877 = vtanh.pop %v869
  %v878 = vtanh.pop %v870
  %v879 = vmul.f32 %v871, 0.5
  %v880 = vmul.f32 %v872, 0.5
  %v881 = vmul.f32 %v873, 0.5
  %v882 = vmul.f32 %v874, 0.5
  %v883 = vmul.f32 %v875, 0.5
  %v884 = vmul.f32 %v876, 0.5
  %v885 = vmul.f32 %v877, 0.5
  %v886 = vmul.f32 %v878, 0.5
  %v887 = vadd.f32 %v879, 0.5
  %v888 = vadd.f32 %v880, 0.5
  %v889 = vadd.f32 %v881, 0.5
  %v890 = vadd.f32 %v882, 0.5
  %v891 = vadd.f32 %v883, 0.5
  %v892 = vadd.f32 %v884, 0.5
  %v893 = vadd.f32 %v885, 0.5
  %v894 = vadd.f32 %v886, 0.5
  %895 = vst [vmem:[#allocation1] ss:$9 sm:$0xff] %v510
  %s896 = scalar_lea.vmem [#allocation1], 1
  %897 = vst [vmem:[%s896] ss:$9 sm:$0xff] %v511
  %s898 = scalar_lea.vmem [#allocation1], 2
  %899 = vst [vmem:[%s898] ss:$9 sm:$0xff] %v512
  %s900 = scalar_lea.vmem [#allocation1], 3
  %901 = vst [vmem:[%s900] ss:$9 sm:$0xff] %v513
  %s902 = scalar_lea.vmem [#allocation1], 4
  %903 = vst [vmem:[%s902] ss:$9 sm:$0xff] %v514
  %s904 = scalar_lea.vmem [#allocation1], 5
  %905 = vst [vmem:[%s904] ss:$9 sm:$0xff] %v515
  %s906 = scalar_lea.vmem [#allocation1], 6
  %907 = vst [vmem:[%s906] ss:$9 sm:$0xff] %v516
  %s908 = scalar_lea.vmem [#allocation1], 7
  %909 = vst [vmem:[%s908] ss:$9 sm:$0xff] %v517
  %v910 = vld [vmem:[#allocation1] sm:$0xff]
  %v912 = vmul.f32 %v99, %v910
  %v921 = vrot.slane %v814, 1
  %v922 = vrot.slane %v815, 1
  %v923 = vrot.slane %v816, 1
  %v924 = vrot.slane %v817, 1
  %v925 = vrot.slane %v818, 1
  %v926 = vrot.slane %v819, 1
  %v927 = vrot.slane %v820, 1
  %v928 = vrot.slane %v821, 1
  %v938 = vrot.slane %v912, 1
  %v939 = vrot.slane %v912, 2
  %v940 = vrot.slane %v912, 3
  %v941 = vrot.slane %v912, 4
  %v942 = vrot.slane %v912, 5
  %v943 = vrot.slane %v912, 6
  %v944 = vrot.slane %v912, 7
  %v952 = vadd.f32 %v921, %v912
  %v953 = vadd.f32 %v922, %v938
  %v954 = vadd.f32 %v923, %v939
  %v955 = vadd.f32 %v924, %v940
  %v956 = vadd.f32 %v925, %v941
  %v957 = vadd.f32 %v926, %v942
  %v958 = vadd.f32 %v927, %v943
  %v959 = vadd.f32 %v928, %v944
  %v960 = vmul.f32 %v952, 0.5
  %v961 = vmul.f32 %v953, 0.5
  %v962 = vmul.f32 %v954, 0.5
  %v963 = vmul.f32 %v955, 0.5
  %v964 = vmul.f32 %v956, 0.5
  %v965 = vmul.f32 %v957, 0.5
  %v966 = vmul.f32 %v958, 0.5
  %v967 = vmul.f32 %v959, 0.5
  %v968 = vtanh.pop %v960
  %v969 = vtanh.pop %v961
  %v970 = vtanh.pop %v962
  %v971 = vtanh.pop %v963
  %v972 = vtanh.pop %v964
  %v973 = vtanh.pop %v965
  %v974 = vtanh.pop %v966
  %v975 = vtanh.pop %v967
  %v976 = vmul.f32 %v968, 0.5
  %v977 = vmul.f32 %v969, 0.5
  %v978 = vmul.f32 %v970, 0.5
  %v979 = vmul.f32 %v971, 0.5
  %v980 = vmul.f32 %v972, 0.5
  %v981 = vmul.f32 %v973, 0.5
  %v982 = vmul.f32 %v974, 0.5
  %v983 = vmul.f32 %v975, 0.5
  %v984 = vadd.f32 %v976, 0.5
  %v985 = vadd.f32 %v977, 0.5
  %v986 = vadd.f32 %v978, 0.5
  %v987 = vadd.f32 %v979, 0.5
  %v988 = vadd.f32 %v980, 0.5
  %v989 = vadd.f32 %v981, 0.5
  %v990 = vadd.f32 %v982, 0.5
  %v991 = vadd.f32 %v983, 0.5
  %v992 = vrot.slane %v814, 2
  %v993 = vrot.slane %v815, 2
  %v994 = vrot.slane %v816, 2
  %v995 = vrot.slane %v817, 2
  %v996 = vrot.slane %v818, 2
  %v997 = vrot.slane %v819, 2
  %v998 = vrot.slane %v820, 2
  %v999 = vrot.slane %v821, 2
  %v1008 = vtanh.pop %v992
  %v1009 = vtanh.pop %v993
  %v1010 = vtanh.pop %v994
  %v1011 = vtanh.pop %v995
  %v1012 = vtanh.pop %v996
  %v1013 = vtanh.pop %v997
  %v1014 = vtanh.pop %v998
  %v1015 = vtanh.pop %v999
  %v1016 = vmul.f32 %v984, %v510
  %v1017 = vmul.f32 %v985, %v511
  %v1018 = vmul.f32 %v986, %v512
  %v1019 = vmul.f32 %v987, %v513
  %v1020 = vmul.f32 %v988, %v514
  %v1021 = vmul.f32 %v989, %v515
  %v1022 = vmul.f32 %v990, %v516
  %v1023 = vmul.f32 %v991, %v517
  %v1024 = vmul.f32 %v887, %v1008
  %v1025 = vmul.f32 %v888, %v1009
  %v1026 = vmul.f32 %v889, %v1010
  %v1027 = vmul.f32 %v890, %v1011
  %v1028 = vmul.f32 %v891, %v1012
  %v1029 = vmul.f32 %v892, %v1013
  %v1030 = vmul.f32 %v893, %v1014
  %v1031 = vmul.f32 %v894, %v1015
  %v1032 = vadd.f32 %v1016, %v1024
  %v1033 = vadd.f32 %v1017, %v1025
  %v1034 = vadd.f32 %v1018, %v1026
  %v1035 = vadd.f32 %v1019, %v1027
  %v1036 = vadd.f32 %v1020, %v1028
  %v1037 = vadd.f32 %v1021, %v1029
  %v1038 = vadd.f32 %v1022, %v1030
  %v1039 = vadd.f32 %v1023, %v1031
  %1048 = vst [vmem:[#allocation1] ss:$9 sm:$0xff] %v1032
  %s1049 = scalar_lea.vmem [#allocation1], 1
  %1050 = vst [vmem:[%s1049] ss:$9 sm:$0xff] %v1033
  %s1051 = scalar_lea.vmem [#allocation1], 2
  %1052 = vst [vmem:[%s1051] ss:$9 sm:$0xff] %v1034
  %s1053 = scalar_lea.vmem [#allocation1], 3
  %1054 = vst [vmem:[%s1053] ss:$9 sm:$0xff] %v1035
  %s1055 = scalar_lea.vmem [#allocation1], 4
  %1056 = vst [vmem:[%s1055] ss:$9 sm:$0xff] %v1036
  %s1057 = scalar_lea.vmem [#allocation1], 5
  %1058 = vst [vmem:[%s1057] ss:$9 sm:$0xff] %v1037
  %s1059 = scalar_lea.vmem [#allocation1], 6
  %1060 = vst [vmem:[%s1059] ss:$9 sm:$0xff] %v1038
  %s1061 = scalar_lea.vmem [#allocation1], 7
  %1062 = vst [vmem:[%s1061] ss:$9 sm:$0xff] %v1039
  %v1063 = vld [vmem:[#allocation1] sm:$0xff]
  %v1065 = vmul.f32 %v101, %v1063
  %v1066 = vrot.slane %v814, 3
  %v1067 = vrot.slane %v815, 3
  %v1068 = vrot.slane %v816, 3
  %v1069 = vrot.slane %v817, 3
  %v1070 = vrot.slane %v818, 3
  %v1071 = vrot.slane %v819, 3
  %v1072 = vrot.slane %v820, 3
  %v1073 = vrot.slane %v821, 3
  %v1083 = vrot.slane %v1065, 1
  %v1084 = vrot.slane %v1065, 2
  %v1085 = vrot.slane %v1065, 3
  %v1086 = vrot.slane %v1065, 4
  %v1087 = vrot.slane %v1065, 5
  %v1088 = vrot.slane %v1065, 6
  %v1089 = vrot.slane %v1065, 7
  %v1097 = vadd.f32 %v1066, %v1065
  %v1098 = vadd.f32 %v1067, %v1083
  %v1099 = vadd.f32 %v1068, %v1084
  %v1100 = vadd.f32 %v1069, %v1085
  %v1101 = vadd.f32 %v1070, %v1086
  %v1102 = vadd.f32 %v1071, %v1087
  %v1103 = vadd.f32 %v1072, %v1088
  %v1104 = vadd.f32 %v1073, %v1089
  %v1105 = vmul.f32 %v1097, 0.5
  %v1106 = vmul.f32 %v1098, 0.5
  %v1107 = vmul.f32 %v1099, 0.5
  %v1108 = vmul.f32 %v1100, 0.5
  %v1109 = vmul.f32 %v1101, 0.5
  %v1110 = vmul.f32 %v1102, 0.5
  %v1111 = vmul.f32 %v1103, 0.5
  %v1112 = vmul.f32 %v1104, 0.5
  %v1113 = vtanh.pop %v1105
  %v1114 = vtanh.pop %v1106
  %v1115 = vtanh.pop %v1107
  %v1116 = vtanh.pop %v1108
  %v1117 = vtanh.pop %v1109
  %v1118 = vtanh.pop %v1110
  %v1119 = vtanh.pop %v1111
  %v1120 = vtanh.pop %v1112
  %v1121 = vmul.f32 %v1113, 0.5
  %v1122 = vmul.f32 %v1114, 0.5
  %v1123 = vmul.f32 %v1115, 0.5
  %v1124 = vmul.f32 %v1116, 0.5
  %v1125 = vmul.f32 %v1117, 0.5
  %v1126 = vmul.f32 %v1118, 0.5
  %v1127 = vmul.f32 %v1119, 0.5
  %v1128 = vmul.f32 %v1120, 0.5
  %v1129 = vadd.f32 %v1121, 0.5
  %v1130 = vadd.f32 %v1122, 0.5
  %v1131 = vadd.f32 %v1123, 0.5
  %v1132 = vadd.f32 %v1124, 0.5
  %v1133 = vadd.f32 %v1125, 0.5
  %v1134 = vadd.f32 %v1126, 0.5
  %v1135 = vadd.f32 %v1127, 0.5
  %v1136 = vadd.f32 %v1128, 0.5
  %v1137 = vtanh.pop %v1032
  %v1138 = vtanh.pop %v1033
  %v1139 = vtanh.pop %v1034
  %v1140 = vtanh.pop %v1035
  %v1141 = vtanh.pop %v1036
  %v1142 = vtanh.pop %v1037
  %v1143 = vtanh.pop %v1038
  %v1144 = vtanh.pop %v1039
  %v1145 = vmul.f32 %v1129, %v1137
  %v1146 = vmul.f32 %v1130, %v1138
  %v1147 = vmul.f32 %v1131, %v1139
  %v1148 = vmul.f32 %v1132, %v1140
  %v1149 = vmul.f32 %v1133, %v1141
  %v1150 = vmul.f32 %v1134, %v1142
  %v1151 = vmul.f32 %v1135, %v1143
  %v1152 = vmul.f32 %v1136, %v1144
  %1153 = vst [vmem:[%s4 + $0x1] sm:$0x1] %v1145
  %1154 = vst [vmem:[%s4 + $0x9] sm:$0x1] %v1146
  %1155 = vst [vmem:[%s4 + $0x11] sm:$0x1] %v1147
  %1156 = vst [vmem:[%s4 + $0x19] sm:$0x1] %v1148
  %1157 = vst [vmem:[%s4 + $0x21] sm:$0x1] %v1149
  %1158 = vst [vmem:[%s4 + $0x29] sm:$0x1] %v1150
  %1159 = vst [vmem:[%s4 + $0x31] sm:$0x1] %v1151
  %1160 = vst [vmem:[%s4 + $0x39] sm:$0x1] %v1152
  %s1161 = scalar_lea.vmem %s0, 2
  %v1162 = vld [vmem:[%s1161] ss:$8 sm:$0xf]
  %s1163 = scalar_lea.vmem %s0, 34
  %v1164 = vld [vmem:[%s1163] ss:$8 sm:$0xf]
  %s1165 = scalar_lea.vmem %s0, 66
  %v1166 = vld [vmem:[%s1165] ss:$8 sm:$0xf]
  %s1167 = scalar_lea.vmem %s0, 98
  %v1168 = vld [vmem:[%s1167] ss:$8 sm:$0xf]
  %s1169 = scalar_lea.vmem %s0, 130
  %v1170 = vld [vmem:[%s1169] ss:$8 sm:$0xf]
  %s1171 = scalar_lea.vmem %s0, 162
  %v1172 = vld [vmem:[%s1171] ss:$8 sm:$0xf]
  %s1173 = scalar_lea.vmem %s0, 194
  %v1174 = vld [vmem:[%s1173] ss:$8 sm:$0xf]
  %s1175 = scalar_lea.vmem %s0, 226
  %v1176 = vld [vmem:[%s1175] ss:$8 sm:$0xf]
  %v1177 = vadd.f32 %v1162, %v127
  %v1178 = vadd.f32 %v1164, %v134
  %v1179 = vadd.f32 %v1166, %v140
  %v1180 = vadd.f32 %v1168, %v146
  %v1181 = vadd.f32 %v1170, %v152
  %v1182 = vadd.f32 %v1172, %v158
  %v1183 = vadd.f32 %v1174, %v163
  %v1184 = vadd.f32 %v1176, %v168
  %1193 = vst [vmem:[#allocation1] ss:$9 sm:$0xff] %v1145
  %s1194 = scalar_lea.vmem [#allocation1], 1
  %1195 = vst [vmem:[%s1194] ss:$9 sm:$0xff] %v1146
  %s1196 = scalar_lea.vmem [#allocation1], 2
  %1197 = vst [vmem:[%s1196] ss:$9 sm:$0xff] %v1147
  %s1198 = scalar_lea.vmem [#allocation1], 3
  %1199 = vst [vmem:[%s1198] ss:$9 sm:$0xff] %v1148
  %s1200 = scalar_lea.vmem [#allocation1], 4
  %1201 = vst [vmem:[%s1200] ss:$9 sm:$0xff] %v1149
  %s1202 = scalar_lea.vmem [#allocation1], 5
  %1203 = vst [vmem:[%s1202] ss:$9 sm:$0xff] %v1150
  %s1204 = scalar_lea.vmem [#allocation1], 6
  %1205 = vst [vmem:[%s1204] ss:$9 sm:$0xff] %v1151
  %s1206 = scalar_lea.vmem [#allocation1], 7
  %1207 = vst [vmem:[%s1206] ss:$9 sm:$0xff] %v1152
  %v1208 = vld [vmem:[#allocation1] sm:$0xff]
  %1210 = vmatpush.msra.mxu0 %v86
  %1211 = vmatpush.msra.mxu0 %v82
  %1212 = vmatpush.msra.mxu0 %v78
  %1213 = vmatpush.msra.mxu0 %v74
  %1214 = vmatpush.msra.mxu0 %v70
  %1215 = vmatpush.msra.mxu0 %v66
  %1216 = vmatpush.msra.mxu0 %v62
  %1217 = vmatpush.msra.mxu0 %v58
  %1218 = vmatpush.msra.mxu0 %v54
  %1219 = vmatpush.msra.mxu0 %v50
  %1220 = vmatpush.msra.mxu0 %v46
  %1221 = vmatpush.msra.mxu0 %v42
  %1222 = vmatpush.msra.mxu0 %v38
  %1223 = vmatpush.msra.mxu0 %v34
  %1224 = vmatpush.msra.mxu0 %v30
  %1225 = vmatpush.msra.mxu0 %v26
  %1226 = vmatmul.f32.gmra.mxu0 %v1208
  %v1227 = vpop.f32.mrf.mxu0
  %v1228 = vadd.f32 0.0, %v1227
  %1229 = vdwg.mxu0
  %1230 = vmatpush.msra.mxu0 %v87
  %1231 = vmatpush.msra.mxu0 %v83
  %1232 = vmatpush.msra.mxu0 %v79
  %1233 = vmatpush.msra.mxu0 %v75
  %1234 = vmatpush.msra.mxu0 %v71
  %1235 = vmatpush.msra.mxu0 %v67
  %1236 = vmatpush.msra.mxu0 %v63
  %1237 = vmatpush.msra.mxu0 %v59
  %1238 = vmatpush.msra.mxu0 %v55
  %1239 = vmatpush.msra.mxu0 %v51
  %1240 = vmatpush.msra.mxu0 %v47
  %1241 = vmatpush.msra.mxu0 %v43
  %1242 = vmatpush.msra.mxu0 %v39
  %1243 = vmatpush.msra.mxu0 %v35
  %1244 = vmatpush.msra.mxu0 %v31
  %1245 = vmatpush.msra.mxu0 %v27
  %1246 = vmatmul.f32.gmra.mxu0 %v1208
  %v1247 = vpop.f32.mrf.mxu0
  %v1248 = vadd.f32 0.0, %v1247
  %1249 = vdwg.mxu0
  %1250 = vmatpush.msra.mxu0 %v88
  %1251 = vmatpush.msra.mxu0 %v84
  %1252 = vmatpush.msra.mxu0 %v80
  %1253 = vmatpush.msra.mxu0 %v76
  %1254 = vmatpush.msra.mxu0 %v72
  %1255 = vmatpush.msra.mxu0 %v68
  %1256 = vmatpush.msra.mxu0 %v64
  %1257 = vmatpush.msra.mxu0 %v60
  %1258 = vmatpush.msra.mxu0 %v56
  %1259 = vmatpush.msra.mxu0 %v52
  %1260 = vmatpush.msra.mxu0 %v48
  %1261 = vmatpush.msra.mxu0 %v44
  %1262 = vmatpush.msra.mxu0 %v40
  %1263 = vmatpush.msra.mxu0 %v36
  %1264 = vmatpush.msra.mxu0 %v32
  %1265 = vmatpush.msra.mxu0 %v28
  %1266 = vmatmul.f32.gmra.mxu0 %v1208
  %v1267 = vpop.f32.mrf.mxu0
  %v1268 = vadd.f32 0.0, %v1267
  %1269 = vdwg.mxu0
  %1270 = vmatpush.msra.mxu0 %v89
  %1271 = vmatpush.msra.mxu0 %v85
  %1272 = vmatpush.msra.mxu0 %v81
  %1273 = vmatpush.msra.mxu0 %v77
  %1274 = vmatpush.msra.mxu0 %v73
  %1275 = vmatpush.msra.mxu0 %v69
  %1276 = vmatpush.msra.mxu0 %v65
  %1277 = vmatpush.msra.mxu0 %v61
  %1278 = vmatpush.msra.mxu0 %v57
  %1279 = vmatpush.msra.mxu0 %v53
  %1280 = vmatpush.msra.mxu0 %v49
  %1281 = vmatpush.msra.mxu0 %v45
  %1282 = vmatpush.msra.mxu0 %v41
  %1283 = vmatpush.msra.mxu0 %v37
  %1284 = vmatpush.msra.mxu0 %v33
  %1285 = vmatpush.msra.mxu0 %v29
  %1286 = vmatmul.f32.gmra.mxu0 %v1208
  %v1287 = vpop.f32.mrf.mxu0
  %v1288 = vadd.f32 0.0, %v1287
  %1289 = vdwg.mxu0
  %v1294 = vrot.slane %v1248, 7
  %v1295 = vrot.slane %v1268, 6
  %v1296 = vrot.slane %v1288, 5
  %v1297 = vsel %vm122, %v1228, %v1294
  %v1298 = vsel %vm124, %v1295, %v1296
  %v1299 = vsel %vm126, %v1297, %v1298
  %v1300 = vsel %vm128, %v1228, %v1294
  %v1301 = vsel %vm130, %v1295, %v1296
  %v1302 = vsel %vm132, %v1300, %v1301
  %v1303 = vrot.slane %v1302, 1
  %v1304 = vsel %vm124, %v1228, %v1294
  %v1305 = vsel %vm136, %v1295, %v1296
  %v1306 = vsel %vm138, %v1304, %v1305
  %v1307 = vrot.slane %v1306, 2
  %v1308 = vsel %vm130, %v1228, %v1294
  %v1309 = vsel %vm142, %v1295, %v1296
  %v1310 = vsel %vm144, %v1308, %v1309
  %v1311 = vrot.slane %v1310, 3
  %v1312 = vsel %vm136, %v1228, %v1294
  %v1313 = vsel %vm148, %v1295, %v1296
  %v1314 = vsel %vm150, %v1312, %v1313
  %v1315 = vrot.slane %v1314, 4
  %v1316 = vsel %vm142, %v1228, %v1294
  %v1317 = vsel %vm154, %v1296, %v1295
  %v1318 = vsel %vm156, %v1316, %v1317
  %v1319 = vrot.slane %v1318, 5
  %v1320 = vsel %vm148, %v1228, %v1294
  %v1321 = vsel %vm122, %v1295, %v1296
  %v1322 = vsel %vm161, %v1321, %v1320
  %v1323 = vrot.slane %v1322, 6
  %v1324 = vsel %vm154, %v1294, %v1228
  %v1325 = vsel %vm128, %v1295, %v1296
  %v1326 = vsel %vm166, %v1325, %v1324
  %v1327 = vrot.slane %v1326, 7
  %v1336 = vadd.f32 %v1177, %v1299
  %v1337 = vadd.f32 %v1178, %v1303
  %v1338 = vadd.f32 %v1179, %v1307
  %v1339 = vadd.f32 %v1180, %v1311
  %v1340 = vadd.f32 %v1181, %v1315
  %v1341 = vadd.f32 %v1182, %v1319
  %v1342 = vadd.f32 %v1183, %v1323
  %v1343 = vadd.f32 %v1184, %v1327
  %1344 = vst [vmem:[#allocation1] ss:$9 sm:$0xff] %v1032
  %s1345 = scalar_lea.vmem [#allocation1], 1
  %1346 = vst [vmem:[%s1345] ss:$9 sm:$0xff] %v1033
  %s1347 = scalar_lea.vmem [#allocation1], 2
  %1348 = vst [vmem:[%s1347] ss:$9 sm:$0xff] %v1034
  %s1349 = scalar_lea.vmem [#allocation1], 3
  %1350 = vst [vmem:[%s1349] ss:$9 sm:$0xff] %v1035
  %s1351 = scalar_lea.vmem [#allocation1], 4
  %1352 = vst [vmem:[%s1351] ss:$9 sm:$0xff] %v1036
  %s1353 = scalar_lea.vmem [#allocation1], 5
  %1354 = vst [vmem:[%s1353] ss:$9 sm:$0xff] %v1037
  %s1355 = scalar_lea.vmem [#allocation1], 6
  %1356 = vst [vmem:[%s1355] ss:$9 sm:$0xff] %v1038
  %s1357 = scalar_lea.vmem [#allocation1], 7
  %1358 = vst [vmem:[%s1357] ss:$9 sm:$0xff] %v1039
  %v1359 = vld [vmem:[#allocation1] sm:$0xff]
  %v1361 = vmul.f32 %v97, %v1359
  %v1363 = vrot.slane %v1361, 1
  %v1364 = vrot.slane %v1361, 2
  %v1365 = vrot.slane %v1361, 3
  %v1366 = vrot.slane %v1361, 4
  %v1367 = vrot.slane %v1361, 5
  %v1368 = vrot.slane %v1361, 6
  %v1369 = vrot.slane %v1361, 7
  %v1377 = vadd.f32 %v1336, %v1361
  %v1378 = vadd.f32 %v1337, %v1363
  %v1379 = vadd.f32 %v1338, %v1364
  %v1380 = vadd.f32 %v1339, %v1365
  %v1381 = vadd.f32 %v1340, %v1366
  %v1382 = vadd.f32 %v1341, %v1367
  %v1383 = vadd.f32 %v1342, %v1368
  %v1384 = vadd.f32 %v1343, %v1369
  %v1385 = vmul.f32 %v1377, 0.5
  %v1386 = vmul.f32 %v1378, 0.5
  %v1387 = vmul.f32 %v1379, 0.5
  %v1388 = vmul.f32 %v1380, 0.5
  %v1389 = vmul.f32 %v1381, 0.5
  %v1390 = vmul.f32 %v1382, 0.5
  %v1391 = vmul.f32 %v1383, 0.5
  %v1392 = vmul.f32 %v1384, 0.5
  %v1393 = vtanh.pop %v1385
  %v1394 = vtanh.pop %v1386
  %v1395 = vtanh.pop %v1387
  %v1396 = vtanh.pop %v1388
  %v1397 = vtanh.pop %v1389
  %v1398 = vtanh.pop %v1390
  %v1399 = vtanh.pop %v1391
  %v1400 = vtanh.pop %v1392
  %v1401 = vmul.f32 %v1393, 0.5
  %v1402 = vmul.f32 %v1394, 0.5
  %v1403 = vmul.f32 %v1395, 0.5
  %v1404 = vmul.f32 %v1396, 0.5
  %v1405 = vmul.f32 %v1397, 0.5
  %v1406 = vmul.f32 %v1398, 0.5
  %v1407 = vmul.f32 %v1399, 0.5
  %v1408 = vmul.f32 %v1400, 0.5
  %v1409 = vadd.f32 %v1401, 0.5
  %v1410 = vadd.f32 %v1402, 0.5
  %v1411 = vadd.f32 %v1403, 0.5
  %v1412 = vadd.f32 %v1404, 0.5
  %v1413 = vadd.f32 %v1405, 0.5
  %v1414 = vadd.f32 %v1406, 0.5
  %v1415 = vadd.f32 %v1407, 0.5
  %v1416 = vadd.f32 %v1408, 0.5
  %1417 = vst [vmem:[#allocation1] ss:$9 sm:$0xff] %v1032
  %s1418 = scalar_lea.vmem [#allocation1], 1
  %1419 = vst [vmem:[%s1418] ss:$9 sm:$0xff] %v1033
  %s1420 = scalar_lea.vmem [#allocation1], 2
  %1421 = vst [vmem:[%s1420] ss:$9 sm:$0xff] %v1034
  %s1422 = scalar_lea.vmem [#allocation1], 3
  %1423 = vst [vmem:[%s1422] ss:$9 sm:$0xff] %v1035
  %s1424 = scalar_lea.vmem [#allocation1], 4
  %1425 = vst [vmem:[%s1424] ss:$9 sm:$0xff] %v1036
  %s1426 = scalar_lea.vmem [#allocation1], 5
  %1427 = vst [vmem:[%s1426] ss:$9 sm:$0xff] %v1037
  %s1428 = scalar_lea.vmem [#allocation1], 6
  %1429 = vst [vmem:[%s1428] ss:$9 sm:$0xff] %v1038
  %s1430 = scalar_lea.vmem [#allocation1], 7
  %1431 = vst [vmem:[%s1430] ss:$9 sm:$0xff] %v1039
  %v1432 = vld [vmem:[#allocation1] sm:$0xff]
  %v1434 = vmul.f32 %v99, %v1432
  %v1443 = vrot.slane %v1336, 1
  %v1444 = vrot.slane %v1337, 1
  %v1445 = vrot.slane %v1338, 1
  %v1446 = vrot.slane %v1339, 1
  %v1447 = vrot.slane %v1340, 1
  %v1448 = vrot.slane %v1341, 1
  %v1449 = vrot.slane %v1342, 1
  %v1450 = vrot.slane %v1343, 1
  %v1460 = vrot.slane %v1434, 1
  %v1461 = vrot.slane %v1434, 2
  %v1462 = vrot.slane %v1434, 3
  %v1463 = vrot.slane %v1434, 4
  %v1464 = vrot.slane %v1434, 5
  %v1465 = vrot.slane %v1434, 6
  %v1466 = vrot.slane %v1434, 7
  %v1474 = vadd.f32 %v1443, %v1434
  %v1475 = vadd.f32 %v1444, %v1460
  %v1476 = vadd.f32 %v1445, %v1461
  %v1477 = vadd.f32 %v1446, %v1462
  %v1478 = vadd.f32 %v1447, %v1463
  %v1479 = vadd.f32 %v1448, %v1464
  %v1480 = vadd.f32 %v1449, %v1465
  %v1481 = vadd.f32 %v1450, %v1466
  %v1482 = vmul.f32 %v1474, 0.5
  %v1483 = vmul.f32 %v1475, 0.5
  %v1484 = vmul.f32 %v1476, 0.5
  %v1485 = vmul.f32 %v1477, 0.5
  %v1486 = vmul.f32 %v1478, 0.5
  %v1487 = vmul.f32 %v1479, 0.5
  %v1488 = vmul.f32 %v1480, 0.5
  %v1489 = vmul.f32 %v1481, 0.5
  %v1490 = vtanh.pop %v1482
  %v1491 = vtanh.pop %v1483
  %v1492 = vtanh.pop %v1484
  %v1493 = vtanh.pop %v1485
  %v1494 = vtanh.pop %v1486
  %v1495 = vtanh.pop %v1487
  %v1496 = vtanh.pop %v1488
  %v1497 = vtanh.pop %v1489
  %v1498 = vmul.f32 %v1490, 0.5
  %v1499 = vmul.f32 %v1491, 0.5
  %v1500 = vmul.f32 %v1492, 0.5
  %v1501 = vmul.f32 %v1493, 0.5
  %v1502 = vmul.f32 %v1494, 0.5
  %v1503 = vmul.f32 %v1495, 0.5
  %v1504 = vmul.f32 %v1496, 0.5
  %v1505 = vmul.f32 %v1497, 0.5
  %v1506 = vadd.f32 %v1498, 0.5
  %v1507 = vadd.f32 %v1499, 0.5
  %v1508 = vadd.f32 %v1500, 0.5
  %v1509 = vadd.f32 %v1501, 0.5
  %v1510 = vadd.f32 %v1502, 0.5
  %v1511 = vadd.f32 %v1503, 0.5
  %v1512 = vadd.f32 %v1504, 0.5
  %v1513 = vadd.f32 %v1505, 0.5
  %v1514 = vrot.slane %v1336, 2
  %v1515 = vrot.slane %v1337, 2
  %v1516 = vrot.slane %v1338, 2
  %v1517 = vrot.slane %v1339, 2
  %v1518 = vrot.slane %v1340, 2
  %v1519 = vrot.slane %v1341, 2
  %v1520 = vrot.slane %v1342, 2
  %v1521 = vrot.slane %v1343, 2
  %v1530 = vtanh.pop %v1514
  %v1531 = vtanh.pop %v1515
  %v1532 = vtanh.pop %v1516
  %v1533 = vtanh.pop %v1517
  %v1534 = vtanh.pop %v1518
  %v1535 = vtanh.pop %v1519
  %v1536 = vtanh.pop %v1520
  %v1537 = vtanh.pop %v1521
  %v1538 = vmul.f32 %v1506, %v1032
  %v1539 = vmul.f32 %v1507, %v1033
  %v1540 = vmul.f32 %v1508, %v1034
  %v1541 = vmul.f32 %v1509, %v1035
  %v1542 = vmul.f32 %v1510, %v1036
  %v1543 = vmul.f32 %v1511, %v1037
  %v1544 = vmul.f32 %v1512, %v1038
  %v1545 = vmul.f32 %v1513, %v1039
  %v1546 = vmul.f32 %v1409, %v1530
  %v1547 = vmul.f32 %v1410, %v1531
  %v1548 = vmul.f32 %v1411, %v1532
  %v1549 = vmul.f32 %v1412, %v1533
  %v1550 = vmul.f32 %v1413, %v1534
  %v1551 = vmul.f32 %v1414, %v1535
  %v1552 = vmul.f32 %v1415, %v1536
  %v1553 = vmul.f32 %v1416, %v1537
  %v1554 = vadd.f32 %v1538, %v1546
  %v1555 = vadd.f32 %v1539, %v1547
  %v1556 = vadd.f32 %v1540, %v1548
  %v1557 = vadd.f32 %v1541, %v1549
  %v1558 = vadd.f32 %v1542, %v1550
  %v1559 = vadd.f32 %v1543, %v1551
  %v1560 = vadd.f32 %v1544, %v1552
  %v1561 = vadd.f32 %v1545, %v1553
  %1570 = vst [vmem:[#allocation1] ss:$9 sm:$0xff] %v1554
  %s1571 = scalar_lea.vmem [#allocation1], 1
  %1572 = vst [vmem:[%s1571] ss:$9 sm:$0xff] %v1555
  %s1573 = scalar_lea.vmem [#allocation1], 2
  %1574 = vst [vmem:[%s1573] ss:$9 sm:$0xff] %v1556
  %s1575 = scalar_lea.vmem [#allocation1], 3
  %1576 = vst [vmem:[%s1575] ss:$9 sm:$0xff] %v1557
  %s1577 = scalar_lea.vmem [#allocation1], 4
  %1578 = vst [vmem:[%s1577] ss:$9 sm:$0xff] %v1558
  %s1579 = scalar_lea.vmem [#allocation1], 5
  %1580 = vst [vmem:[%s1579] ss:$9 sm:$0xff] %v1559
  %s1581 = scalar_lea.vmem [#allocation1], 6
  %1582 = vst [vmem:[%s1581] ss:$9 sm:$0xff] %v1560
  %s1583 = scalar_lea.vmem [#allocation1], 7
  %1584 = vst [vmem:[%s1583] ss:$9 sm:$0xff] %v1561
  %v1585 = vld [vmem:[#allocation1] sm:$0xff]
  %v1587 = vmul.f32 %v101, %v1585
  %v1588 = vrot.slane %v1336, 3
  %v1589 = vrot.slane %v1337, 3
  %v1590 = vrot.slane %v1338, 3
  %v1591 = vrot.slane %v1339, 3
  %v1592 = vrot.slane %v1340, 3
  %v1593 = vrot.slane %v1341, 3
  %v1594 = vrot.slane %v1342, 3
  %v1595 = vrot.slane %v1343, 3
  %v1605 = vrot.slane %v1587, 1
  %v1606 = vrot.slane %v1587, 2
  %v1607 = vrot.slane %v1587, 3
  %v1608 = vrot.slane %v1587, 4
  %v1609 = vrot.slane %v1587, 5
  %v1610 = vrot.slane %v1587, 6
  %v1611 = vrot.slane %v1587, 7
  %v1619 = vadd.f32 %v1588, %v1587
  %v1620 = vadd.f32 %v1589, %v1605
  %v1621 = vadd.f32 %v1590, %v1606
  %v1622 = vadd.f32 %v1591, %v1607
  %v1623 = vadd.f32 %v1592, %v1608
  %v1624 = vadd.f32 %v1593, %v1609
  %v1625 = vadd.f32 %v1594, %v1610
  %v1626 = vadd.f32 %v1595, %v1611
  %v1627 = vmul.f32 %v1619, 0.5
  %v1628 = vmul.f32 %v1620, 0.5
  %v1629 = vmul.f32 %v1621, 0.5
  %v1630 = vmul.f32 %v1622, 0.5
  %v1631 = vmul.f32 %v1623, 0.5
  %v1632 = vmul.f32 %v1624, 0.5
  %v1633 = vmul.f32 %v1625, 0.5
  %v1634 = vmul.f32 %v1626, 0.5
  %v1635 = vtanh.pop %v1627
  %v1636 = vtanh.pop %v1628
  %v1637 = vtanh.pop %v1629
  %v1638 = vtanh.pop %v1630
  %v1639 = vtanh.pop %v1631
  %v1640 = vtanh.pop %v1632
  %v1641 = vtanh.pop %v1633
  %v1642 = vtanh.pop %v1634
  %v1643 = vmul.f32 %v1635, 0.5
  %v1644 = vmul.f32 %v1636, 0.5
  %v1645 = vmul.f32 %v1637, 0.5
  %v1646 = vmul.f32 %v1638, 0.5
  %v1647 = vmul.f32 %v1639, 0.5
  %v1648 = vmul.f32 %v1640, 0.5
  %v1649 = vmul.f32 %v1641, 0.5
  %v1650 = vmul.f32 %v1642, 0.5
  %v1651 = vadd.f32 %v1643, 0.5
  %v1652 = vadd.f32 %v1644, 0.5
  %v1653 = vadd.f32 %v1645, 0.5
  %v1654 = vadd.f32 %v1646, 0.5
  %v1655 = vadd.f32 %v1647, 0.5
  %v1656 = vadd.f32 %v1648, 0.5
  %v1657 = vadd.f32 %v1649, 0.5
  %v1658 = vadd.f32 %v1650, 0.5
  %v1659 = vtanh.pop %v1554
  %v1660 = vtanh.pop %v1555
  %v1661 = vtanh.pop %v1556
  %v1662 = vtanh.pop %v1557
  %v1663 = vtanh.pop %v1558
  %v1664 = vtanh.pop %v1559
  %v1665 = vtanh.pop %v1560
  %v1666 = vtanh.pop %v1561
  %v1667 = vmul.f32 %v1651, %v1659
  %v1668 = vmul.f32 %v1652, %v1660
  %v1669 = vmul.f32 %v1653, %v1661
  %v1670 = vmul.f32 %v1654, %v1662
  %v1671 = vmul.f32 %v1655, %v1663
  %v1672 = vmul.f32 %v1656, %v1664
  %v1673 = vmul.f32 %v1657, %v1665
  %v1674 = vmul.f32 %v1658, %v1666
  %1675 = vst [vmem:[%s4 + $0x2] sm:$0x1] %v1667
  %1676 = vst [vmem:[%s4 + $0xa] sm:$0x1] %v1668
  %1677 = vst [vmem:[%s4 + $0x12] sm:$0x1] %v1669
  %1678 = vst [vmem:[%s4 + $0x1a] sm:$0x1] %v1670
  %1679 = vst [vmem:[%s4 + $0x22] sm:$0x1] %v1671
  %1680 = vst [vmem:[%s4 + $0x2a] sm:$0x1] %v1672
  %1681 = vst [vmem:[%s4 + $0x32] sm:$0x1] %v1673
  %1682 = vst [vmem:[%s4 + $0x3a] sm:$0x1] %v1674
  %s1683 = scalar_lea.vmem %s0, 3
  %v1684 = vld [vmem:[%s1683] ss:$8 sm:$0xf]
  %s1685 = scalar_lea.vmem %s0, 35
  %v1686 = vld [vmem:[%s1685] ss:$8 sm:$0xf]
  %s1687 = scalar_lea.vmem %s0, 67
  %v1688 = vld [vmem:[%s1687] ss:$8 sm:$0xf]
  %s1689 = scalar_lea.vmem %s0, 99
  %v1690 = vld [vmem:[%s1689] ss:$8 sm:$0xf]
  %s1691 = scalar_lea.vmem %s0, 131
  %v1692 = vld [vmem:[%s1691] ss:$8 sm:$0xf]
  %s1693 = scalar_lea.vmem %s0, 163
  %v1694 = vld [vmem:[%s1693] ss:$8 sm:$0xf]
  %s1695 = scalar_lea.vmem %s0, 195
  %v1696 = vld [vmem:[%s1695] ss:$8 sm:$0xf]
  %s1697 = scalar_lea.vmem %s0, 227
  %v1698 = vld [vmem:[%s1697] ss:$8 sm:$0xf]
  %v1699 = vadd.f32 %v1684, %v127
  %v1700 = vadd.f32 %v1686, %v134
  %v1701 = vadd.f32 %v1688, %v140
  %v1702 = vadd.f32 %v1690, %v146
  %v1703 = vadd.f32 %v1692, %v152
  %v1704 = vadd.f32 %v1694, %v158
  %v1705 = vadd.f32 %v1696, %v163
  %v1706 = vadd.f32 %v1698, %v168
  %1715 = vst [vmem:[#allocation1] ss:$9 sm:$0xff] %v1667
  %s1716 = scalar_lea.vmem [#allocation1], 1
  %1717 = vst [vmem:[%s1716] ss:$9 sm:$0xff] %v1668
  %s1718 = scalar_lea.vmem [#allocation1], 2
  %1719 = vst [vmem:[%s1718] ss:$9 sm:$0xff] %v1669
  %s1720 = scalar_lea.vmem [#allocation1], 3
  %1721 = vst [vmem:[%s1720] ss:$9 sm:$0xff] %v1670
  %s1722 = scalar_lea.vmem [#allocation1], 4
  %1723 = vst [vmem:[%s1722] ss:$9 sm:$0xff] %v1671
  %s1724 = scalar_lea.vmem [#allocation1], 5
  %1725 = vst [vmem:[%s1724] ss:$9 sm:$0xff] %v1672
  %s1726 = scalar_lea.vmem [#allocation1], 6
  %1727 = vst [vmem:[%s1726] ss:$9 sm:$0xff] %v1673
  %s1728 = scalar_lea.vmem [#allocation1], 7
  %1729 = vst [vmem:[%s1728] ss:$9 sm:$0xff] %v1674
  %v1730 = vld [vmem:[#allocation1] sm:$0xff]
  %1732 = vmatpush.msra.mxu0 %v86
  %1733 = vmatpush.msra.mxu0 %v82
  %1734 = vmatpush.msra.mxu0 %v78
  %1735 = vmatpush.msra.mxu0 %v74
  %1736 = vmatpush.msra.mxu0 %v70
  %1737 = vmatpush.msra.mxu0 %v66
  %1738 = vmatpush.msra.mxu0 %v62
  %1739 = vmatpush.msra.mxu0 %v58
  %1740 = vmatpush.msra.mxu0 %v54
  %1741 = vmatpush.msra.mxu0 %v50
  %1742 = vmatpush.msra.mxu0 %v46
  %1743 = vmatpush.msra.mxu0 %v42
  %1744 = vmatpush.msra.mxu0 %v38
  %1745 = vmatpush.msra.mxu0 %v34
  %1746 = vmatpush.msra.mxu0 %v30
  %1747 = vmatpush.msra.mxu0 %v26
  %1748 = vmatmul.f32.gmra.mxu0 %v1730
  %v1749 = vpop.f32.mrf.mxu0
  %v1750 = vadd.f32 0.0, %v1749
  %1751 = vdwg.mxu0
  %1752 = vmatpush.msra.mxu0 %v87
  %1753 = vmatpush.msra.mxu0 %v83
  %1754 = vmatpush.msra.mxu0 %v79
  %1755 = vmatpush.msra.mxu0 %v75
  %1756 = vmatpush.msra.mxu0 %v71
  %1757 = vmatpush.msra.mxu0 %v67
  %1758 = vmatpush.msra.mxu0 %v63
  %1759 = vmatpush.msra.mxu0 %v59
  %1760 = vmatpush.msra.mxu0 %v55
  %1761 = vmatpush.msra.mxu0 %v51
  %1762 = vmatpush.msra.mxu0 %v47
  %1763 = vmatpush.msra.mxu0 %v43
  %1764 = vmatpush.msra.mxu0 %v39
  %1765 = vmatpush.msra.mxu0 %v35
  %1766 = vmatpush.msra.mxu0 %v31
  %1767 = vmatpush.msra.mxu0 %v27
  %1768 = vmatmul.f32.gmra.mxu0 %v1730
  %v1769 = vpop.f32.mrf.mxu0
  %v1770 = vadd.f32 0.0, %v1769
  %1771 = vdwg.mxu0
  %1772 = vmatpush.msra.mxu0 %v88
  %1773 = vmatpush.msra.mxu0 %v84
  %1774 = vmatpush.msra.mxu0 %v80
  %1775 = vmatpush.msra.mxu0 %v76
  %1776 = vmatpush.msra.mxu0 %v72
  %1777 = vmatpush.msra.mxu0 %v68
  %1778 = vmatpush.msra.mxu0 %v64
  %1779 = vmatpush.msra.mxu0 %v60
  %1780 = vmatpush.msra.mxu0 %v56
  %1781 = vmatpush.msra.mxu0 %v52
  %1782 = vmatpush.msra.mxu0 %v48
  %1783 = vmatpush.msra.mxu0 %v44
  %1784 = vmatpush.msra.mxu0 %v40
  %1785 = vmatpush.msra.mxu0 %v36
  %1786 = vmatpush.msra.mxu0 %v32
  %1787 = vmatpush.msra.mxu0 %v28
  %1788 = vmatmul.f32.gmra.mxu0 %v1730
  %v1789 = vpop.f32.mrf.mxu0
  %v1790 = vadd.f32 0.0, %v1789
  %1791 = vdwg.mxu0
  %1792 = vmatpush.msra.mxu0 %v89
  %1793 = vmatpush.msra.mxu0 %v85
  %1794 = vmatpush.msra.mxu0 %v81
  %1795 = vmatpush.msra.mxu0 %v77
  %1796 = vmatpush.msra.mxu0 %v73
  %1797 = vmatpush.msra.mxu0 %v69
  %1798 = vmatpush.msra.mxu0 %v65
  %1799 = vmatpush.msra.mxu0 %v61
  %1800 = vmatpush.msra.mxu0 %v57
  %1801 = vmatpush.msra.mxu0 %v53
  %1802 = vmatpush.msra.mxu0 %v49
  %1803 = vmatpush.msra.mxu0 %v45
  %1804 = vmatpush.msra.mxu0 %v41
  %1805 = vmatpush.msra.mxu0 %v37
  %1806 = vmatpush.msra.mxu0 %v33
  %1807 = vmatpush.msra.mxu0 %v29
  %1808 = vmatmul.f32.gmra.mxu0 %v1730
  %v1809 = vpop.f32.mrf.mxu0
  %v1810 = vadd.f32 0.0, %v1809
  %1811 = vdwg.mxu0
  %v1816 = vrot.slane %v1770, 7
  %v1817 = vrot.slane %v1790, 6
  %v1818 = vrot.slane %v1810, 5
  %v1819 = vsel %vm122, %v1750, %v1816
  %v1820 = vsel %vm124, %v1817, %v1818
  %v1821 = vsel %vm126, %v1819, %v1820
  %v1822 = vsel %vm128, %v1750, %v1816
  %v1823 = vsel %vm130, %v1817, %v1818
  %v1824 = vsel %vm132, %v1822, %v1823
  %v1825 = vrot.slane %v1824, 1
  %v1826 = vsel %vm124, %v1750, %v1816
  %v1827 = vsel %vm136, %v1817, %v1818
  %v1828 = vsel %vm138, %v1826, %v1827
  %v1829 = vrot.slane %v1828, 2
  %v1830 = vsel %vm130, %v1750, %v1816
  %v1831 = vsel %vm142, %v1817, %v1818
  %v1832 = vsel %vm144, %v1830, %v1831
  %v1833 = vrot.slane %v1832, 3
  %v1834 = vsel %vm136, %v1750, %v1816
  %v1835 = vsel %vm148, %v1817, %v1818
  %v1836 = vsel %vm150, %v1834, %v1835
  %v1837 = vrot.slane %v1836, 4
  %v1838 = vsel %vm142, %v1750, %v1816
  %v1839 = vsel %vm154, %v1818, %v1817
  %v1840 = vsel %vm156, %v1838, %v1839
  %v1841 = vrot.slane %v1840, 5
  %v1842 = vsel %vm148, %v1750, %v1816
  %v1843 = vsel %vm122, %v1817, %v1818
  %v1844 = vsel %vm161, %v1843, %v1842
  %v1845 = vrot.slane %v1844, 6
  %v1846 = vsel %vm154, %v1816, %v1750
  %v1847 = vsel %vm128, %v1817, %v1818
  %v1848 = vsel %vm166, %v1847, %v1846
  %v1849 = vrot.slane %v1848, 7
  %v1858 = vadd.f32 %v1699, %v1821
  %v1859 = vadd.f32 %v1700, %v1825
  %v1860 = vadd.f32 %v1701, %v1829
  %v1861 = vadd.f32 %v1702, %v1833
  %v1862 = vadd.f32 %v1703, %v1837
  %v1863 = vadd.f32 %v1704, %v1841
  %v1864 = vadd.f32 %v1705, %v1845
  %v1865 = vadd.f32 %v1706, %v1849
  %1866 = vst [vmem:[#allocation1] ss:$9 sm:$0xff] %v1554
  %s1867 = scalar_lea.vmem [#allocation1], 1
  %1868 = vst [vmem:[%s1867] ss:$9 sm:$0xff] %v1555
  %s1869 = scalar_lea.vmem [#allocation1], 2
  %1870 = vst [vmem:[%s1869] ss:$9 sm:$0xff] %v1556
  %s1871 = scalar_lea.vmem [#allocation1], 3
  %1872 = vst [vmem:[%s1871] ss:$9 sm:$0xff] %v1557
  %s1873 = scalar_lea.vmem [#allocation1], 4
  %1874 = vst [vmem:[%s1873] ss:$9 sm:$0xff] %v1558
  %s1875 = scalar_lea.vmem [#allocation1], 5
  %1876 = vst [vmem:[%s1875] ss:$9 sm:$0xff] %v1559
  %s1877 = scalar_lea.vmem [#allocation1], 6
  %1878 = vst [vmem:[%s1877] ss:$9 sm:$0xff] %v1560
  %s1879 = scalar_lea.vmem [#allocation1], 7
  %1880 = vst [vmem:[%s1879] ss:$9 sm:$0xff] %v1561
  %v1881 = vld [vmem:[#allocation1] sm:$0xff]
  %v1883 = vmul.f32 %v97, %v1881
  %v1885 = vrot.slane %v1883, 1
  %v1886 = vrot.slane %v1883, 2
  %v1887 = vrot.slane %v1883, 3
  %v1888 = vrot.slane %v1883, 4
  %v1889 = vrot.slane %v1883, 5
  %v1890 = vrot.slane %v1883, 6
  %v1891 = vrot.slane %v1883, 7
  %v1899 = vadd.f32 %v1858, %v1883
  %v1900 = vadd.f32 %v1859, %v1885
  %v1901 = vadd.f32 %v1860, %v1886
  %v1902 = vadd.f32 %v1861, %v1887
  %v1903 = vadd.f32 %v1862, %v1888
  %v1904 = vadd.f32 %v1863, %v1889
  %v1905 = vadd.f32 %v1864, %v1890
  %v1906 = vadd.f32 %v1865, %v1891
  %v1907 = vmul.f32 %v1899, 0.5
  %v1908 = vmul.f32 %v1900, 0.5
  %v1909 = vmul.f32 %v1901, 0.5
  %v1910 = vmul.f32 %v1902, 0.5
  %v1911 = vmul.f32 %v1903, 0.5
  %v1912 = vmul.f32 %v1904, 0.5
  %v1913 = vmul.f32 %v1905, 0.5
  %v1914 = vmul.f32 %v1906, 0.5
  %v1915 = vtanh.pop %v1907
  %v1916 = vtanh.pop %v1908
  %v1917 = vtanh.pop %v1909
  %v1918 = vtanh.pop %v1910
  %v1919 = vtanh.pop %v1911
  %v1920 = vtanh.pop %v1912
  %v1921 = vtanh.pop %v1913
  %v1922 = vtanh.pop %v1914
  %v1923 = vmul.f32 %v1915, 0.5
  %v1924 = vmul.f32 %v1916, 0.5
  %v1925 = vmul.f32 %v1917, 0.5
  %v1926 = vmul.f32 %v1918, 0.5
  %v1927 = vmul.f32 %v1919, 0.5
  %v1928 = vmul.f32 %v1920, 0.5
  %v1929 = vmul.f32 %v1921, 0.5
  %v1930 = vmul.f32 %v1922, 0.5
  %v1931 = vadd.f32 %v1923, 0.5
  %v1932 = vadd.f32 %v1924, 0.5
  %v1933 = vadd.f32 %v1925, 0.5
  %v1934 = vadd.f32 %v1926, 0.5
  %v1935 = vadd.f32 %v1927, 0.5
  %v1936 = vadd.f32 %v1928, 0.5
  %v1937 = vadd.f32 %v1929, 0.5
  %v1938 = vadd.f32 %v1930, 0.5
  %1939 = vst [vmem:[#allocation1] ss:$9 sm:$0xff] %v1554
  %s1940 = scalar_lea.vmem [#allocation1], 1
  %1941 = vst [vmem:[%s1940] ss:$9 sm:$0xff] %v1555
  %s1942 = scalar_lea.vmem [#allocation1], 2
  %1943 = vst [vmem:[%s1942] ss:$9 sm:$0xff] %v1556
  %s1944 = scalar_lea.vmem [#allocation1], 3
  %1945 = vst [vmem:[%s1944] ss:$9 sm:$0xff] %v1557
  %s1946 = scalar_lea.vmem [#allocation1], 4
  %1947 = vst [vmem:[%s1946] ss:$9 sm:$0xff] %v1558
  %s1948 = scalar_lea.vmem [#allocation1], 5
  %1949 = vst [vmem:[%s1948] ss:$9 sm:$0xff] %v1559
  %s1950 = scalar_lea.vmem [#allocation1], 6
  %1951 = vst [vmem:[%s1950] ss:$9 sm:$0xff] %v1560
  %s1952 = scalar_lea.vmem [#allocation1], 7
  %1953 = vst [vmem:[%s1952] ss:$9 sm:$0xff] %v1561
  %v1954 = vld [vmem:[#allocation1] sm:$0xff]
  %v1956 = vmul.f32 %v99, %v1954
  %v1965 = vrot.slane %v1858, 1
  %v1966 = vrot.slane %v1859, 1
  %v1967 = vrot.slane %v1860, 1
  %v1968 = vrot.slane %v1861, 1
  %v1969 = vrot.slane %v1862, 1
  %v1970 = vrot.slane %v1863, 1
  %v1971 = vrot.slane %v1864, 1
  %v1972 = vrot.slane %v1865, 1
  %v1982 = vrot.slane %v1956, 1
  %v1983 = vrot.slane %v1956, 2
  %v1984 = vrot.slane %v1956, 3
  %v1985 = vrot.slane %v1956, 4
  %v1986 = vrot.slane %v1956, 5
  %v1987 = vrot.slane %v1956, 6
  %v1988 = vrot.slane %v1956, 7
  %v1996 = vadd.f32 %v1965, %v1956
  %v1997 = vadd.f32 %v1966, %v1982
  %v1998 = vadd.f32 %v1967, %v1983
  %v1999 = vadd.f32 %v1968, %v1984
  %v2000 = vadd.f32 %v1969, %v1985
  %v2001 = vadd.f32 %v1970, %v1986
  %v2002 = vadd.f32 %v1971, %v1987
  %v2003 = vadd.f32 %v1972, %v1988
  %v2004 = vmul.f32 %v1996, 0.5
  %v2005 = vmul.f32 %v1997, 0.5
  %v2006 = vmul.f32 %v1998, 0.5
  %v2007 = vmul.f32 %v1999, 0.5
  %v2008 = vmul.f32 %v2000, 0.5
  %v2009 = vmul.f32 %v2001, 0.5
  %v2010 = vmul.f32 %v2002, 0.5
  %v2011 = vmul.f32 %v2003, 0.5
  %v2012 = vtanh.pop %v2004
  %v2013 = vtanh.pop %v2005
  %v2014 = vtanh.pop %v2006
  %v2015 = vtanh.pop %v2007
  %v2016 = vtanh.pop %v2008
  %v2017 = vtanh.pop %v2009
  %v2018 = vtanh.pop %v2010
  %v2019 = vtanh.pop %v2011
  %v2020 = vmul.f32 %v2012, 0.5
  %v2021 = vmul.f32 %v2013, 0.5
  %v2022 = vmul.f32 %v2014, 0.5
  %v2023 = vmul.f32 %v2015, 0.5
  %v2024 = vmul.f32 %v2016, 0.5
  %v2025 = vmul.f32 %v2017, 0.5
  %v2026 = vmul.f32 %v2018, 0.5
  %v2027 = vmul.f32 %v2019, 0.5
  %v2028 = vadd.f32 %v2020, 0.5
  %v2029 = vadd.f32 %v2021, 0.5
  %v2030 = vadd.f32 %v2022, 0.5
  %v2031 = vadd.f32 %v2023, 0.5
  %v2032 = vadd.f32 %v2024, 0.5
  %v2033 = vadd.f32 %v2025, 0.5
  %v2034 = vadd.f32 %v2026, 0.5
  %v2035 = vadd.f32 %v2027, 0.5
  %v2036 = vrot.slane %v1858, 2
  %v2037 = vrot.slane %v1859, 2
  %v2038 = vrot.slane %v1860, 2
  %v2039 = vrot.slane %v1861, 2
  %v2040 = vrot.slane %v1862, 2
  %v2041 = vrot.slane %v1863, 2
  %v2042 = vrot.slane %v1864, 2
  %v2043 = vrot.slane %v1865, 2
  %v2052 = vtanh.pop %v2036
  %v2053 = vtanh.pop %v2037
  %v2054 = vtanh.pop %v2038
  %v2055 = vtanh.pop %v2039
  %v2056 = vtanh.pop %v2040
  %v2057 = vtanh.pop %v2041
  %v2058 = vtanh.pop %v2042
  %v2059 = vtanh.pop %v2043
  %v2060 = vmul.f32 %v2028, %v1554
  %v2061 = vmul.f32 %v2029, %v1555
  %v2062 = vmul.f32 %v2030, %v1556
  %v2063 = vmul.f32 %v2031, %v1557
  %v2064 = vmul.f32 %v2032, %v1558
  %v2065 = vmul.f32 %v2033, %v1559
  %v2066 = vmul.f32 %v2034, %v1560
  %v2067 = vmul.f32 %v2035, %v1561
  %v2068 = vmul.f32 %v1931, %v2052
  %v2069 = vmul.f32 %v1932, %v2053
  %v2070 = vmul.f32 %v1933, %v2054
  %v2071 = vmul.f32 %v1934, %v2055
  %v2072 = vmul.f32 %v1935, %v2056
  %v2073 = vmul.f32 %v1936, %v2057
  %v2074 = vmul.f32 %v1937, %v2058
  %v2075 = vmul.f32 %v1938, %v2059
  %v2076 = vadd.f32 %v2060, %v2068
  %v2077 = vadd.f32 %v2061, %v2069
  %v2078 = vadd.f32 %v2062, %v2070
  %v2079 = vadd.f32 %v2063, %v2071
  %v2080 = vadd.f32 %v2064, %v2072
  %v2081 = vadd.f32 %v2065, %v2073
  %v2082 = vadd.f32 %v2066, %v2074
  %v2083 = vadd.f32 %v2067, %v2075
  %2092 = vst [vmem:[#allocation1] ss:$9 sm:$0xff] %v2076
  %s2093 = scalar_lea.vmem [#allocation1], 1
  %2094 = vst [vmem:[%s2093] ss:$9 sm:$0xff] %v2077
  %s2095 = scalar_lea.vmem [#allocation1], 2
  %2096 = vst [vmem:[%s2095] ss:$9 sm:$0xff] %v2078
  %s2097 = scalar_lea.vmem [#allocation1], 3
  %2098 = vst [vmem:[%s2097] ss:$9 sm:$0xff] %v2079
  %s2099 = scalar_lea.vmem [#allocation1], 4
  %2100 = vst [vmem:[%s2099] ss:$9 sm:$0xff] %v2080
  %s2101 = scalar_lea.vmem [#allocation1], 5
  %2102 = vst [vmem:[%s2101] ss:$9 sm:$0xff] %v2081
  %s2103 = scalar_lea.vmem [#allocation1], 6
  %2104 = vst [vmem:[%s2103] ss:$9 sm:$0xff] %v2082
  %s2105 = scalar_lea.vmem [#allocation1], 7
  %2106 = vst [vmem:[%s2105] ss:$9 sm:$0xff] %v2083
  %v2107 = vld [vmem:[#allocation1] sm:$0xff]
  %v2109 = vmul.f32 %v101, %v2107
  %v2110 = vrot.slane %v1858, 3
  %v2111 = vrot.slane %v1859, 3
  %v2112 = vrot.slane %v1860, 3
  %v2113 = vrot.slane %v1861, 3
  %v2114 = vrot.slane %v1862, 3
  %v2115 = vrot.slane %v1863, 3
  %v2116 = vrot.slane %v1864, 3
  %v2117 = vrot.slane %v1865, 3
  %v2127 = vrot.slane %v2109, 1
  %v2128 = vrot.slane %v2109, 2
  %v2129 = vrot.slane %v2109, 3
  %v2130 = vrot.slane %v2109, 4
  %v2131 = vrot.slane %v2109, 5
  %v2132 = vrot.slane %v2109, 6
  %v2133 = vrot.slane %v2109, 7
  %v2141 = vadd.f32 %v2110, %v2109
  %v2142 = vadd.f32 %v2111, %v2127
  %v2143 = vadd.f32 %v2112, %v2128
  %v2144 = vadd.f32 %v2113, %v2129
  %v2145 = vadd.f32 %v2114, %v2130
  %v2146 = vadd.f32 %v2115, %v2131
  %v2147 = vadd.f32 %v2116, %v2132
  %v2148 = vadd.f32 %v2117, %v2133
  %v2149 = vmul.f32 %v2141, 0.5
  %v2150 = vmul.f32 %v2142, 0.5
  %v2151 = vmul.f32 %v2143, 0.5
  %v2152 = vmul.f32 %v2144, 0.5
  %v2153 = vmul.f32 %v2145, 0.5
  %v2154 = vmul.f32 %v2146, 0.5
  %v2155 = vmul.f32 %v2147, 0.5
  %v2156 = vmul.f32 %v2148, 0.5
  %v2157 = vtanh.pop %v2149
  %v2158 = vtanh.pop %v2150
  %v2159 = vtanh.pop %v2151
  %v2160 = vtanh.pop %v2152
  %v2161 = vtanh.pop %v2153
  %v2162 = vtanh.pop %v2154
  %v2163 = vtanh.pop %v2155
  %v2164 = vtanh.pop %v2156
  %v2165 = vmul.f32 %v2157, 0.5
  %v2166 = vmul.f32 %v2158, 0.5
  %v2167 = vmul.f32 %v2159, 0.5
  %v2168 = vmul.f32 %v2160, 0.5
  %v2169 = vmul.f32 %v2161, 0.5
  %v2170 = vmul.f32 %v2162, 0.5
  %v2171 = vmul.f32 %v2163, 0.5
  %v2172 = vmul.f32 %v2164, 0.5
  %v2173 = vadd.f32 %v2165, 0.5
  %v2174 = vadd.f32 %v2166, 0.5
  %v2175 = vadd.f32 %v2167, 0.5
  %v2176 = vadd.f32 %v2168, 0.5
  %v2177 = vadd.f32 %v2169, 0.5
  %v2178 = vadd.f32 %v2170, 0.5
  %v2179 = vadd.f32 %v2171, 0.5
  %v2180 = vadd.f32 %v2172, 0.5
  %v2181 = vtanh.pop %v2076
  %v2182 = vtanh.pop %v2077
  %v2183 = vtanh.pop %v2078
  %v2184 = vtanh.pop %v2079
  %v2185 = vtanh.pop %v2080
  %v2186 = vtanh.pop %v2081
  %v2187 = vtanh.pop %v2082
  %v2188 = vtanh.pop %v2083
  %v2189 = vmul.f32 %v2173, %v2181
  %v2190 = vmul.f32 %v2174, %v2182
  %v2191 = vmul.f32 %v2175, %v2183
  %v2192 = vmul.f32 %v2176, %v2184
  %v2193 = vmul.f32 %v2177, %v2185
  %v2194 = vmul.f32 %v2178, %v2186
  %v2195 = vmul.f32 %v2179, %v2187
  %v2196 = vmul.f32 %v2180, %v2188
  %2197 = vst [vmem:[%s4 + $0x3] sm:$0x1] %v2189
  %2198 = vst [vmem:[%s4 + $0xb] sm:$0x1] %v2190
  %2199 = vst [vmem:[%s4 + $0x13] sm:$0x1] %v2191
  %2200 = vst [vmem:[%s4 + $0x1b] sm:$0x1] %v2192
  %2201 = vst [vmem:[%s4 + $0x23] sm:$0x1] %v2193
  %2202 = vst [vmem:[%s4 + $0x2b] sm:$0x1] %v2194
  %2203 = vst [vmem:[%s4 + $0x33] sm:$0x1] %v2195
  %2204 = vst [vmem:[%s4 + $0x3b] sm:$0x1] %v2196
  %s2205 = scalar_lea.vmem %s0, 4
  %v2206 = vld [vmem:[%s2205] ss:$8 sm:$0xf]
  %s2207 = scalar_lea.vmem %s0, 36
  %v2208 = vld [vmem:[%s2207] ss:$8 sm:$0xf]
  %s2209 = scalar_lea.vmem %s0, 68
  %v2210 = vld [vmem:[%s2209] ss:$8 sm:$0xf]
  %s2211 = scalar_lea.vmem %s0, 100
  %v2212 = vld [vmem:[%s2211] ss:$8 sm:$0xf]
  %s2213 = scalar_lea.vmem %s0, 132
  %v2214 = vld [vmem:[%s2213] ss:$8 sm:$0xf]
  %s2215 = scalar_lea.vmem %s0, 164
  %v2216 = vld [vmem:[%s2215] ss:$8 sm:$0xf]
  %s2217 = scalar_lea.vmem %s0, 196
  %v2218 = vld [vmem:[%s2217] ss:$8 sm:$0xf]
  %s2219 = scalar_lea.vmem %s0, 228
  %v2220 = vld [vmem:[%s2219] ss:$8 sm:$0xf]
  %v2221 = vadd.f32 %v2206, %v127
  %v2222 = vadd.f32 %v2208, %v134
  %v2223 = vadd.f32 %v2210, %v140
  %v2224 = vadd.f32 %v2212, %v146
  %v2225 = vadd.f32 %v2214, %v152
  %v2226 = vadd.f32 %v2216, %v158
  %v2227 = vadd.f32 %v2218, %v163
  %v2228 = vadd.f32 %v2220, %v168
  %2237 = vst [vmem:[#allocation1] ss:$9 sm:$0xff] %v2189
  %s2238 = scalar_lea.vmem [#allocation1], 1
  %2239 = vst [vmem:[%s2238] ss:$9 sm:$0xff] %v2190
  %s2240 = scalar_lea.vmem [#allocation1], 2
  %2241 = vst [vmem:[%s2240] ss:$9 sm:$0xff] %v2191
  %s2242 = scalar_lea.vmem [#allocation1], 3
  %2243 = vst [vmem:[%s2242] ss:$9 sm:$0xff] %v2192
  %s2244 = scalar_lea.vmem [#allocation1], 4
  %2245 = vst [vmem:[%s2244] ss:$9 sm:$0xff] %v2193
  %s2246 = scalar_lea.vmem [#allocation1], 5
  %2247 = vst [vmem:[%s2246] ss:$9 sm:$0xff] %v2194
  %s2248 = scalar_lea.vmem [#allocation1], 6
  %2249 = vst [vmem:[%s2248] ss:$9 sm:$0xff] %v2195
  %s2250 = scalar_lea.vmem [#allocation1], 7
  %2251 = vst [vmem:[%s2250] ss:$9 sm:$0xff] %v2196
  %v2252 = vld [vmem:[#allocation1] sm:$0xff]
  %2254 = vmatpush.msra.mxu0 %v86
  %2255 = vmatpush.msra.mxu0 %v82
  %2256 = vmatpush.msra.mxu0 %v78
  %2257 = vmatpush.msra.mxu0 %v74
  %2258 = vmatpush.msra.mxu0 %v70
  %2259 = vmatpush.msra.mxu0 %v66
  %2260 = vmatpush.msra.mxu0 %v62
  %2261 = vmatpush.msra.mxu0 %v58
  %2262 = vmatpush.msra.mxu0 %v54
  %2263 = vmatpush.msra.mxu0 %v50
  %2264 = vmatpush.msra.mxu0 %v46
  %2265 = vmatpush.msra.mxu0 %v42
  %2266 = vmatpush.msra.mxu0 %v38
  %2267 = vmatpush.msra.mxu0 %v34
  %2268 = vmatpush.msra.mxu0 %v30
  %2269 = vmatpush.msra.mxu0 %v26
  %2270 = vmatmul.f32.gmra.mxu0 %v2252
  %v2271 = vpop.f32.mrf.mxu0
  %v2272 = vadd.f32 0.0, %v2271
  %2273 = vdwg.mxu0
  %2274 = vmatpush.msra.mxu0 %v87
  %2275 = vmatpush.msra.mxu0 %v83
  %2276 = vmatpush.msra.mxu0 %v79
  %2277 = vmatpush.msra.mxu0 %v75
  %2278 = vmatpush.msra.mxu0 %v71
  %2279 = vmatpush.msra.mxu0 %v67
  %2280 = vmatpush.msra.mxu0 %v63
  %2281 = vmatpush.msra.mxu0 %v59
  %2282 = vmatpush.msra.mxu0 %v55
  %2283 = vmatpush.msra.mxu0 %v51
  %2284 = vmatpush.msra.mxu0 %v47
  %2285 = vmatpush.msra.mxu0 %v43
  %2286 = vmatpush.msra.mxu0 %v39
  %2287 = vmatpush.msra.mxu0 %v35
  %2288 = vmatpush.msra.mxu0 %v31
  %2289 = vmatpush.msra.mxu0 %v27
  %2290 = vmatmul.f32.gmra.mxu0 %v2252
  %v2291 = vpop.f32.mrf.mxu0
  %v2292 = vadd.f32 0.0, %v2291
  %2293 = vdwg.mxu0
  %2294 = vmatpush.msra.mxu0 %v88
  %2295 = vmatpush.msra.mxu0 %v84
  %2296 = vmatpush.msra.mxu0 %v80
  %2297 = vmatpush.msra.mxu0 %v76
  %2298 = vmatpush.msra.mxu0 %v72
  %2299 = vmatpush.msra.mxu0 %v68
  %2300 = vmatpush.msra.mxu0 %v64
  %2301 = vmatpush.msra.mxu0 %v60
  %2302 = vmatpush.msra.mxu0 %v56
  %2303 = vmatpush.msra.mxu0 %v52
  %2304 = vmatpush.msra.mxu0 %v48
  %2305 = vmatpush.msra.mxu0 %v44
  %2306 = vmatpush.msra.mxu0 %v40
  %2307 = vmatpush.msra.mxu0 %v36
  %2308 = vmatpush.msra.mxu0 %v32
  %2309 = vmatpush.msra.mxu0 %v28
  %2310 = vmatmul.f32.gmra.mxu0 %v2252
  %v2311 = vpop.f32.mrf.mxu0
  %v2312 = vadd.f32 0.0, %v2311
  %2313 = vdwg.mxu0
  %2314 = vmatpush.msra.mxu0 %v89
  %2315 = vmatpush.msra.mxu0 %v85
  %2316 = vmatpush.msra.mxu0 %v81
  %2317 = vmatpush.msra.mxu0 %v77
  %2318 = vmatpush.msra.mxu0 %v73
  %2319 = vmatpush.msra.mxu0 %v69
  %2320 = vmatpush.msra.mxu0 %v65
  %2321 = vmatpush.msra.mxu0 %v61
  %2322 = vmatpush.msra.mxu0 %v57
  %2323 = vmatpush.msra.mxu0 %v53
  %2324 = vmatpush.msra.mxu0 %v49
  %2325 = vmatpush.msra.mxu0 %v45
  %2326 = vmatpush.msra.mxu0 %v41
  %2327 = vmatpush.msra.mxu0 %v37
  %2328 = vmatpush.msra.mxu0 %v33
  %2329 = vmatpush.msra.mxu0 %v29
  %2330 = vmatmul.f32.gmra.mxu0 %v2252
  %v2331 = vpop.f32.mrf.mxu0
  %v2332 = vadd.f32 0.0, %v2331
  %2333 = vdwg.mxu0
  %v2338 = vrot.slane %v2292, 7
  %v2339 = vrot.slane %v2312, 6
  %v2340 = vrot.slane %v2332, 5
  %v2341 = vsel %vm122, %v2272, %v2338
  %v2342 = vsel %vm124, %v2339, %v2340
  %v2343 = vsel %vm126, %v2341, %v2342
  %v2344 = vsel %vm128, %v2272, %v2338
  %v2345 = vsel %vm130, %v2339, %v2340
  %v2346 = vsel %vm132, %v2344, %v2345
  %v2347 = vrot.slane %v2346, 1
  %v2348 = vsel %vm124, %v2272, %v2338
  %v2349 = vsel %vm136, %v2339, %v2340
  %v2350 = vsel %vm138, %v2348, %v2349
  %v2351 = vrot.slane %v2350, 2
  %v2352 = vsel %vm130, %v2272, %v2338
  %v2353 = vsel %vm142, %v2339, %v2340
  %v2354 = vsel %vm144, %v2352, %v2353
  %v2355 = vrot.slane %v2354, 3
  %v2356 = vsel %vm136, %v2272, %v2338
  %v2357 = vsel %vm148, %v2339, %v2340
  %v2358 = vsel %vm150, %v2356, %v2357
  %v2359 = vrot.slane %v2358, 4
  %v2360 = vsel %vm142, %v2272, %v2338
  %v2361 = vsel %vm154, %v2340, %v2339
  %v2362 = vsel %vm156, %v2360, %v2361
  %v2363 = vrot.slane %v2362, 5
  %v2364 = vsel %vm148, %v2272, %v2338
  %v2365 = vsel %vm122, %v2339, %v2340
  %v2366 = vsel %vm161, %v2365, %v2364
  %v2367 = vrot.slane %v2366, 6
  %v2368 = vsel %vm154, %v2338, %v2272
  %v2369 = vsel %vm128, %v2339, %v2340
  %v2370 = vsel %vm166, %v2369, %v2368
  %v2371 = vrot.slane %v2370, 7
  %v2380 = vadd.f32 %v2221, %v2343
  %v2381 = vadd.f32 %v2222, %v2347
  %v2382 = vadd.f32 %v2223, %v2351
  %v2383 = vadd.f32 %v2224, %v2355
  %v2384 = vadd.f32 %v2225, %v2359
  %v2385 = vadd.f32 %v2226, %v2363
  %v2386 = vadd.f32 %v2227, %v2367
  %v2387 = vadd.f32 %v2228, %v2371
  %2388 = vst [vmem:[#allocation1] ss:$9 sm:$0xff] %v2076
  %s2389 = scalar_lea.vmem [#allocation1], 1
  %2390 = vst [vmem:[%s2389] ss:$9 sm:$0xff] %v2077
  %s2391 = scalar_lea.vmem [#allocation1], 2
  %2392 = vst [vmem:[%s2391] ss:$9 sm:$0xff] %v2078
  %s2393 = scalar_lea.vmem [#allocation1], 3
  %2394 = vst [vmem:[%s2393] ss:$9 sm:$0xff] %v2079
  %s2395 = scalar_lea.vmem [#allocation1], 4
  %2396 = vst [vmem:[%s2395] ss:$9 sm:$0xff] %v2080
  %s2397 = scalar_lea.vmem [#allocation1], 5
  %2398 = vst [vmem:[%s2397] ss:$9 sm:$0xff] %v2081
  %s2399 = scalar_lea.vmem [#allocation1], 6
  %2400 = vst [vmem:[%s2399] ss:$9 sm:$0xff] %v2082
  %s2401 = scalar_lea.vmem [#allocation1], 7
  %2402 = vst [vmem:[%s2401] ss:$9 sm:$0xff] %v2083
  %v2403 = vld [vmem:[#allocation1] sm:$0xff]
  %v2405 = vmul.f32 %v97, %v2403
  %v2407 = vrot.slane %v2405, 1
  %v2408 = vrot.slane %v2405, 2
  %v2409 = vrot.slane %v2405, 3
  %v2410 = vrot.slane %v2405, 4
  %v2411 = vrot.slane %v2405, 5
  %v2412 = vrot.slane %v2405, 6
  %v2413 = vrot.slane %v2405, 7
  %v2421 = vadd.f32 %v2380, %v2405
  %v2422 = vadd.f32 %v2381, %v2407
  %v2423 = vadd.f32 %v2382, %v2408
  %v2424 = vadd.f32 %v2383, %v2409
  %v2425 = vadd.f32 %v2384, %v2410
  %v2426 = vadd.f32 %v2385, %v2411
  %v2427 = vadd.f32 %v2386, %v2412
  %v2428 = vadd.f32 %v2387, %v2413
  %v2429 = vmul.f32 %v2421, 0.5
  %v2430 = vmul.f32 %v2422, 0.5
  %v2431 = vmul.f32 %v2423, 0.5
  %v2432 = vmul.f32 %v2424, 0.5
  %v2433 = vmul.f32 %v2425, 0.5
  %v2434 = vmul.f32 %v2426, 0.5
  %v2435 = vmul.f32 %v2427, 0.5
  %v2436 = vmul.f32 %v2428, 0.5
  %v2437 = vtanh.pop %v2429
  %v2438 = vtanh.pop %v2430
  %v2439 = vtanh.pop %v2431
  %v2440 = vtanh.pop %v2432
  %v2441 = vtanh.pop %v2433
  %v2442 = vtanh.pop %v2434
  %v2443 = vtanh.pop %v2435
  %v2444 = vtanh.pop %v2436
  %v2445 = vmul.f32 %v2437, 0.5
  %v2446 = vmul.f32 %v2438, 0.5
  %v2447 = vmul.f32 %v2439, 0.5
  %v2448 = vmul.f32 %v2440, 0.5
  %v2449 = vmul.f32 %v2441, 0.5
  %v2450 = vmul.f32 %v2442, 0.5
  %v2451 = vmul.f32 %v2443, 0.5
  %v2452 = vmul.f32 %v2444, 0.5
  %v2453 = vadd.f32 %v2445, 0.5
  %v2454 = vadd.f32 %v2446, 0.5
  %v2455 = vadd.f32 %v2447, 0.5
  %v2456 = vadd.f32 %v2448, 0.5
  %v2457 = vadd.f32 %v2449, 0.5
  %v2458 = vadd.f32 %v2450, 0.5
  %v2459 = vadd.f32 %v2451, 0.5
  %v2460 = vadd.f32 %v2452, 0.5
  %2461 = vst [vmem:[#allocation1] ss:$9 sm:$0xff] %v2076
  %s2462 = scalar_lea.vmem [#allocation1], 1
  %2463 = vst [vmem:[%s2462] ss:$9 sm:$0xff] %v2077
  %s2464 = scalar_lea.vmem [#allocation1], 2
  %2465 = vst [vmem:[%s2464] ss:$9 sm:$0xff] %v2078
  %s2466 = scalar_lea.vmem [#allocation1], 3
  %2467 = vst [vmem:[%s2466] ss:$9 sm:$0xff] %v2079
  %s2468 = scalar_lea.vmem [#allocation1], 4
  %2469 = vst [vmem:[%s2468] ss:$9 sm:$0xff] %v2080
  %s2470 = scalar_lea.vmem [#allocation1], 5
  %2471 = vst [vmem:[%s2470] ss:$9 sm:$0xff] %v2081
  %s2472 = scalar_lea.vmem [#allocation1], 6
  %2473 = vst [vmem:[%s2472] ss:$9 sm:$0xff] %v2082
  %s2474 = scalar_lea.vmem [#allocation1], 7
  %2475 = vst [vmem:[%s2474] ss:$9 sm:$0xff] %v2083
  %v2476 = vld [vmem:[#allocation1] sm:$0xff]
  %v2478 = vmul.f32 %v99, %v2476
  %v2487 = vrot.slane %v2380, 1
  %v2488 = vrot.slane %v2381, 1
  %v2489 = vrot.slane %v2382, 1
  %v2490 = vrot.slane %v2383, 1
  %v2491 = vrot.slane %v2384, 1
  %v2492 = vrot.slane %v2385, 1
  %v2493 = vrot.slane %v2386, 1
  %v2494 = vrot.slane %v2387, 1
  %v2504 = vrot.slane %v2478, 1
  %v2505 = vrot.slane %v2478, 2
  %v2506 = vrot.slane %v2478, 3
  %v2507 = vrot.slane %v2478, 4
  %v2508 = vrot.slane %v2478, 5
  %v2509 = vrot.slane %v2478, 6
  %v2510 = vrot.slane %v2478, 7
  %v2518 = vadd.f32 %v2487, %v2478
  %v2519 = vadd.f32 %v2488, %v2504
  %v2520 = vadd.f32 %v2489, %v2505
  %v2521 = vadd.f32 %v2490, %v2506
  %v2522 = vadd.f32 %v2491, %v2507
  %v2523 = vadd.f32 %v2492, %v2508
  %v2524 = vadd.f32 %v2493, %v2509
  %v2525 = vadd.f32 %v2494, %v2510
  %v2526 = vmul.f32 %v2518, 0.5
  %v2527 = vmul.f32 %v2519, 0.5
  %v2528 = vmul.f32 %v2520, 0.5
  %v2529 = vmul.f32 %v2521, 0.5
  %v2530 = vmul.f32 %v2522, 0.5
  %v2531 = vmul.f32 %v2523, 0.5
  %v2532 = vmul.f32 %v2524, 0.5
  %v2533 = vmul.f32 %v2525, 0.5
  %v2534 = vtanh.pop %v2526
  %v2535 = vtanh.pop %v2527
  %v2536 = vtanh.pop %v2528
  %v2537 = vtanh.pop %v2529
  %v2538 = vtanh.pop %v2530
  %v2539 = vtanh.pop %v2531
  %v2540 = vtanh.pop %v2532
  %v2541 = vtanh.pop %v2533
  %v2542 = vmul.f32 %v2534, 0.5
  %v2543 = vmul.f32 %v2535, 0.5
  %v2544 = vmul.f32 %v2536, 0.5
  %v2545 = vmul.f32 %v2537, 0.5
  %v2546 = vmul.f32 %v2538, 0.5
  %v2547 = vmul.f32 %v2539, 0.5
  %v2548 = vmul.f32 %v2540, 0.5
  %v2549 = vmul.f32 %v2541, 0.5
  %v2550 = vadd.f32 %v2542, 0.5
  %v2551 = vadd.f32 %v2543, 0.5
  %v2552 = vadd.f32 %v2544, 0.5
  %v2553 = vadd.f32 %v2545, 0.5
  %v2554 = vadd.f32 %v2546, 0.5
  %v2555 = vadd.f32 %v2547, 0.5
  %v2556 = vadd.f32 %v2548, 0.5
  %v2557 = vadd.f32 %v2549, 0.5
  %v2558 = vrot.slane %v2380, 2
  %v2559 = vrot.slane %v2381, 2
  %v2560 = vrot.slane %v2382, 2
  %v2561 = vrot.slane %v2383, 2
  %v2562 = vrot.slane %v2384, 2
  %v2563 = vrot.slane %v2385, 2
  %v2564 = vrot.slane %v2386, 2
  %v2565 = vrot.slane %v2387, 2
  %v2574 = vtanh.pop %v2558
  %v2575 = vtanh.pop %v2559
  %v2576 = vtanh.pop %v2560
  %v2577 = vtanh.pop %v2561
  %v2578 = vtanh.pop %v2562
  %v2579 = vtanh.pop %v2563
  %v2580 = vtanh.pop %v2564
  %v2581 = vtanh.pop %v2565
  %v2582 = vmul.f32 %v2550, %v2076
  %v2583 = vmul.f32 %v2551, %v2077
  %v2584 = vmul.f32 %v2552, %v2078
  %v2585 = vmul.f32 %v2553, %v2079
  %v2586 = vmul.f32 %v2554, %v2080
  %v2587 = vmul.f32 %v2555, %v2081
  %v2588 = vmul.f32 %v2556, %v2082
  %v2589 = vmul.f32 %v2557, %v2083
  %v2590 = vmul.f32 %v2453, %v2574
  %v2591 = vmul.f32 %v2454, %v2575
  %v2592 = vmul.f32 %v2455, %v2576
  %v2593 = vmul.f32 %v2456, %v2577
  %v2594 = vmul.f32 %v2457, %v2578
  %v2595 = vmul.f32 %v2458, %v2579
  %v2596 = vmul.f32 %v2459, %v2580
  %v2597 = vmul.f32 %v2460, %v2581
  %v2598 = vadd.f32 %v2582, %v2590
  %v2599 = vadd.f32 %v2583, %v2591
  %v2600 = vadd.f32 %v2584, %v2592
  %v2601 = vadd.f32 %v2585, %v2593
  %v2602 = vadd.f32 %v2586, %v2594
  %v2603 = vadd.f32 %v2587, %v2595
  %v2604 = vadd.f32 %v2588, %v2596
  %v2605 = vadd.f32 %v2589, %v2597
  %2614 = vst [vmem:[#allocation1] ss:$9 sm:$0xff] %v2598
  %s2615 = scalar_lea.vmem [#allocation1], 1
  %2616 = vst [vmem:[%s2615] ss:$9 sm:$0xff] %v2599
  %s2617 = scalar_lea.vmem [#allocation1], 2
  %2618 = vst [vmem:[%s2617] ss:$9 sm:$0xff] %v2600
  %s2619 = scalar_lea.vmem [#allocation1], 3
  %2620 = vst [vmem:[%s2619] ss:$9 sm:$0xff] %v2601
  %s2621 = scalar_lea.vmem [#allocation1], 4
  %2622 = vst [vmem:[%s2621] ss:$9 sm:$0xff] %v2602
  %s2623 = scalar_lea.vmem [#allocation1], 5
  %2624 = vst [vmem:[%s2623] ss:$9 sm:$0xff] %v2603
  %s2625 = scalar_lea.vmem [#allocation1], 6
  %2626 = vst [vmem:[%s2625] ss:$9 sm:$0xff] %v2604
  %s2627 = scalar_lea.vmem [#allocation1], 7
  %2628 = vst [vmem:[%s2627] ss:$9 sm:$0xff] %v2605
  %v2629 = vld [vmem:[#allocation1] sm:$0xff]
  %v2631 = vmul.f32 %v101, %v2629
  %v2632 = vrot.slane %v2380, 3
  %v2633 = vrot.slane %v2381, 3
  %v2634 = vrot.slane %v2382, 3
  %v2635 = vrot.slane %v2383, 3
  %v2636 = vrot.slane %v2384, 3
  %v2637 = vrot.slane %v2385, 3
  %v2638 = vrot.slane %v2386, 3
  %v2639 = vrot.slane %v2387, 3
  %v2649 = vrot.slane %v2631, 1
  %v2650 = vrot.slane %v2631, 2
  %v2651 = vrot.slane %v2631, 3
  %v2652 = vrot.slane %v2631, 4
  %v2653 = vrot.slane %v2631, 5
  %v2654 = vrot.slane %v2631, 6
  %v2655 = vrot.slane %v2631, 7
  %v2663 = vadd.f32 %v2632, %v2631
  %v2664 = vadd.f32 %v2633, %v2649
  %v2665 = vadd.f32 %v2634, %v2650
  %v2666 = vadd.f32 %v2635, %v2651
  %v2667 = vadd.f32 %v2636, %v2652
  %v2668 = vadd.f32 %v2637, %v2653
  %v2669 = vadd.f32 %v2638, %v2654
  %v2670 = vadd.f32 %v2639, %v2655
  %v2671 = vmul.f32 %v2663, 0.5
  %v2672 = vmul.f32 %v2664, 0.5
  %v2673 = vmul.f32 %v2665, 0.5
  %v2674 = vmul.f32 %v2666, 0.5
  %v2675 = vmul.f32 %v2667, 0.5
  %v2676 = vmul.f32 %v2668, 0.5
  %v2677 = vmul.f32 %v2669, 0.5
  %v2678 = vmul.f32 %v2670, 0.5
  %v2679 = vtanh.pop %v2671
  %v2680 = vtanh.pop %v2672
  %v2681 = vtanh.pop %v2673
  %v2682 = vtanh.pop %v2674
  %v2683 = vtanh.pop %v2675
  %v2684 = vtanh.pop %v2676
  %v2685 = vtanh.pop %v2677
  %v2686 = vtanh.pop %v2678
  %v2687 = vmul.f32 %v2679, 0.5
  %v2688 = vmul.f32 %v2680, 0.5
  %v2689 = vmul.f32 %v2681, 0.5
  %v2690 = vmul.f32 %v2682, 0.5
  %v2691 = vmul.f32 %v2683, 0.5
  %v2692 = vmul.f32 %v2684, 0.5
  %v2693 = vmul.f32 %v2685, 0.5
  %v2694 = vmul.f32 %v2686, 0.5
  %v2695 = vadd.f32 %v2687, 0.5
  %v2696 = vadd.f32 %v2688, 0.5
  %v2697 = vadd.f32 %v2689, 0.5
  %v2698 = vadd.f32 %v2690, 0.5
  %v2699 = vadd.f32 %v2691, 0.5
  %v2700 = vadd.f32 %v2692, 0.5
  %v2701 = vadd.f32 %v2693, 0.5
  %v2702 = vadd.f32 %v2694, 0.5
  %v2703 = vtanh.pop %v2598
  %v2704 = vtanh.pop %v2599
  %v2705 = vtanh.pop %v2600
  %v2706 = vtanh.pop %v2601
  %v2707 = vtanh.pop %v2602
  %v2708 = vtanh.pop %v2603
  %v2709 = vtanh.pop %v2604
  %v2710 = vtanh.pop %v2605
  %v2711 = vmul.f32 %v2695, %v2703
  %v2712 = vmul.f32 %v2696, %v2704
  %v2713 = vmul.f32 %v2697, %v2705
  %v2714 = vmul.f32 %v2698, %v2706
  %v2715 = vmul.f32 %v2699, %v2707
  %v2716 = vmul.f32 %v2700, %v2708
  %v2717 = vmul.f32 %v2701, %v2709
  %v2718 = vmul.f32 %v2702, %v2710
  %2719 = vst [vmem:[%s4 + $0x4] sm:$0x1] %v2711
  %2720 = vst [vmem:[%s4 + $0xc] sm:$0x1] %v2712
  %2721 = vst [vmem:[%s4 + $0x14] sm:$0x1] %v2713
  %2722 = vst [vmem:[%s4 + $0x1c] sm:$0x1] %v2714
  %2723 = vst [vmem:[%s4 + $0x24] sm:$0x1] %v2715
  %2724 = vst [vmem:[%s4 + $0x2c] sm:$0x1] %v2716
  %2725 = vst [vmem:[%s4 + $0x34] sm:$0x1] %v2717
  %2726 = vst [vmem:[%s4 + $0x3c] sm:$0x1] %v2718
  %s2727 = scalar_lea.vmem %s0, 5
  %v2728 = vld [vmem:[%s2727] ss:$8 sm:$0xf]
  %s2729 = scalar_lea.vmem %s0, 37
  %v2730 = vld [vmem:[%s2729] ss:$8 sm:$0xf]
  %s2731 = scalar_lea.vmem %s0, 69
  %v2732 = vld [vmem:[%s2731] ss:$8 sm:$0xf]
  %s2733 = scalar_lea.vmem %s0, 101
  %v2734 = vld [vmem:[%s2733] ss:$8 sm:$0xf]
  %s2735 = scalar_lea.vmem %s0, 133
  %v2736 = vld [vmem:[%s2735] ss:$8 sm:$0xf]
  %s2737 = scalar_lea.vmem %s0, 165
  %v2738 = vld [vmem:[%s2737] ss:$8 sm:$0xf]
  %s2739 = scalar_lea.vmem %s0, 197
  %v2740 = vld [vmem:[%s2739] ss:$8 sm:$0xf]
  %s2741 = scalar_lea.vmem %s0, 229
  %v2742 = vld [vmem:[%s2741] ss:$8 sm:$0xf]
  %v2743 = vadd.f32 %v2728, %v127
  %v2744 = vadd.f32 %v2730, %v134
  %v2745 = vadd.f32 %v2732, %v140
  %v2746 = vadd.f32 %v2734, %v146
  %v2747 = vadd.f32 %v2736, %v152
  %v2748 = vadd.f32 %v2738, %v158
  %v2749 = vadd.f32 %v2740, %v163
  %v2750 = vadd.f32 %v2742, %v168
  %2759 = vst [vmem:[#allocation1] ss:$9 sm:$0xff] %v2711
  %s2760 = scalar_lea.vmem [#allocation1], 1
  %2761 = vst [vmem:[%s2760] ss:$9 sm:$0xff] %v2712
  %s2762 = scalar_lea.vmem [#allocation1], 2
  %2763 = vst [vmem:[%s2762] ss:$9 sm:$0xff] %v2713
  %s2764 = scalar_lea.vmem [#allocation1], 3
  %2765 = vst [vmem:[%s2764] ss:$9 sm:$0xff] %v2714
  %s2766 = scalar_lea.vmem [#allocation1], 4
  %2767 = vst [vmem:[%s2766] ss:$9 sm:$0xff] %v2715
  %s2768 = scalar_lea.vmem [#allocation1], 5
  %2769 = vst [vmem:[%s2768] ss:$9 sm:$0xff] %v2716
  %s2770 = scalar_lea.vmem [#allocation1], 6
  %2771 = vst [vmem:[%s2770] ss:$9 sm:$0xff] %v2717
  %s2772 = scalar_lea.vmem [#allocation1], 7
  %2773 = vst [vmem:[%s2772] ss:$9 sm:$0xff] %v2718
  %v2774 = vld [vmem:[#allocation1] sm:$0xff]
  %2776 = vmatpush.msra.mxu0 %v86
  %2777 = vmatpush.msra.mxu0 %v82
  %2778 = vmatpush.msra.mxu0 %v78
  %2779 = vmatpush.msra.mxu0 %v74
  %2780 = vmatpush.msra.mxu0 %v70
  %2781 = vmatpush.msra.mxu0 %v66
  %2782 = vmatpush.msra.mxu0 %v62
  %2783 = vmatpush.msra.mxu0 %v58
  %2784 = vmatpush.msra.mxu0 %v54
  %2785 = vmatpush.msra.mxu0 %v50
  %2786 = vmatpush.msra.mxu0 %v46
  %2787 = vmatpush.msra.mxu0 %v42
  %2788 = vmatpush.msra.mxu0 %v38
  %2789 = vmatpush.msra.mxu0 %v34
  %2790 = vmatpush.msra.mxu0 %v30
  %2791 = vmatpush.msra.mxu0 %v26
  %2792 = vmatmul.f32.gmra.mxu0 %v2774
  %v2793 = vpop.f32.mrf.mxu0
  %v2794 = vadd.f32 0.0, %v2793
  %2795 = vdwg.mxu0
  %2796 = vmatpush.msra.mxu0 %v87
  %2797 = vmatpush.msra.mxu0 %v83
  %2798 = vmatpush.msra.mxu0 %v79
  %2799 = vmatpush.msra.mxu0 %v75
  %2800 = vmatpush.msra.mxu0 %v71
  %2801 = vmatpush.msra.mxu0 %v67
  %2802 = vmatpush.msra.mxu0 %v63
  %2803 = vmatpush.msra.mxu0 %v59
  %2804 = vmatpush.msra.mxu0 %v55
  %2805 = vmatpush.msra.mxu0 %v51
  %2806 = vmatpush.msra.mxu0 %v47
  %2807 = vmatpush.msra.mxu0 %v43
  %2808 = vmatpush.msra.mxu0 %v39
  %2809 = vmatpush.msra.mxu0 %v35
  %2810 = vmatpush.msra.mxu0 %v31
  %2811 = vmatpush.msra.mxu0 %v27
  %2812 = vmatmul.f32.gmra.mxu0 %v2774
  %v2813 = vpop.f32.mrf.mxu0
  %v2814 = vadd.f32 0.0, %v2813
  %2815 = vdwg.mxu0
  %2816 = vmatpush.msra.mxu0 %v88
  %2817 = vmatpush.msra.mxu0 %v84
  %2818 = vmatpush.msra.mxu0 %v80
  %2819 = vmatpush.msra.mxu0 %v76
  %2820 = vmatpush.msra.mxu0 %v72
  %2821 = vmatpush.msra.mxu0 %v68
  %2822 = vmatpush.msra.mxu0 %v64
  %2823 = vmatpush.msra.mxu0 %v60
  %2824 = vmatpush.msra.mxu0 %v56
  %2825 = vmatpush.msra.mxu0 %v52
  %2826 = vmatpush.msra.mxu0 %v48
  %2827 = vmatpush.msra.mxu0 %v44
  %2828 = vmatpush.msra.mxu0 %v40
  %2829 = vmatpush.msra.mxu0 %v36
  %2830 = vmatpush.msra.mxu0 %v32
  %2831 = vmatpush.msra.mxu0 %v28
  %2832 = vmatmul.f32.gmra.mxu0 %v2774
  %v2833 = vpop.f32.mrf.mxu0
  %v2834 = vadd.f32 0.0, %v2833
  %2835 = vdwg.mxu0
  %2836 = vmatpush.msra.mxu0 %v89
  %2837 = vmatpush.msra.mxu0 %v85
  %2838 = vmatpush.msra.mxu0 %v81
  %2839 = vmatpush.msra.mxu0 %v77
  %2840 = vmatpush.msra.mxu0 %v73
  %2841 = vmatpush.msra.mxu0 %v69
  %2842 = vmatpush.msra.mxu0 %v65
  %2843 = vmatpush.msra.mxu0 %v61
  %2844 = vmatpush.msra.mxu0 %v57
  %2845 = vmatpush.msra.mxu0 %v53
  %2846 = vmatpush.msra.mxu0 %v49
  %2847 = vmatpush.msra.mxu0 %v45
  %2848 = vmatpush.msra.mxu0 %v41
  %2849 = vmatpush.msra.mxu0 %v37
  %2850 = vmatpush.msra.mxu0 %v33
  %2851 = vmatpush.msra.mxu0 %v29
  %2852 = vmatmul.f32.gmra.mxu0 %v2774
  %v2853 = vpop.f32.mrf.mxu0
  %v2854 = vadd.f32 0.0, %v2853
  %2855 = vdwg.mxu0
  %v2860 = vrot.slane %v2814, 7
  %v2861 = vrot.slane %v2834, 6
  %v2862 = vrot.slane %v2854, 5
  %v2863 = vsel %vm122, %v2794, %v2860
  %v2864 = vsel %vm124, %v2861, %v2862
  %v2865 = vsel %vm126, %v2863, %v2864
  %v2866 = vsel %vm128, %v2794, %v2860
  %v2867 = vsel %vm130, %v2861, %v2862
  %v2868 = vsel %vm132, %v2866, %v2867
  %v2869 = vrot.slane %v2868, 1
  %v2870 = vsel %vm124, %v2794, %v2860
  %v2871 = vsel %vm136, %v2861, %v2862
  %v2872 = vsel %vm138, %v2870, %v2871
  %v2873 = vrot.slane %v2872, 2
  %v2874 = vsel %vm130, %v2794, %v2860
  %v2875 = vsel %vm142, %v2861, %v2862
  %v2876 = vsel %vm144, %v2874, %v2875
  %v2877 = vrot.slane %v2876, 3
  %v2878 = vsel %vm136, %v2794, %v2860
  %v2879 = vsel %vm148, %v2861, %v2862
  %v2880 = vsel %vm150, %v2878, %v2879
  %v2881 = vrot.slane %v2880, 4
  %v2882 = vsel %vm142, %v2794, %v2860
  %v2883 = vsel %vm154, %v2862, %v2861
  %v2884 = vsel %vm156, %v2882, %v2883
  %v2885 = vrot.slane %v2884, 5
  %v2886 = vsel %vm148, %v2794, %v2860
  %v2887 = vsel %vm122, %v2861, %v2862
  %v2888 = vsel %vm161, %v2887, %v2886
  %v2889 = vrot.slane %v2888, 6
  %v2890 = vsel %vm154, %v2860, %v2794
  %v2891 = vsel %vm128, %v2861, %v2862
  %v2892 = vsel %vm166, %v2891, %v2890
  %v2893 = vrot.slane %v2892, 7
  %v2902 = vadd.f32 %v2743, %v2865
  %v2903 = vadd.f32 %v2744, %v2869
  %v2904 = vadd.f32 %v2745, %v2873
  %v2905 = vadd.f32 %v2746, %v2877
  %v2906 = vadd.f32 %v2747, %v2881
  %v2907 = vadd.f32 %v2748, %v2885
  %v2908 = vadd.f32 %v2749, %v2889
  %v2909 = vadd.f32 %v2750, %v2893
  %2910 = vst [vmem:[#allocation1] ss:$9 sm:$0xff] %v2598
  %s2911 = scalar_lea.vmem [#allocation1], 1
  %2912 = vst [vmem:[%s2911] ss:$9 sm:$0xff] %v2599
  %s2913 = scalar_lea.vmem [#allocation1], 2
  %2914 = vst [vmem:[%s2913] ss:$9 sm:$0xff] %v2600
  %s2915 = scalar_lea.vmem [#allocation1], 3
  %2916 = vst [vmem:[%s2915] ss:$9 sm:$0xff] %v2601
  %s2917 = scalar_lea.vmem [#allocation1], 4
  %2918 = vst [vmem:[%s2917] ss:$9 sm:$0xff] %v2602
  %s2919 = scalar_lea.vmem [#allocation1], 5
  %2920 = vst [vmem:[%s2919] ss:$9 sm:$0xff] %v2603
  %s2921 = scalar_lea.vmem [#allocation1], 6
  %2922 = vst [vmem:[%s2921] ss:$9 sm:$0xff] %v2604
  %s2923 = scalar_lea.vmem [#allocation1], 7
  %2924 = vst [vmem:[%s2923] ss:$9 sm:$0xff] %v2605
  %v2925 = vld [vmem:[#allocation1] sm:$0xff]
  %v2927 = vmul.f32 %v97, %v2925
  %v2929 = vrot.slane %v2927, 1
  %v2930 = vrot.slane %v2927, 2
  %v2931 = vrot.slane %v2927, 3
  %v2932 = vrot.slane %v2927, 4
  %v2933 = vrot.slane %v2927, 5
  %v2934 = vrot.slane %v2927, 6
  %v2935 = vrot.slane %v2927, 7
  %v2943 = vadd.f32 %v2902, %v2927
  %v2944 = vadd.f32 %v2903, %v2929
  %v2945 = vadd.f32 %v2904, %v2930
  %v2946 = vadd.f32 %v2905, %v2931
  %v2947 = vadd.f32 %v2906, %v2932
  %v2948 = vadd.f32 %v2907, %v2933
  %v2949 = vadd.f32 %v2908, %v2934
  %v2950 = vadd.f32 %v2909, %v2935
  %v2951 = vmul.f32 %v2943, 0.5
  %v2952 = vmul.f32 %v2944, 0.5
  %v2953 = vmul.f32 %v2945, 0.5
  %v2954 = vmul.f32 %v2946, 0.5
  %v2955 = vmul.f32 %v2947, 0.5
  %v2956 = vmul.f32 %v2948, 0.5
  %v2957 = vmul.f32 %v2949, 0.5
  %v2958 = vmul.f32 %v2950, 0.5
  %v2959 = vtanh.pop %v2951
  %v2960 = vtanh.pop %v2952
  %v2961 = vtanh.pop %v2953
  %v2962 = vtanh.pop %v2954
  %v2963 = vtanh.pop %v2955
  %v2964 = vtanh.pop %v2956
  %v2965 = vtanh.pop %v2957
  %v2966 = vtanh.pop %v2958
  %v2967 = vmul.f32 %v2959, 0.5
  %v2968 = vmul.f32 %v2960, 0.5
  %v2969 = vmul.f32 %v2961, 0.5
  %v2970 = vmul.f32 %v2962, 0.5
  %v2971 = vmul.f32 %v2963, 0.5
  %v2972 = vmul.f32 %v2964, 0.5
  %v2973 = vmul.f32 %v2965, 0.5
  %v2974 = vmul.f32 %v2966, 0.5
  %v2975 = vadd.f32 %v2967, 0.5
  %v2976 = vadd.f32 %v2968, 0.5
  %v2977 = vadd.f32 %v2969, 0.5
  %v2978 = vadd.f32 %v2970, 0.5
  %v2979 = vadd.f32 %v2971, 0.5
  %v2980 = vadd.f32 %v2972, 0.5
  %v2981 = vadd.f32 %v2973, 0.5
  %v2982 = vadd.f32 %v2974, 0.5
  %2983 = vst [vmem:[#allocation1] ss:$9 sm:$0xff] %v2598
  %s2984 = scalar_lea.vmem [#allocation1], 1
  %2985 = vst [vmem:[%s2984] ss:$9 sm:$0xff] %v2599
  %s2986 = scalar_lea.vmem [#allocation1], 2
  %2987 = vst [vmem:[%s2986] ss:$9 sm:$0xff] %v2600
  %s2988 = scalar_lea.vmem [#allocation1], 3
  %2989 = vst [vmem:[%s2988] ss:$9 sm:$0xff] %v2601
  %s2990 = scalar_lea.vmem [#allocation1], 4
  %2991 = vst [vmem:[%s2990] ss:$9 sm:$0xff] %v2602
  %s2992 = scalar_lea.vmem [#allocation1], 5
  %2993 = vst [vmem:[%s2992] ss:$9 sm:$0xff] %v2603
  %s2994 = scalar_lea.vmem [#allocation1], 6
  %2995 = vst [vmem:[%s2994] ss:$9 sm:$0xff] %v2604
  %s2996 = scalar_lea.vmem [#allocation1], 7
  %2997 = vst [vmem:[%s2996] ss:$9 sm:$0xff] %v2605
  %v2998 = vld [vmem:[#allocation1] sm:$0xff]
  %v3000 = vmul.f32 %v99, %v2998
  %v3009 = vrot.slane %v2902, 1
  %v3010 = vrot.slane %v2903, 1
  %v3011 = vrot.slane %v2904, 1
  %v3012 = vrot.slane %v2905, 1
  %v3013 = vrot.slane %v2906, 1
  %v3014 = vrot.slane %v2907, 1
  %v3015 = vrot.slane %v2908, 1
  %v3016 = vrot.slane %v2909, 1
  %v3026 = vrot.slane %v3000, 1
  %v3027 = vrot.slane %v3000, 2
  %v3028 = vrot.slane %v3000, 3
  %v3029 = vrot.slane %v3000, 4
  %v3030 = vrot.slane %v3000, 5
  %v3031 = vrot.slane %v3000, 6
  %v3032 = vrot.slane %v3000, 7
  %v3040 = vadd.f32 %v3009, %v3000
  %v3041 = vadd.f32 %v3010, %v3026
  %v3042 = vadd.f32 %v3011, %v3027
  %v3043 = vadd.f32 %v3012, %v3028
  %v3044 = vadd.f32 %v3013, %v3029
  %v3045 = vadd.f32 %v3014, %v3030
  %v3046 = vadd.f32 %v3015, %v3031
  %v3047 = vadd.f32 %v3016, %v3032
  %v3048 = vmul.f32 %v3040, 0.5
  %v3049 = vmul.f32 %v3041, 0.5
  %v3050 = vmul.f32 %v3042, 0.5
  %v3051 = vmul.f32 %v3043, 0.5
  %v3052 = vmul.f32 %v3044, 0.5
  %v3053 = vmul.f32 %v3045, 0.5
  %v3054 = vmul.f32 %v3046, 0.5
  %v3055 = vmul.f32 %v3047, 0.5
  %v3056 = vtanh.pop %v3048
  %v3057 = vtanh.pop %v3049
  %v3058 = vtanh.pop %v3050
  %v3059 = vtanh.pop %v3051
  %v3060 = vtanh.pop %v3052
  %v3061 = vtanh.pop %v3053
  %v3062 = vtanh.pop %v3054
  %v3063 = vtanh.pop %v3055
  %v3064 = vmul.f32 %v3056, 0.5
  %v3065 = vmul.f32 %v3057, 0.5
  %v3066 = vmul.f32 %v3058, 0.5
  %v3067 = vmul.f32 %v3059, 0.5
  %v3068 = vmul.f32 %v3060, 0.5
  %v3069 = vmul.f32 %v3061, 0.5
  %v3070 = vmul.f32 %v3062, 0.5
  %v3071 = vmul.f32 %v3063, 0.5
  %v3072 = vadd.f32 %v3064, 0.5
  %v3073 = vadd.f32 %v3065, 0.5
  %v3074 = vadd.f32 %v3066, 0.5
  %v3075 = vadd.f32 %v3067, 0.5
  %v3076 = vadd.f32 %v3068, 0.5
  %v3077 = vadd.f32 %v3069, 0.5
  %v3078 = vadd.f32 %v3070, 0.5
  %v3079 = vadd.f32 %v3071, 0.5
  %v3080 = vrot.slane %v2902, 2
  %v3081 = vrot.slane %v2903, 2
  %v3082 = vrot.slane %v2904, 2
  %v3083 = vrot.slane %v2905, 2
  %v3084 = vrot.slane %v2906, 2
  %v3085 = vrot.slane %v2907, 2
  %v3086 = vrot.slane %v2908, 2
  %v3087 = vrot.slane %v2909, 2
  %v3096 = vtanh.pop %v3080
  %v3097 = vtanh.pop %v3081
  %v3098 = vtanh.pop %v3082
  %v3099 = vtanh.pop %v3083
  %v3100 = vtanh.pop %v3084
  %v3101 = vtanh.pop %v3085
  %v3102 = vtanh.pop %v3086
  %v3103 = vtanh.pop %v3087
  %v3104 = vmul.f32 %v3072, %v2598
  %v3105 = vmul.f32 %v3073, %v2599
  %v3106 = vmul.f32 %v3074, %v2600
  %v3107 = vmul.f32 %v3075, %v2601
  %v3108 = vmul.f32 %v3076, %v2602
  %v3109 = vmul.f32 %v3077, %v2603
  %v3110 = vmul.f32 %v3078, %v2604
  %v3111 = vmul.f32 %v3079, %v2605
  %v3112 = vmul.f32 %v2975, %v3096
  %v3113 = vmul.f32 %v2976, %v3097
  %v3114 = vmul.f32 %v2977, %v3098
  %v3115 = vmul.f32 %v2978, %v3099
  %v3116 = vmul.f32 %v2979, %v3100
  %v3117 = vmul.f32 %v2980, %v3101
  %v3118 = vmul.f32 %v2981, %v3102
  %v3119 = vmul.f32 %v2982, %v3103
  %v3120 = vadd.f32 %v3104, %v3112
  %v3121 = vadd.f32 %v3105, %v3113
  %v3122 = vadd.f32 %v3106, %v3114
  %v3123 = vadd.f32 %v3107, %v3115
  %v3124 = vadd.f32 %v3108, %v3116
  %v3125 = vadd.f32 %v3109, %v3117
  %v3126 = vadd.f32 %v3110, %v3118
  %v3127 = vadd.f32 %v3111, %v3119
  %3136 = vst [vmem:[#allocation1] ss:$9 sm:$0xff] %v3120
  %s3137 = scalar_lea.vmem [#allocation1], 1
  %3138 = vst [vmem:[%s3137] ss:$9 sm:$0xff] %v3121
  %s3139 = scalar_lea.vmem [#allocation1], 2
  %3140 = vst [vmem:[%s3139] ss:$9 sm:$0xff] %v3122
  %s3141 = scalar_lea.vmem [#allocation1], 3
  %3142 = vst [vmem:[%s3141] ss:$9 sm:$0xff] %v3123
  %s3143 = scalar_lea.vmem [#allocation1], 4
  %3144 = vst [vmem:[%s3143] ss:$9 sm:$0xff] %v3124
  %s3145 = scalar_lea.vmem [#allocation1], 5
  %3146 = vst [vmem:[%s3145] ss:$9 sm:$0xff] %v3125
  %s3147 = scalar_lea.vmem [#allocation1], 6
  %3148 = vst [vmem:[%s3147] ss:$9 sm:$0xff] %v3126
  %s3149 = scalar_lea.vmem [#allocation1], 7
  %3150 = vst [vmem:[%s3149] ss:$9 sm:$0xff] %v3127
  %v3151 = vld [vmem:[#allocation1] sm:$0xff]
  %v3153 = vmul.f32 %v101, %v3151
  %v3154 = vrot.slane %v2902, 3
  %v3155 = vrot.slane %v2903, 3
  %v3156 = vrot.slane %v2904, 3
  %v3157 = vrot.slane %v2905, 3
  %v3158 = vrot.slane %v2906, 3
  %v3159 = vrot.slane %v2907, 3
  %v3160 = vrot.slane %v2908, 3
  %v3161 = vrot.slane %v2909, 3
  %v3171 = vrot.slane %v3153, 1
  %v3172 = vrot.slane %v3153, 2
  %v3173 = vrot.slane %v3153, 3
  %v3174 = vrot.slane %v3153, 4
  %v3175 = vrot.slane %v3153, 5
  %v3176 = vrot.slane %v3153, 6
  %v3177 = vrot.slane %v3153, 7
  %v3185 = vadd.f32 %v3154, %v3153
  %v3186 = vadd.f32 %v3155, %v3171
  %v3187 = vadd.f32 %v3156, %v3172
  %v3188 = vadd.f32 %v3157, %v3173
  %v3189 = vadd.f32 %v3158, %v3174
  %v3190 = vadd.f32 %v3159, %v3175
  %v3191 = vadd.f32 %v3160, %v3176
  %v3192 = vadd.f32 %v3161, %v3177
  %v3193 = vmul.f32 %v3185, 0.5
  %v3194 = vmul.f32 %v3186, 0.5
  %v3195 = vmul.f32 %v3187, 0.5
  %v3196 = vmul.f32 %v3188, 0.5
  %v3197 = vmul.f32 %v3189, 0.5
  %v3198 = vmul.f32 %v3190, 0.5
  %v3199 = vmul.f32 %v3191, 0.5
  %v3200 = vmul.f32 %v3192, 0.5
  %v3201 = vtanh.pop %v3193
  %v3202 = vtanh.pop %v3194
  %v3203 = vtanh.pop %v3195
  %v3204 = vtanh.pop %v3196
  %v3205 = vtanh.pop %v3197
  %v3206 = vtanh.pop %v3198
  %v3207 = vtanh.pop %v3199
  %v3208 = vtanh.pop %v3200
  %v3209 = vmul.f32 %v3201, 0.5
  %v3210 = vmul.f32 %v3202, 0.5
  %v3211 = vmul.f32 %v3203, 0.5
  %v3212 = vmul.f32 %v3204, 0.5
  %v3213 = vmul.f32 %v3205, 0.5
  %v3214 = vmul.f32 %v3206, 0.5
  %v3215 = vmul.f32 %v3207, 0.5
  %v3216 = vmul.f32 %v3208, 0.5
  %v3217 = vadd.f32 %v3209, 0.5
  %v3218 = vadd.f32 %v3210, 0.5
  %v3219 = vadd.f32 %v3211, 0.5
  %v3220 = vadd.f32 %v3212, 0.5
  %v3221 = vadd.f32 %v3213, 0.5
  %v3222 = vadd.f32 %v3214, 0.5
  %v3223 = vadd.f32 %v3215, 0.5
  %v3224 = vadd.f32 %v3216, 0.5
  %v3225 = vtanh.pop %v3120
  %v3226 = vtanh.pop %v3121
  %v3227 = vtanh.pop %v3122
  %v3228 = vtanh.pop %v3123
  %v3229 = vtanh.pop %v3124
  %v3230 = vtanh.pop %v3125
  %v3231 = vtanh.pop %v3126
  %v3232 = vtanh.pop %v3127
  %v3233 = vmul.f32 %v3217, %v3225
  %v3234 = vmul.f32 %v3218, %v3226
  %v3235 = vmul.f32 %v3219, %v3227
  %v3236 = vmul.f32 %v3220, %v3228
  %v3237 = vmul.f32 %v3221, %v3229
  %v3238 = vmul.f32 %v3222, %v3230
  %v3239 = vmul.f32 %v3223, %v3231
  %v3240 = vmul.f32 %v3224, %v3232
  %3241 = vst [vmem:[%s4 + $0x5] sm:$0x1] %v3233
  %3242 = vst [vmem:[%s4 + $0xd] sm:$0x1] %v3234
  %3243 = vst [vmem:[%s4 + $0x15] sm:$0x1] %v3235
  %3244 = vst [vmem:[%s4 + $0x1d] sm:$0x1] %v3236
  %3245 = vst [vmem:[%s4 + $0x25] sm:$0x1] %v3237
  %3246 = vst [vmem:[%s4 + $0x2d] sm:$0x1] %v3238
  %3247 = vst [vmem:[%s4 + $0x35] sm:$0x1] %v3239
  %3248 = vst [vmem:[%s4 + $0x3d] sm:$0x1] %v3240
  %s3249 = scalar_lea.vmem %s0, 6
  %v3250 = vld [vmem:[%s3249] ss:$8 sm:$0xf]
  %s3251 = scalar_lea.vmem %s0, 38
  %v3252 = vld [vmem:[%s3251] ss:$8 sm:$0xf]
  %s3253 = scalar_lea.vmem %s0, 70
  %v3254 = vld [vmem:[%s3253] ss:$8 sm:$0xf]
  %s3255 = scalar_lea.vmem %s0, 102
  %v3256 = vld [vmem:[%s3255] ss:$8 sm:$0xf]
  %s3257 = scalar_lea.vmem %s0, 134
  %v3258 = vld [vmem:[%s3257] ss:$8 sm:$0xf]
  %s3259 = scalar_lea.vmem %s0, 166
  %v3260 = vld [vmem:[%s3259] ss:$8 sm:$0xf]
  %s3261 = scalar_lea.vmem %s0, 198
  %v3262 = vld [vmem:[%s3261] ss:$8 sm:$0xf]
  %s3263 = scalar_lea.vmem %s0, 230
  %v3264 = vld [vmem:[%s3263] ss:$8 sm:$0xf]
  %v3265 = vadd.f32 %v3250, %v127
  %v3266 = vadd.f32 %v3252, %v134
  %v3267 = vadd.f32 %v3254, %v140
  %v3268 = vadd.f32 %v3256, %v146
  %v3269 = vadd.f32 %v3258, %v152
  %v3270 = vadd.f32 %v3260, %v158
  %v3271 = vadd.f32 %v3262, %v163
  %v3272 = vadd.f32 %v3264, %v168
  %3281 = vst [vmem:[#allocation1] ss:$9 sm:$0xff] %v3233
  %s3282 = scalar_lea.vmem [#allocation1], 1
  %3283 = vst [vmem:[%s3282] ss:$9 sm:$0xff] %v3234
  %s3284 = scalar_lea.vmem [#allocation1], 2
  %3285 = vst [vmem:[%s3284] ss:$9 sm:$0xff] %v3235
  %s3286 = scalar_lea.vmem [#allocation1], 3
  %3287 = vst [vmem:[%s3286] ss:$9 sm:$0xff] %v3236
  %s3288 = scalar_lea.vmem [#allocation1], 4
  %3289 = vst [vmem:[%s3288] ss:$9 sm:$0xff] %v3237
  %s3290 = scalar_lea.vmem [#allocation1], 5
  %3291 = vst [vmem:[%s3290] ss:$9 sm:$0xff] %v3238
  %s3292 = scalar_lea.vmem [#allocation1], 6
  %3293 = vst [vmem:[%s3292] ss:$9 sm:$0xff] %v3239
  %s3294 = scalar_lea.vmem [#allocation1], 7
  %3295 = vst [vmem:[%s3294] ss:$9 sm:$0xff] %v3240
  %v3296 = vld [vmem:[#allocation1] sm:$0xff]
  %3298 = vmatpush.msra.mxu0 %v86
  %3299 = vmatpush.msra.mxu0 %v82
  %3300 = vmatpush.msra.mxu0 %v78
  %3301 = vmatpush.msra.mxu0 %v74
  %3302 = vmatpush.msra.mxu0 %v70
  %3303 = vmatpush.msra.mxu0 %v66
  %3304 = vmatpush.msra.mxu0 %v62
  %3305 = vmatpush.msra.mxu0 %v58
  %3306 = vmatpush.msra.mxu0 %v54
  %3307 = vmatpush.msra.mxu0 %v50
  %3308 = vmatpush.msra.mxu0 %v46
  %3309 = vmatpush.msra.mxu0 %v42
  %3310 = vmatpush.msra.mxu0 %v38
  %3311 = vmatpush.msra.mxu0 %v34
  %3312 = vmatpush.msra.mxu0 %v30
  %3313 = vmatpush.msra.mxu0 %v26
  %3314 = vmatmul.f32.gmra.mxu0 %v3296
  %v3315 = vpop.f32.mrf.mxu0
  %v3316 = vadd.f32 0.0, %v3315
  %3317 = vdwg.mxu0
  %3318 = vmatpush.msra.mxu0 %v87
  %3319 = vmatpush.msra.mxu0 %v83
  %3320 = vmatpush.msra.mxu0 %v79
  %3321 = vmatpush.msra.mxu0 %v75
  %3322 = vmatpush.msra.mxu0 %v71
  %3323 = vmatpush.msra.mxu0 %v67
  %3324 = vmatpush.msra.mxu0 %v63
  %3325 = vmatpush.msra.mxu0 %v59
  %3326 = vmatpush.msra.mxu0 %v55
  %3327 = vmatpush.msra.mxu0 %v51
  %3328 = vmatpush.msra.mxu0 %v47
  %3329 = vmatpush.msra.mxu0 %v43
  %3330 = vmatpush.msra.mxu0 %v39
  %3331 = vmatpush.msra.mxu0 %v35
  %3332 = vmatpush.msra.mxu0 %v31
  %3333 = vmatpush.msra.mxu0 %v27
  %3334 = vmatmul.f32.gmra.mxu0 %v3296
  %v3335 = vpop.f32.mrf.mxu0
  %v3336 = vadd.f32 0.0, %v3335
  %3337 = vdwg.mxu0
  %3338 = vmatpush.msra.mxu0 %v88
  %3339 = vmatpush.msra.mxu0 %v84
  %3340 = vmatpush.msra.mxu0 %v80
  %3341 = vmatpush.msra.mxu0 %v76
  %3342 = vmatpush.msra.mxu0 %v72
  %3343 = vmatpush.msra.mxu0 %v68
  %3344 = vmatpush.msra.mxu0 %v64
  %3345 = vmatpush.msra.mxu0 %v60
  %3346 = vmatpush.msra.mxu0 %v56
  %3347 = vmatpush.msra.mxu0 %v52
  %3348 = vmatpush.msra.mxu0 %v48
  %3349 = vmatpush.msra.mxu0 %v44
  %3350 = vmatpush.msra.mxu0 %v40
  %3351 = vmatpush.msra.mxu0 %v36
  %3352 = vmatpush.msra.mxu0 %v32
  %3353 = vmatpush.msra.mxu0 %v28
  %3354 = vmatmul.f32.gmra.mxu0 %v3296
  %v3355 = vpop.f32.mrf.mxu0
  %v3356 = vadd.f32 0.0, %v3355
  %3357 = vdwg.mxu0
  %3358 = vmatpush.msra.mxu0 %v89
  %3359 = vmatpush.msra.mxu0 %v85
  %3360 = vmatpush.msra.mxu0 %v81
  %3361 = vmatpush.msra.mxu0 %v77
  %3362 = vmatpush.msra.mxu0 %v73
  %3363 = vmatpush.msra.mxu0 %v69
  %3364 = vmatpush.msra.mxu0 %v65
  %3365 = vmatpush.msra.mxu0 %v61
  %3366 = vmatpush.msra.mxu0 %v57
  %3367 = vmatpush.msra.mxu0 %v53
  %3368 = vmatpush.msra.mxu0 %v49
  %3369 = vmatpush.msra.mxu0 %v45
  %3370 = vmatpush.msra.mxu0 %v41
  %3371 = vmatpush.msra.mxu0 %v37
  %3372 = vmatpush.msra.mxu0 %v33
  %3373 = vmatpush.msra.mxu0 %v29
  %3374 = vmatmul.f32.gmra.mxu0 %v3296
  %v3375 = vpop.f32.mrf.mxu0
  %v3376 = vadd.f32 0.0, %v3375
  %3377 = vdwg.mxu0
  %v3382 = vrot.slane %v3336, 7
  %v3383 = vrot.slane %v3356, 6
  %v3384 = vrot.slane %v3376, 5
  %v3385 = vsel %vm122, %v3316, %v3382
  %v3386 = vsel %vm124, %v3383, %v3384
  %v3387 = vsel %vm126, %v3385, %v3386
  %v3388 = vsel %vm128, %v3316, %v3382
  %v3389 = vsel %vm130, %v3383, %v3384
  %v3390 = vsel %vm132, %v3388, %v3389
  %v3391 = vrot.slane %v3390, 1
  %v3392 = vsel %vm124, %v3316, %v3382
  %v3393 = vsel %vm136, %v3383, %v3384
  %v3394 = vsel %vm138, %v3392, %v3393
  %v3395 = vrot.slane %v3394, 2
  %v3396 = vsel %vm130, %v3316, %v3382
  %v3397 = vsel %vm142, %v3383, %v3384
  %v3398 = vsel %vm144, %v3396, %v3397
  %v3399 = vrot.slane %v3398, 3
  %v3400 = vsel %vm136, %v3316, %v3382
  %v3401 = vsel %vm148, %v3383, %v3384
  %v3402 = vsel %vm150, %v3400, %v3401
  %v3403 = vrot.slane %v3402, 4
  %v3404 = vsel %vm142, %v3316, %v3382
  %v3405 = vsel %vm154, %v3384, %v3383
  %v3406 = vsel %vm156, %v3404, %v3405
  %v3407 = vrot.slane %v3406, 5
  %v3408 = vsel %vm148, %v3316, %v3382
  %v3409 = vsel %vm122, %v3383, %v3384
  %v3410 = vsel %vm161, %v3409, %v3408
  %v3411 = vrot.slane %v3410, 6
  %v3412 = vsel %vm154, %v3382, %v3316
  %v3413 = vsel %vm128, %v3383, %v3384
  %v3414 = vsel %vm166, %v3413, %v3412
  %v3415 = vrot.slane %v3414, 7
  %v3424 = vadd.f32 %v3265, %v3387
  %v3425 = vadd.f32 %v3266, %v3391
  %v3426 = vadd.f32 %v3267, %v3395
  %v3427 = vadd.f32 %v3268, %v3399
  %v3428 = vadd.f32 %v3269, %v3403
  %v3429 = vadd.f32 %v3270, %v3407
  %v3430 = vadd.f32 %v3271, %v3411
  %v3431 = vadd.f32 %v3272, %v3415
  %3432 = vst [vmem:[#allocation1] ss:$9 sm:$0xff] %v3120
  %s3433 = scalar_lea.vmem [#allocation1], 1
  %3434 = vst [vmem:[%s3433] ss:$9 sm:$0xff] %v3121
  %s3435 = scalar_lea.vmem [#allocation1], 2
  %3436 = vst [vmem:[%s3435] ss:$9 sm:$0xff] %v3122
  %s3437 = scalar_lea.vmem [#allocation1], 3
  %3438 = vst [vmem:[%s3437] ss:$9 sm:$0xff] %v3123
  %s3439 = scalar_lea.vmem [#allocation1], 4
  %3440 = vst [vmem:[%s3439] ss:$9 sm:$0xff] %v3124
  %s3441 = scalar_lea.vmem [#allocation1], 5
  %3442 = vst [vmem:[%s3441] ss:$9 sm:$0xff] %v3125
  %s3443 = scalar_lea.vmem [#allocation1], 6
  %3444 = vst [vmem:[%s3443] ss:$9 sm:$0xff] %v3126
  %s3445 = scalar_lea.vmem [#allocation1], 7
  %3446 = vst [vmem:[%s3445] ss:$9 sm:$0xff] %v3127
  %v3447 = vld [vmem:[#allocation1] sm:$0xff]
  %v3449 = vmul.f32 %v97, %v3447
  %v3451 = vrot.slane %v3449, 1
  %v3452 = vrot.slane %v3449, 2
  %v3453 = vrot.slane %v3449, 3
  %v3454 = vrot.slane %v3449, 4
  %v3455 = vrot.slane %v3449, 5
  %v3456 = vrot.slane %v3449, 6
  %v3457 = vrot.slane %v3449, 7
  %v3465 = vadd.f32 %v3424, %v3449
  %v3466 = vadd.f32 %v3425, %v3451
  %v3467 = vadd.f32 %v3426, %v3452
  %v3468 = vadd.f32 %v3427, %v3453
  %v3469 = vadd.f32 %v3428, %v3454
  %v3470 = vadd.f32 %v3429, %v3455
  %v3471 = vadd.f32 %v3430, %v3456
  %v3472 = vadd.f32 %v3431, %v3457
  %v3473 = vmul.f32 %v3465, 0.5
  %v3474 = vmul.f32 %v3466, 0.5
  %v3475 = vmul.f32 %v3467, 0.5
  %v3476 = vmul.f32 %v3468, 0.5
  %v3477 = vmul.f32 %v3469, 0.5
  %v3478 = vmul.f32 %v3470, 0.5
  %v3479 = vmul.f32 %v3471, 0.5
  %v3480 = vmul.f32 %v3472, 0.5
  %v3481 = vtanh.pop %v3473
  %v3482 = vtanh.pop %v3474
  %v3483 = vtanh.pop %v3475
  %v3484 = vtanh.pop %v3476
  %v3485 = vtanh.pop %v3477
  %v3486 = vtanh.pop %v3478
  %v3487 = vtanh.pop %v3479
  %v3488 = vtanh.pop %v3480
  %v3489 = vmul.f32 %v3481, 0.5
  %v3490 = vmul.f32 %v3482, 0.5
  %v3491 = vmul.f32 %v3483, 0.5
  %v3492 = vmul.f32 %v3484, 0.5
  %v3493 = vmul.f32 %v3485, 0.5
  %v3494 = vmul.f32 %v3486, 0.5
  %v3495 = vmul.f32 %v3487, 0.5
  %v3496 = vmul.f32 %v3488, 0.5
  %v3497 = vadd.f32 %v3489, 0.5
  %v3498 = vadd.f32 %v3490, 0.5
  %v3499 = vadd.f32 %v3491, 0.5
  %v3500 = vadd.f32 %v3492, 0.5
  %v3501 = vadd.f32 %v3493, 0.5
  %v3502 = vadd.f32 %v3494, 0.5
  %v3503 = vadd.f32 %v3495, 0.5
  %v3504 = vadd.f32 %v3496, 0.5
  %3505 = vst [vmem:[#allocation1] ss:$9 sm:$0xff] %v3120
  %s3506 = scalar_lea.vmem [#allocation1], 1
  %3507 = vst [vmem:[%s3506] ss:$9 sm:$0xff] %v3121
  %s3508 = scalar_lea.vmem [#allocation1], 2
  %3509 = vst [vmem:[%s3508] ss:$9 sm:$0xff] %v3122
  %s3510 = scalar_lea.vmem [#allocation1], 3
  %3511 = vst [vmem:[%s3510] ss:$9 sm:$0xff] %v3123
  %s3512 = scalar_lea.vmem [#allocation1], 4
  %3513 = vst [vmem:[%s3512] ss:$9 sm:$0xff] %v3124
  %s3514 = scalar_lea.vmem [#allocation1], 5
  %3515 = vst [vmem:[%s3514] ss:$9 sm:$0xff] %v3125
  %s3516 = scalar_lea.vmem [#allocation1], 6
  %3517 = vst [vmem:[%s3516] ss:$9 sm:$0xff] %v3126
  %s3518 = scalar_lea.vmem [#allocation1], 7
  %3519 = vst [vmem:[%s3518] ss:$9 sm:$0xff] %v3127
  %v3520 = vld [vmem:[#allocation1] sm:$0xff]
  %v3522 = vmul.f32 %v99, %v3520
  %v3531 = vrot.slane %v3424, 1
  %v3532 = vrot.slane %v3425, 1
  %v3533 = vrot.slane %v3426, 1
  %v3534 = vrot.slane %v3427, 1
  %v3535 = vrot.slane %v3428, 1
  %v3536 = vrot.slane %v3429, 1
  %v3537 = vrot.slane %v3430, 1
  %v3538 = vrot.slane %v3431, 1
  %v3548 = vrot.slane %v3522, 1
  %v3549 = vrot.slane %v3522, 2
  %v3550 = vrot.slane %v3522, 3
  %v3551 = vrot.slane %v3522, 4
  %v3552 = vrot.slane %v3522, 5
  %v3553 = vrot.slane %v3522, 6
  %v3554 = vrot.slane %v3522, 7
  %v3562 = vadd.f32 %v3531, %v3522
  %v3563 = vadd.f32 %v3532, %v3548
  %v3564 = vadd.f32 %v3533, %v3549
  %v3565 = vadd.f32 %v3534, %v3550
  %v3566 = vadd.f32 %v3535, %v3551
  %v3567 = vadd.f32 %v3536, %v3552
  %v3568 = vadd.f32 %v3537, %v3553
  %v3569 = vadd.f32 %v3538, %v3554
  %v3570 = vmul.f32 %v3562, 0.5
  %v3571 = vmul.f32 %v3563, 0.5
  %v3572 = vmul.f32 %v3564, 0.5
  %v3573 = vmul.f32 %v3565, 0.5
  %v3574 = vmul.f32 %v3566, 0.5
  %v3575 = vmul.f32 %v3567, 0.5
  %v3576 = vmul.f32 %v3568, 0.5
  %v3577 = vmul.f32 %v3569, 0.5
  %v3578 = vtanh.pop %v3570
  %v3579 = vtanh.pop %v3571
  %v3580 = vtanh.pop %v3572
  %v3581 = vtanh.pop %v3573
  %v3582 = vtanh.pop %v3574
  %v3583 = vtanh.pop %v3575
  %v3584 = vtanh.pop %v3576
  %v3585 = vtanh.pop %v3577
  %v3586 = vmul.f32 %v3578, 0.5
  %v3587 = vmul.f32 %v3579, 0.5
  %v3588 = vmul.f32 %v3580, 0.5
  %v3589 = vmul.f32 %v3581, 0.5
  %v3590 = vmul.f32 %v3582, 0.5
  %v3591 = vmul.f32 %v3583, 0.5
  %v3592 = vmul.f32 %v3584, 0.5
  %v3593 = vmul.f32 %v3585, 0.5
  %v3594 = vadd.f32 %v3586, 0.5
  %v3595 = vadd.f32 %v3587, 0.5
  %v3596 = vadd.f32 %v3588, 0.5
  %v3597 = vadd.f32 %v3589, 0.5
  %v3598 = vadd.f32 %v3590, 0.5
  %v3599 = vadd.f32 %v3591, 0.5
  %v3600 = vadd.f32 %v3592, 0.5
  %v3601 = vadd.f32 %v3593, 0.5
  %v3602 = vrot.slane %v3424, 2
  %v3603 = vrot.slane %v3425, 2
  %v3604 = vrot.slane %v3426, 2
  %v3605 = vrot.slane %v3427, 2
  %v3606 = vrot.slane %v3428, 2
  %v3607 = vrot.slane %v3429, 2
  %v3608 = vrot.slane %v3430, 2
  %v3609 = vrot.slane %v3431, 2
  %v3618 = vtanh.pop %v3602
  %v3619 = vtanh.pop %v3603
  %v3620 = vtanh.pop %v3604
  %v3621 = vtanh.pop %v3605
  %v3622 = vtanh.pop %v3606
  %v3623 = vtanh.pop %v3607
  %v3624 = vtanh.pop %v3608
  %v3625 = vtanh.pop %v3609
  %v3626 = vmul.f32 %v3594, %v3120
  %v3627 = vmul.f32 %v3595, %v3121
  %v3628 = vmul.f32 %v3596, %v3122
  %v3629 = vmul.f32 %v3597, %v3123
  %v3630 = vmul.f32 %v3598, %v3124
  %v3631 = vmul.f32 %v3599, %v3125
  %v3632 = vmul.f32 %v3600, %v3126
  %v3633 = vmul.f32 %v3601, %v3127
  %v3634 = vmul.f32 %v3497, %v3618
  %v3635 = vmul.f32 %v3498, %v3619
  %v3636 = vmul.f32 %v3499, %v3620
  %v3637 = vmul.f32 %v3500, %v3621
  %v3638 = vmul.f32 %v3501, %v3622
  %v3639 = vmul.f32 %v3502, %v3623
  %v3640 = vmul.f32 %v3503, %v3624
  %v3641 = vmul.f32 %v3504, %v3625
  %v3642 = vadd.f32 %v3626, %v3634
  %v3643 = vadd.f32 %v3627, %v3635
  %v3644 = vadd.f32 %v3628, %v3636
  %v3645 = vadd.f32 %v3629, %v3637
  %v3646 = vadd.f32 %v3630, %v3638
  %v3647 = vadd.f32 %v3631, %v3639
  %v3648 = vadd.f32 %v3632, %v3640
  %v3649 = vadd.f32 %v3633, %v3641
  %3658 = vst [vmem:[#allocation1] ss:$9 sm:$0xff] %v3642
  %s3659 = scalar_lea.vmem [#allocation1], 1
  %3660 = vst [vmem:[%s3659] ss:$9 sm:$0xff] %v3643
  %s3661 = scalar_lea.vmem [#allocation1], 2
  %3662 = vst [vmem:[%s3661] ss:$9 sm:$0xff] %v3644
  %s3663 = scalar_lea.vmem [#allocation1], 3
  %3664 = vst [vmem:[%s3663] ss:$9 sm:$0xff] %v3645
  %s3665 = scalar_lea.vmem [#allocation1], 4
  %3666 = vst [vmem:[%s3665] ss:$9 sm:$0xff] %v3646
  %s3667 = scalar_lea.vmem [#allocation1], 5
  %3668 = vst [vmem:[%s3667] ss:$9 sm:$0xff] %v3647
  %s3669 = scalar_lea.vmem [#allocation1], 6
  %3670 = vst [vmem:[%s3669] ss:$9 sm:$0xff] %v3648
  %s3671 = scalar_lea.vmem [#allocation1], 7
  %3672 = vst [vmem:[%s3671] ss:$9 sm:$0xff] %v3649
  %v3673 = vld [vmem:[#allocation1] sm:$0xff]
  %v3675 = vmul.f32 %v101, %v3673
  %v3676 = vrot.slane %v3424, 3
  %v3677 = vrot.slane %v3425, 3
  %v3678 = vrot.slane %v3426, 3
  %v3679 = vrot.slane %v3427, 3
  %v3680 = vrot.slane %v3428, 3
  %v3681 = vrot.slane %v3429, 3
  %v3682 = vrot.slane %v3430, 3
  %v3683 = vrot.slane %v3431, 3
  %v3693 = vrot.slane %v3675, 1
  %v3694 = vrot.slane %v3675, 2
  %v3695 = vrot.slane %v3675, 3
  %v3696 = vrot.slane %v3675, 4
  %v3697 = vrot.slane %v3675, 5
  %v3698 = vrot.slane %v3675, 6
  %v3699 = vrot.slane %v3675, 7
  %v3707 = vadd.f32 %v3676, %v3675
  %v3708 = vadd.f32 %v3677, %v3693
  %v3709 = vadd.f32 %v3678, %v3694
  %v3710 = vadd.f32 %v3679, %v3695
  %v3711 = vadd.f32 %v3680, %v3696
  %v3712 = vadd.f32 %v3681, %v3697
  %v3713 = vadd.f32 %v3682, %v3698
  %v3714 = vadd.f32 %v3683, %v3699
  %v3715 = vmul.f32 %v3707, 0.5
  %v3716 = vmul.f32 %v3708, 0.5
  %v3717 = vmul.f32 %v3709, 0.5
  %v3718 = vmul.f32 %v3710, 0.5
  %v3719 = vmul.f32 %v3711, 0.5
  %v3720 = vmul.f32 %v3712, 0.5
  %v3721 = vmul.f32 %v3713, 0.5
  %v3722 = vmul.f32 %v3714, 0.5
  %v3723 = vtanh.pop %v3715
  %v3724 = vtanh.pop %v3716
  %v3725 = vtanh.pop %v3717
  %v3726 = vtanh.pop %v3718
  %v3727 = vtanh.pop %v3719
  %v3728 = vtanh.pop %v3720
  %v3729 = vtanh.pop %v3721
  %v3730 = vtanh.pop %v3722
  %v3731 = vmul.f32 %v3723, 0.5
  %v3732 = vmul.f32 %v3724, 0.5
  %v3733 = vmul.f32 %v3725, 0.5
  %v3734 = vmul.f32 %v3726, 0.5
  %v3735 = vmul.f32 %v3727, 0.5
  %v3736 = vmul.f32 %v3728, 0.5
  %v3737 = vmul.f32 %v3729, 0.5
  %v3738 = vmul.f32 %v3730, 0.5
  %v3739 = vadd.f32 %v3731, 0.5
  %v3740 = vadd.f32 %v3732, 0.5
  %v3741 = vadd.f32 %v3733, 0.5
  %v3742 = vadd.f32 %v3734, 0.5
  %v3743 = vadd.f32 %v3735, 0.5
  %v3744 = vadd.f32 %v3736, 0.5
  %v3745 = vadd.f32 %v3737, 0.5
  %v3746 = vadd.f32 %v3738, 0.5
  %v3747 = vtanh.pop %v3642
  %v3748 = vtanh.pop %v3643
  %v3749 = vtanh.pop %v3644
  %v3750 = vtanh.pop %v3645
  %v3751 = vtanh.pop %v3646
  %v3752 = vtanh.pop %v3647
  %v3753 = vtanh.pop %v3648
  %v3754 = vtanh.pop %v3649
  %v3755 = vmul.f32 %v3739, %v3747
  %v3756 = vmul.f32 %v3740, %v3748
  %v3757 = vmul.f32 %v3741, %v3749
  %v3758 = vmul.f32 %v3742, %v3750
  %v3759 = vmul.f32 %v3743, %v3751
  %v3760 = vmul.f32 %v3744, %v3752
  %v3761 = vmul.f32 %v3745, %v3753
  %v3762 = vmul.f32 %v3746, %v3754
  %3763 = vst [vmem:[%s4 + $0x6] sm:$0x1] %v3755
  %3764 = vst [vmem:[%s4 + $0xe] sm:$0x1] %v3756
  %3765 = vst [vmem:[%s4 + $0x16] sm:$0x1] %v3757
  %3766 = vst [vmem:[%s4 + $0x1e] sm:$0x1] %v3758
  %3767 = vst [vmem:[%s4 + $0x26] sm:$0x1] %v3759
  %3768 = vst [vmem:[%s4 + $0x2e] sm:$0x1] %v3760
  %3769 = vst [vmem:[%s4 + $0x36] sm:$0x1] %v3761
  %3770 = vst [vmem:[%s4 + $0x3e] sm:$0x1] %v3762
  %s3771 = scalar_lea.vmem %s0, 7
  %v3772 = vld [vmem:[%s3771] ss:$8 sm:$0xf]
  %s3773 = scalar_lea.vmem %s0, 39
  %v3774 = vld [vmem:[%s3773] ss:$8 sm:$0xf]
  %s3775 = scalar_lea.vmem %s0, 71
  %v3776 = vld [vmem:[%s3775] ss:$8 sm:$0xf]
  %s3777 = scalar_lea.vmem %s0, 103
  %v3778 = vld [vmem:[%s3777] ss:$8 sm:$0xf]
  %s3779 = scalar_lea.vmem %s0, 135
  %v3780 = vld [vmem:[%s3779] ss:$8 sm:$0xf]
  %s3781 = scalar_lea.vmem %s0, 167
  %v3782 = vld [vmem:[%s3781] ss:$8 sm:$0xf]
  %s3783 = scalar_lea.vmem %s0, 199
  %v3784 = vld [vmem:[%s3783] ss:$8 sm:$0xf]
  %s3785 = scalar_lea.vmem %s0, 231
  %v3786 = vld [vmem:[%s3785] ss:$8 sm:$0xf]
  %v3787 = vadd.f32 %v3772, %v127
  %v3788 = vadd.f32 %v3774, %v134
  %v3789 = vadd.f32 %v3776, %v140
  %v3790 = vadd.f32 %v3778, %v146
  %v3791 = vadd.f32 %v3780, %v152
  %v3792 = vadd.f32 %v3782, %v158
  %v3793 = vadd.f32 %v3784, %v163
  %v3794 = vadd.f32 %v3786, %v168
  %3803 = vst [vmem:[#allocation1] ss:$9 sm:$0xff] %v3755
  %s3804 = scalar_lea.vmem [#allocation1], 1
  %3805 = vst [vmem:[%s3804] ss:$9 sm:$0xff] %v3756
  %s3806 = scalar_lea.vmem [#allocation1], 2
  %3807 = vst [vmem:[%s3806] ss:$9 sm:$0xff] %v3757
  %s3808 = scalar_lea.vmem [#allocation1], 3
  %3809 = vst [vmem:[%s3808] ss:$9 sm:$0xff] %v3758
  %s3810 = scalar_lea.vmem [#allocation1], 4
  %3811 = vst [vmem:[%s3810] ss:$9 sm:$0xff] %v3759
  %s3812 = scalar_lea.vmem [#allocation1], 5
  %3813 = vst [vmem:[%s3812] ss:$9 sm:$0xff] %v3760
  %s3814 = scalar_lea.vmem [#allocation1], 6
  %3815 = vst [vmem:[%s3814] ss:$9 sm:$0xff] %v3761
  %s3816 = scalar_lea.vmem [#allocation1], 7
  %3817 = vst [vmem:[%s3816] ss:$9 sm:$0xff] %v3762
  %v3818 = vld [vmem:[#allocation1] sm:$0xff]
  %3820 = vmatpush.msra.mxu0 %v86
  %3821 = vmatpush.msra.mxu0 %v82
  %3822 = vmatpush.msra.mxu0 %v78
  %3823 = vmatpush.msra.mxu0 %v74
  %3824 = vmatpush.msra.mxu0 %v70
  %3825 = vmatpush.msra.mxu0 %v66
  %3826 = vmatpush.msra.mxu0 %v62
  %3827 = vmatpush.msra.mxu0 %v58
  %3828 = vmatpush.msra.mxu0 %v54
  %3829 = vmatpush.msra.mxu0 %v50
  %3830 = vmatpush.msra.mxu0 %v46
  %3831 = vmatpush.msra.mxu0 %v42
  %3832 = vmatpush.msra.mxu0 %v38
  %3833 = vmatpush.msra.mxu0 %v34
  %3834 = vmatpush.msra.mxu0 %v30
  %3835 = vmatpush.msra.mxu0 %v26
  %3836 = vmatmul.f32.gmra.mxu0 %v3818
  %v3837 = vpop.f32.mrf.mxu0
  %v3838 = vadd.f32 0.0, %v3837
  %3839 = vdwg.mxu0
  %3840 = vmatpush.msra.mxu0 %v87
  %3841 = vmatpush.msra.mxu0 %v83
  %3842 = vmatpush.msra.mxu0 %v79
  %3843 = vmatpush.msra.mxu0 %v75
  %3844 = vmatpush.msra.mxu0 %v71
  %3845 = vmatpush.msra.mxu0 %v67
  %3846 = vmatpush.msra.mxu0 %v63
  %3847 = vmatpush.msra.mxu0 %v59
  %3848 = vmatpush.msra.mxu0 %v55
  %3849 = vmatpush.msra.mxu0 %v51
  %3850 = vmatpush.msra.mxu0 %v47
  %3851 = vmatpush.msra.mxu0 %v43
  %3852 = vmatpush.msra.mxu0 %v39
  %3853 = vmatpush.msra.mxu0 %v35
  %3854 = vmatpush.msra.mxu0 %v31
  %3855 = vmatpush.msra.mxu0 %v27
  %3856 = vmatmul.f32.gmra.mxu0 %v3818
  %v3857 = vpop.f32.mrf.mxu0
  %v3858 = vadd.f32 0.0, %v3857
  %3859 = vdwg.mxu0
  %3860 = vmatpush.msra.mxu0 %v88
  %3861 = vmatpush.msra.mxu0 %v84
  %3862 = vmatpush.msra.mxu0 %v80
  %3863 = vmatpush.msra.mxu0 %v76
  %3864 = vmatpush.msra.mxu0 %v72
  %3865 = vmatpush.msra.mxu0 %v68
  %3866 = vmatpush.msra.mxu0 %v64
  %3867 = vmatpush.msra.mxu0 %v60
  %3868 = vmatpush.msra.mxu0 %v56
  %3869 = vmatpush.msra.mxu0 %v52
  %3870 = vmatpush.msra.mxu0 %v48
  %3871 = vmatpush.msra.mxu0 %v44
  %3872 = vmatpush.msra.mxu0 %v40
  %3873 = vmatpush.msra.mxu0 %v36
  %3874 = vmatpush.msra.mxu0 %v32
  %3875 = vmatpush.msra.mxu0 %v28
  %3876 = vmatmul.f32.gmra.mxu0 %v3818
  %v3877 = vpop.f32.mrf.mxu0
  %v3878 = vadd.f32 0.0, %v3877
  %3879 = vdwg.mxu0
  %3880 = vmatpush.msra.mxu0 %v89
  %3881 = vmatpush.msra.mxu0 %v85
  %3882 = vmatpush.msra.mxu0 %v81
  %3883 = vmatpush.msra.mxu0 %v77
  %3884 = vmatpush.msra.mxu0 %v73
  %3885 = vmatpush.msra.mxu0 %v69
  %3886 = vmatpush.msra.mxu0 %v65
  %3887 = vmatpush.msra.mxu0 %v61
  %3888 = vmatpush.msra.mxu0 %v57
  %3889 = vmatpush.msra.mxu0 %v53
  %3890 = vmatpush.msra.mxu0 %v49
  %3891 = vmatpush.msra.mxu0 %v45
  %3892 = vmatpush.msra.mxu0 %v41
  %3893 = vmatpush.msra.mxu0 %v37
  %3894 = vmatpush.msra.mxu0 %v33
  %3895 = vmatpush.msra.mxu0 %v29
  %3896 = vmatmul.f32.gmra.mxu0 %v3818
  %v3897 = vpop.f32.mrf.mxu0
  %v3898 = vadd.f32 0.0, %v3897
  %3899 = vdwg.mxu0
  %v3904 = vrot.slane %v3858, 7
  %v3905 = vrot.slane %v3878, 6
  %v3906 = vrot.slane %v3898, 5
  %v3907 = vsel %vm122, %v3838, %v3904
  %v3908 = vsel %vm124, %v3905, %v3906
  %v3909 = vsel %vm126, %v3907, %v3908
  %v3910 = vsel %vm128, %v3838, %v3904
  %v3911 = vsel %vm130, %v3905, %v3906
  %v3912 = vsel %vm132, %v3910, %v3911
  %v3913 = vrot.slane %v3912, 1
  %v3914 = vsel %vm124, %v3838, %v3904
  %v3915 = vsel %vm136, %v3905, %v3906
  %v3916 = vsel %vm138, %v3914, %v3915
  %v3917 = vrot.slane %v3916, 2
  %v3918 = vsel %vm130, %v3838, %v3904
  %v3919 = vsel %vm142, %v3905, %v3906
  %v3920 = vsel %vm144, %v3918, %v3919
  %v3921 = vrot.slane %v3920, 3
  %v3922 = vsel %vm136, %v3838, %v3904
  %v3923 = vsel %vm148, %v3905, %v3906
  %v3924 = vsel %vm150, %v3922, %v3923
  %v3925 = vrot.slane %v3924, 4
  %v3926 = vsel %vm142, %v3838, %v3904
  %v3927 = vsel %vm154, %v3906, %v3905
  %v3928 = vsel %vm156, %v3926, %v3927
  %v3929 = vrot.slane %v3928, 5
  %v3930 = vsel %vm148, %v3838, %v3904
  %v3931 = vsel %vm122, %v3905, %v3906
  %v3932 = vsel %vm161, %v3931, %v3930
  %v3933 = vrot.slane %v3932, 6
  %v3934 = vsel %vm154, %v3904, %v3838
  %v3935 = vsel %vm128, %v3905, %v3906
  %v3936 = vsel %vm166, %v3935, %v3934
  %v3937 = vrot.slane %v3936, 7
  %v3946 = vadd.f32 %v3787, %v3909
  %v3947 = vadd.f32 %v3788, %v3913
  %v3948 = vadd.f32 %v3789, %v3917
  %v3949 = vadd.f32 %v3790, %v3921
  %v3950 = vadd.f32 %v3791, %v3925
  %v3951 = vadd.f32 %v3792, %v3929
  %v3952 = vadd.f32 %v3793, %v3933
  %v3953 = vadd.f32 %v3794, %v3937
  %3954 = vst [vmem:[#allocation1] ss:$9 sm:$0xff] %v3642
  %s3955 = scalar_lea.vmem [#allocation1], 1
  %3956 = vst [vmem:[%s3955] ss:$9 sm:$0xff] %v3643
  %s3957 = scalar_lea.vmem [#allocation1], 2
  %3958 = vst [vmem:[%s3957] ss:$9 sm:$0xff] %v3644
  %s3959 = scalar_lea.vmem [#allocation1], 3
  %3960 = vst [vmem:[%s3959] ss:$9 sm:$0xff] %v3645
  %s3961 = scalar_lea.vmem [#allocation1], 4
  %3962 = vst [vmem:[%s3961] ss:$9 sm:$0xff] %v3646
  %s3963 = scalar_lea.vmem [#allocation1], 5
  %3964 = vst [vmem:[%s3963] ss:$9 sm:$0xff] %v3647
  %s3965 = scalar_lea.vmem [#allocation1], 6
  %3966 = vst [vmem:[%s3965] ss:$9 sm:$0xff] %v3648
  %s3967 = scalar_lea.vmem [#allocation1], 7
  %3968 = vst [vmem:[%s3967] ss:$9 sm:$0xff] %v3649
  %v3969 = vld [vmem:[#allocation1] sm:$0xff]
  %v3971 = vmul.f32 %v97, %v3969
  %v3973 = vrot.slane %v3971, 1
  %v3974 = vrot.slane %v3971, 2
  %v3975 = vrot.slane %v3971, 3
  %v3976 = vrot.slane %v3971, 4
  %v3977 = vrot.slane %v3971, 5
  %v3978 = vrot.slane %v3971, 6
  %v3979 = vrot.slane %v3971, 7
  %v3987 = vadd.f32 %v3946, %v3971
  %v3988 = vadd.f32 %v3947, %v3973
  %v3989 = vadd.f32 %v3948, %v3974
  %v3990 = vadd.f32 %v3949, %v3975
  %v3991 = vadd.f32 %v3950, %v3976
  %v3992 = vadd.f32 %v3951, %v3977
  %v3993 = vadd.f32 %v3952, %v3978
  %v3994 = vadd.f32 %v3953, %v3979
  %v3995 = vmul.f32 %v3987, 0.5
  %v3996 = vmul.f32 %v3988, 0.5
  %v3997 = vmul.f32 %v3989, 0.5
  %v3998 = vmul.f32 %v3990, 0.5
  %v3999 = vmul.f32 %v3991, 0.5
  %v4000 = vmul.f32 %v3992, 0.5
  %v4001 = vmul.f32 %v3993, 0.5
  %v4002 = vmul.f32 %v3994, 0.5
  %v4003 = vtanh.pop %v3995
  %v4004 = vtanh.pop %v3996
  %v4005 = vtanh.pop %v3997
  %v4006 = vtanh.pop %v3998
  %v4007 = vtanh.pop %v3999
  %v4008 = vtanh.pop %v4000
  %v4009 = vtanh.pop %v4001
  %v4010 = vtanh.pop %v4002
  %v4011 = vmul.f32 %v4003, 0.5
  %v4012 = vmul.f32 %v4004, 0.5
  %v4013 = vmul.f32 %v4005, 0.5
  %v4014 = vmul.f32 %v4006, 0.5
  %v4015 = vmul.f32 %v4007, 0.5
  %v4016 = vmul.f32 %v4008, 0.5
  %v4017 = vmul.f32 %v4009, 0.5
  %v4018 = vmul.f32 %v4010, 0.5
  %v4019 = vadd.f32 %v4011, 0.5
  %v4020 = vadd.f32 %v4012, 0.5
  %v4021 = vadd.f32 %v4013, 0.5
  %v4022 = vadd.f32 %v4014, 0.5
  %v4023 = vadd.f32 %v4015, 0.5
  %v4024 = vadd.f32 %v4016, 0.5
  %v4025 = vadd.f32 %v4017, 0.5
  %v4026 = vadd.f32 %v4018, 0.5
  %4027 = vst [vmem:[#allocation1] ss:$9 sm:$0xff] %v3642
  %s4028 = scalar_lea.vmem [#allocation1], 1
  %4029 = vst [vmem:[%s4028] ss:$9 sm:$0xff] %v3643
  %s4030 = scalar_lea.vmem [#allocation1], 2
  %4031 = vst [vmem:[%s4030] ss:$9 sm:$0xff] %v3644
  %s4032 = scalar_lea.vmem [#allocation1], 3
  %4033 = vst [vmem:[%s4032] ss:$9 sm:$0xff] %v3645
  %s4034 = scalar_lea.vmem [#allocation1], 4
  %4035 = vst [vmem:[%s4034] ss:$9 sm:$0xff] %v3646
  %s4036 = scalar_lea.vmem [#allocation1], 5
  %4037 = vst [vmem:[%s4036] ss:$9 sm:$0xff] %v3647
  %s4038 = scalar_lea.vmem [#allocation1], 6
  %4039 = vst [vmem:[%s4038] ss:$9 sm:$0xff] %v3648
  %s4040 = scalar_lea.vmem [#allocation1], 7
  %4041 = vst [vmem:[%s4040] ss:$9 sm:$0xff] %v3649
  %v4042 = vld [vmem:[#allocation1] sm:$0xff]
  %v4044 = vmul.f32 %v99, %v4042
  %v4053 = vrot.slane %v3946, 1
  %v4054 = vrot.slane %v3947, 1
  %v4055 = vrot.slane %v3948, 1
  %v4056 = vrot.slane %v3949, 1
  %v4057 = vrot.slane %v3950, 1
  %v4058 = vrot.slane %v3951, 1
  %v4059 = vrot.slane %v3952, 1
  %v4060 = vrot.slane %v3953, 1
  %v4070 = vrot.slane %v4044, 1
  %v4071 = vrot.slane %v4044, 2
  %v4072 = vrot.slane %v4044, 3
  %v4073 = vrot.slane %v4044, 4
  %v4074 = vrot.slane %v4044, 5
  %v4075 = vrot.slane %v4044, 6
  %v4076 = vrot.slane %v4044, 7
  %v4084 = vadd.f32 %v4053, %v4044
  %v4085 = vadd.f32 %v4054, %v4070
  %v4086 = vadd.f32 %v4055, %v4071
  %v4087 = vadd.f32 %v4056, %v4072
  %v4088 = vadd.f32 %v4057, %v4073
  %v4089 = vadd.f32 %v4058, %v4074
  %v4090 = vadd.f32 %v4059, %v4075
  %v4091 = vadd.f32 %v4060, %v4076
  %v4092 = vmul.f32 %v4084, 0.5
  %v4093 = vmul.f32 %v4085, 0.5
  %v4094 = vmul.f32 %v4086, 0.5
  %v4095 = vmul.f32 %v4087, 0.5
  %v4096 = vmul.f32 %v4088, 0.5
  %v4097 = vmul.f32 %v4089, 0.5
  %v4098 = vmul.f32 %v4090, 0.5
  %v4099 = vmul.f32 %v4091, 0.5
  %v4100 = vtanh.pop %v4092
  %v4101 = vtanh.pop %v4093
  %v4102 = vtanh.pop %v4094
  %v4103 = vtanh.pop %v4095
  %v4104 = vtanh.pop %v4096
  %v4105 = vtanh.pop %v4097
  %v4106 = vtanh.pop %v4098
  %v4107 = vtanh.pop %v4099
  %v4108 = vmul.f32 %v4100, 0.5
  %v4109 = vmul.f32 %v4101, 0.5
  %v4110 = vmul.f32 %v4102, 0.5
  %v4111 = vmul.f32 %v4103, 0.5
  %v4112 = vmul.f32 %v4104, 0.5
  %v4113 = vmul.f32 %v4105, 0.5
  %v4114 = vmul.f32 %v4106, 0.5
  %v4115 = vmul.f32 %v4107, 0.5
  %v4116 = vadd.f32 %v4108, 0.5
  %v4117 = vadd.f32 %v4109, 0.5
  %v4118 = vadd.f32 %v4110, 0.5
  %v4119 = vadd.f32 %v4111, 0.5
  %v4120 = vadd.f32 %v4112, 0.5
  %v4121 = vadd.f32 %v4113, 0.5
  %v4122 = vadd.f32 %v4114, 0.5
  %v4123 = vadd.f32 %v4115, 0.5
  %v4124 = vrot.slane %v3946, 2
  %v4125 = vrot.slane %v3947, 2
  %v4126 = vrot.slane %v3948, 2
  %v4127 = vrot.slane %v3949, 2
  %v4128 = vrot.slane %v3950, 2
  %v4129 = vrot.slane %v3951, 2
  %v4130 = vrot.slane %v3952, 2
  %v4131 = vrot.slane %v3953, 2
  %v4140 = vtanh.pop %v4124
  %v4141 = vtanh.pop %v4125
  %v4142 = vtanh.pop %v4126
  %v4143 = vtanh.pop %v4127
  %v4144 = vtanh.pop %v4128
  %v4145 = vtanh.pop %v4129
  %v4146 = vtanh.pop %v4130
  %v4147 = vtanh.pop %v4131
  %v4148 = vmul.f32 %v4116, %v3642
  %v4149 = vmul.f32 %v4117, %v3643
  %v4150 = vmul.f32 %v4118, %v3644
  %v4151 = vmul.f32 %v4119, %v3645
  %v4152 = vmul.f32 %v4120, %v3646
  %v4153 = vmul.f32 %v4121, %v3647
  %v4154 = vmul.f32 %v4122, %v3648
  %v4155 = vmul.f32 %v4123, %v3649
  %v4156 = vmul.f32 %v4019, %v4140
  %v4157 = vmul.f32 %v4020, %v4141
  %v4158 = vmul.f32 %v4021, %v4142
  %v4159 = vmul.f32 %v4022, %v4143
  %v4160 = vmul.f32 %v4023, %v4144
  %v4161 = vmul.f32 %v4024, %v4145
  %v4162 = vmul.f32 %v4025, %v4146
  %v4163 = vmul.f32 %v4026, %v4147
  %v4164 = vadd.f32 %v4148, %v4156
  %v4165 = vadd.f32 %v4149, %v4157
  %v4166 = vadd.f32 %v4150, %v4158
  %v4167 = vadd.f32 %v4151, %v4159
  %v4168 = vadd.f32 %v4152, %v4160
  %v4169 = vadd.f32 %v4153, %v4161
  %v4170 = vadd.f32 %v4154, %v4162
  %v4171 = vadd.f32 %v4155, %v4163
  %4180 = vst [vmem:[#allocation1] ss:$9 sm:$0xff] %v4164
  %s4181 = scalar_lea.vmem [#allocation1], 1
  %4182 = vst [vmem:[%s4181] ss:$9 sm:$0xff] %v4165
  %s4183 = scalar_lea.vmem [#allocation1], 2
  %4184 = vst [vmem:[%s4183] ss:$9 sm:$0xff] %v4166
  %s4185 = scalar_lea.vmem [#allocation1], 3
  %4186 = vst [vmem:[%s4185] ss:$9 sm:$0xff] %v4167
  %s4187 = scalar_lea.vmem [#allocation1], 4
  %4188 = vst [vmem:[%s4187] ss:$9 sm:$0xff] %v4168
  %s4189 = scalar_lea.vmem [#allocation1], 5
  %4190 = vst [vmem:[%s4189] ss:$9 sm:$0xff] %v4169
  %s4191 = scalar_lea.vmem [#allocation1], 6
  %4192 = vst [vmem:[%s4191] ss:$9 sm:$0xff] %v4170
  %s4193 = scalar_lea.vmem [#allocation1], 7
  %4194 = vst [vmem:[%s4193] ss:$9 sm:$0xff] %v4171
  %v4195 = vld [vmem:[#allocation1] sm:$0xff]
  %v4197 = vmul.f32 %v101, %v4195
  %v4198 = vrot.slane %v3946, 3
  %v4199 = vrot.slane %v3947, 3
  %v4200 = vrot.slane %v3948, 3
  %v4201 = vrot.slane %v3949, 3
  %v4202 = vrot.slane %v3950, 3
  %v4203 = vrot.slane %v3951, 3
  %v4204 = vrot.slane %v3952, 3
  %v4205 = vrot.slane %v3953, 3
  %v4215 = vrot.slane %v4197, 1
  %v4216 = vrot.slane %v4197, 2
  %v4217 = vrot.slane %v4197, 3
  %v4218 = vrot.slane %v4197, 4
  %v4219 = vrot.slane %v4197, 5
  %v4220 = vrot.slane %v4197, 6
  %v4221 = vrot.slane %v4197, 7
  %v4229 = vadd.f32 %v4198, %v4197
  %v4230 = vadd.f32 %v4199, %v4215
  %v4231 = vadd.f32 %v4200, %v4216
  %v4232 = vadd.f32 %v4201, %v4217
  %v4233 = vadd.f32 %v4202, %v4218
  %v4234 = vadd.f32 %v4203, %v4219
  %v4235 = vadd.f32 %v4204, %v4220
  %v4236 = vadd.f32 %v4205, %v4221
  %v4237 = vmul.f32 %v4229, 0.5
  %v4238 = vmul.f32 %v4230, 0.5
  %v4239 = vmul.f32 %v4231, 0.5
  %v4240 = vmul.f32 %v4232, 0.5
  %v4241 = vmul.f32 %v4233, 0.5
  %v4242 = vmul.f32 %v4234, 0.5
  %v4243 = vmul.f32 %v4235, 0.5
  %v4244 = vmul.f32 %v4236, 0.5
  %v4245 = vtanh.pop %v4237
  %v4246 = vtanh.pop %v4238
  %v4247 = vtanh.pop %v4239
  %v4248 = vtanh.pop %v4240
  %v4249 = vtanh.pop %v4241
  %v4250 = vtanh.pop %v4242
  %v4251 = vtanh.pop %v4243
  %v4252 = vtanh.pop %v4244
  %v4253 = vmul.f32 %v4245, 0.5
  %v4254 = vmul.f32 %v4246, 0.5
  %v4255 = vmul.f32 %v4247, 0.5
  %v4256 = vmul.f32 %v4248, 0.5
  %v4257 = vmul.f32 %v4249, 0.5
  %v4258 = vmul.f32 %v4250, 0.5
  %v4259 = vmul.f32 %v4251, 0.5
  %v4260 = vmul.f32 %v4252, 0.5
  %v4261 = vadd.f32 %v4253, 0.5
  %v4262 = vadd.f32 %v4254, 0.5
  %v4263 = vadd.f32 %v4255, 0.5
  %v4264 = vadd.f32 %v4256, 0.5
  %v4265 = vadd.f32 %v4257, 0.5
  %v4266 = vadd.f32 %v4258, 0.5
  %v4267 = vadd.f32 %v4259, 0.5
  %v4268 = vadd.f32 %v4260, 0.5
  %v4269 = vtanh.pop %v4164
  %v4270 = vtanh.pop %v4165
  %v4271 = vtanh.pop %v4166
  %v4272 = vtanh.pop %v4167
  %v4273 = vtanh.pop %v4168
  %v4274 = vtanh.pop %v4169
  %v4275 = vtanh.pop %v4170
  %v4276 = vtanh.pop %v4171
  %v4277 = vmul.f32 %v4261, %v4269
  %v4278 = vmul.f32 %v4262, %v4270
  %v4279 = vmul.f32 %v4263, %v4271
  %v4280 = vmul.f32 %v4264, %v4272
  %v4281 = vmul.f32 %v4265, %v4273
  %v4282 = vmul.f32 %v4266, %v4274
  %v4283 = vmul.f32 %v4267, %v4275
  %v4284 = vmul.f32 %v4268, %v4276
  %4285 = vst [vmem:[%s4 + $0x7] sm:$0x1] %v4277
  %4286 = vst [vmem:[%s4 + $0xf] sm:$0x1] %v4278
  %4287 = vst [vmem:[%s4 + $0x17] sm:$0x1] %v4279
  %4288 = vst [vmem:[%s4 + $0x1f] sm:$0x1] %v4280
  %4289 = vst [vmem:[%s4 + $0x27] sm:$0x1] %v4281
  %4290 = vst [vmem:[%s4 + $0x2f] sm:$0x1] %v4282
  %4291 = vst [vmem:[%s4 + $0x37] sm:$0x1] %v4283
  %4292 = vst [vmem:[%s4 + $0x3f] sm:$0x1] %v4284
  %4301 = vst [vmem:[#allocation1] ss:$9 sm:$0xff] %v4277
  %s4302 = scalar_lea.vmem [#allocation1], 1
  %4303 = vst [vmem:[%s4302] ss:$9 sm:$0xff] %v4278
  %s4304 = scalar_lea.vmem [#allocation1], 2
  %4305 = vst [vmem:[%s4304] ss:$9 sm:$0xff] %v4279
  %s4306 = scalar_lea.vmem [#allocation1], 3
  %4307 = vst [vmem:[%s4306] ss:$9 sm:$0xff] %v4280
  %s4308 = scalar_lea.vmem [#allocation1], 4
  %4309 = vst [vmem:[%s4308] ss:$9 sm:$0xff] %v4281
  %s4310 = scalar_lea.vmem [#allocation1], 5
  %4311 = vst [vmem:[%s4310] ss:$9 sm:$0xff] %v4282
  %s4312 = scalar_lea.vmem [#allocation1], 6
  %4313 = vst [vmem:[%s4312] ss:$9 sm:$0xff] %v4283
  %s4314 = scalar_lea.vmem [#allocation1], 7
  %4315 = vst [vmem:[%s4314] ss:$9 sm:$0xff] %v4284
  %v4316 = vld [vmem:[#allocation1] sm:$0xff]
  %4318 = vst [vmem:[#allocation2] sm:$0xff] %v4316
  %4319 = vst [vmem:[#allocation1] ss:$9 sm:$0xff] %v4164
  %s4320 = scalar_lea.vmem [#allocation1], 1
  %4321 = vst [vmem:[%s4320] ss:$9 sm:$0xff] %v4165
  %s4322 = scalar_lea.vmem [#allocation1], 2
  %4323 = vst [vmem:[%s4322] ss:$9 sm:$0xff] %v4166
  %s4324 = scalar_lea.vmem [#allocation1], 3
  %4325 = vst [vmem:[%s4324] ss:$9 sm:$0xff] %v4167
  %s4326 = scalar_lea.vmem [#allocation1], 4
  %4327 = vst [vmem:[%s4326] ss:$9 sm:$0xff] %v4168
  %s4328 = scalar_lea.vmem [#allocation1], 5
  %4329 = vst [vmem:[%s4328] ss:$9 sm:$0xff] %v4169
  %s4330 = scalar_lea.vmem [#allocation1], 6
  %4331 = vst [vmem:[%s4330] ss:$9 sm:$0xff] %v4170
  %s4332 = scalar_lea.vmem [#allocation1], 7
  %4333 = vst [vmem:[%s4332] ss:$9 sm:$0xff] %v4171
  %v4334 = vld [vmem:[#allocation1] sm:$0xff]
  %4336 = vst [vmem:[#allocation3] sm:$0xff] %v4334
  // Predicated region
  $region22: #{lstm_pallas.1} parent=0 // pred_check
    %p4337 = pneg %p20
  $region23: #{lstm_pallas.1} parent=0 // pred_check_branch
    %4339 = sbr.rel (%p4337) target = $region25
  $region24: #{lstm_pallas.1} parent=0 // pred_region
    %4340 = vst [vmem:[#allocation1] ss:$9 sm:$0xff] %v4277
    %s4341 = scalar_lea.vmem [#allocation1], 1
    %4342 = vst [vmem:[%s4341] ss:$9 sm:$0xff] %v4278
    %s4343 = scalar_lea.vmem [#allocation1], 2
    %4344 = vst [vmem:[%s4343] ss:$9 sm:$0xff] %v4279
    %s4345 = scalar_lea.vmem [#allocation1], 3
    %4346 = vst [vmem:[%s4345] ss:$9 sm:$0xff] %v4280
    %s4347 = scalar_lea.vmem [#allocation1], 4
    %4348 = vst [vmem:[%s4347] ss:$9 sm:$0xff] %v4281
    %s4349 = scalar_lea.vmem [#allocation1], 5
    %4350 = vst [vmem:[%s4349] ss:$9 sm:$0xff] %v4282
    %s4351 = scalar_lea.vmem [#allocation1], 6
    %4352 = vst [vmem:[%s4351] ss:$9 sm:$0xff] %v4283
    %s4353 = scalar_lea.vmem [#allocation1], 7
    %4354 = vst [vmem:[%s4353] ss:$9 sm:$0xff] %v4284
    %v4355 = vld [vmem:[#allocation1] sm:$0xff]
    %4357 = vst [vmem:[%s5] sm:$0xff] %v4355
    %4358 = vst [vmem:[#allocation1] ss:$9 sm:$0xff] %v4164
    %s4359 = scalar_lea.vmem [#allocation1], 1
    %4360 = vst [vmem:[%s4359] ss:$9 sm:$0xff] %v4165
    %s4361 = scalar_lea.vmem [#allocation1], 2
    %4362 = vst [vmem:[%s4361] ss:$9 sm:$0xff] %v4166
    %s4363 = scalar_lea.vmem [#allocation1], 3
    %4364 = vst [vmem:[%s4363] ss:$9 sm:$0xff] %v4167
    %s4365 = scalar_lea.vmem [#allocation1], 4
    %4366 = vst [vmem:[%s4365] ss:$9 sm:$0xff] %v4168
    %s4367 = scalar_lea.vmem [#allocation1], 5
    %4368 = vst [vmem:[%s4367] ss:$9 sm:$0xff] %v4169
    %s4369 = scalar_lea.vmem [#allocation1], 6
    %4370 = vst [vmem:[%s4369] ss:$9 sm:$0xff] %v4170
    %s4371 = scalar_lea.vmem [#allocation1], 7
    %4372 = vst [vmem:[%s4371] ss:$9 sm:$0xff] %v4171
    %v4373 = vld [vmem:[#allocation1] sm:$0xff]
    %4375 = vst [vmem:[%s6] sm:$0xff] %v4373
  $region25: #{lstm_pallas.1} parent=0 // pred_fallthru
    _
  // Predicated region
  $region26: #{lstm_pallas.1} parent=0 // pred_check
    _
  $region27: #{lstm_pallas.1} parent=0 // pred_check_branch
    %4377 = sbr.rel (0) target = $region29
  $region28: #{lstm_pallas.1} parent=0 // pred_region
    _
  $region29: #{lstm_pallas.1} parent=0 // pred_fallthru
    _
  // Predicated region
  $region30: #{lstm_pallas.1} parent=0 // pred_check
    _
  $region31: #{lstm_pallas.1} parent=0 // pred_check_branch
    %4379 = sbr.rel (0) target = $region33
  $region32: #{lstm_pallas.1} parent=0 // pred_region
    _
  $region33: #{lstm_pallas.1} parent=0 // pred_fallthru
    _
  // Predicated region
  $region34: #{lstm_pallas.1} parent=0 // pred_check
    _
  $region35: #{lstm_pallas.1} parent=0 // pred_check_branch
    %4381 = sbr.rel (0) target = $region37
  $region36: #{lstm_pallas.1} parent=0 // pred_region
    _
  $region37: #{lstm_pallas.1} parent=0 // pred_fallthru
    _
  // Predicated region
  $region38: #{lstm_pallas.1} parent=0 // pred_check
    _
  $region39: #{lstm_pallas.1} parent=0 // pred_check_branch
    %4383 = sbr.rel (0) target = $region41
  $region40: #{lstm_pallas.1} parent=0 // pred_region
    _
  $region41: #{lstm_pallas.1} parent=0 // pred_fallthru
    _
  // Predicated region
  $region42: #{lstm_pallas.1} parent=0 // pred_check
    _
  $region43: #{lstm_pallas.1} parent=0 // pred_check_branch
    %4385 = sbr.rel (0) target = $region45
  $region44: #{lstm_pallas.1} parent=0 // pred_region
    _
  $region45: #{lstm_pallas.1} parent=0 // pred_fallthru
    _
  // Predicated region
  $region46: #{lstm_pallas.1} parent=0 // pred_check
    _
  $region47: #{lstm_pallas.1} parent=0 // pred_check_branch
    %4387 = sbr.rel (0) target = $region49
  $region48: #{lstm_pallas.1} parent=0 // pred_region
    _
  $region49: #{lstm_pallas.1} parent=0 // pred_fallthru
    _

</llo_original>
